<compile_context>
chip_gen: v6e
topology: v6e:2x2x1
jax: 0.10.0
libtpu: 0.0.40
codegen_flags: <defaults>
</compile_context>

<pallas_src>
import functools

import jax
import jax.numpy as jnp
from jax.experimental import pallas as pl
from jax.experimental.pallas import tpu as pltpu

# ----------------------------- config ---------------------------------------
IMG = 16           # image height/width   (ViT-base: 256)
PATCH = 8          # patch size           (ViT-base: 16)
IN_CHANS = 4       # input channels       (module arg `input_channels`)
EMBED_DIM = 128    # embedding dim        (ViT-base: 768) — lane-dense (x128)
DEPTH = 2          # transformer blocks   (ViT-base: 12)
NUM_HEADS = 4      # attention heads      (ViT-base: 12)
MLP_RATIO = 4
EPS = 1e-6         # timm ViT LayerNorm eps

NUM_PATCHES = (IMG // PATCH) ** 2
NUM_TOKENS = NUM_PATCHES + 1                    # + cls token  (= 5)
N_PAD = ((NUM_TOKENS + 7) // 8) * 8             # pad tokens to sublane multiple (= 8)
MLP_HIDDEN = EMBED_DIM * MLP_RATIO              # 512
HEAD_DIM = EMBED_DIM // NUM_HEADS               # 32
PATCH_FLAT = IN_CHANS * PATCH * PATCH           # 256


# --------------------------- kernel helpers ----------------------------------
def _layernorm(x, g, b):
    mu = jnp.mean(x, axis=-1, keepdims=True)
    var = jnp.mean((x - mu) ** 2, axis=-1, keepdims=True)
    return (x - mu) * jax.lax.rsqrt(var + EPS) * g + b


def _gelu(x):
    # TODO(synk): exact-erf GELU (torch default) replaced by tanh approximation.
    return jax.nn.gelu(x, approximate=True)


# --------------------------- fused ViT kernel --------------------------------
def _vit_kernel(
    patches_ref, pw_ref, tok_ref,
    ln1g_ref, ln1b_ref, wqkv_ref, bqkv_ref, wo_ref, bo_ref,
    ln2g_ref, ln2b_ref, w1_ref, b1_ref, w2_ref, b2_ref,
    nfg_ref, nfb_ref,
    o_ref,
    *, num_heads, depth, batch, num_valid,
):
    n_pad, d = tok_ref.shape
    rows = batch * n_pad
    dh = d // num_heads
    scale = 1.0 / (dh ** 0.5)

    # ---- patch embed + cls/pos (conv bias / cls / pos folded into tok_ref) ----
    patches = patches_ref[...]                                   # (B, N_PAD, CPP) bf16
    cpp = patches.shape[-1]
    tok = jnp.dot(patches.reshape(rows, cpp), pw_ref[...],
                  preferred_element_type=jnp.float32)            # (B*N_PAD, D) f32
    x = (tok.reshape(batch, n_pad, d) + tok_ref[...][None]).reshape(rows, d)

    # Key-padding mask bias (0 for real tokens, -1e9 for pad tokens).
    key_pos = jax.lax.broadcasted_iota(jnp.int32, (1, 1, n_pad), 2)
    mask_bias = jnp.where(key_pos < num_valid, 0.0, -1e9).astype(jnp.float32)

    def split_heads(t):
        # (B*N, H*dh) -> (H*B, N, dh); group index = h*B + b.
        t3 = t.reshape(batch, n_pad, d)
        return jnp.concatenate(
            [t3[:, :, hh * dh:(hh + 1) * dh] for hh in range(num_heads)], axis=0)

    for l in range(depth):                       # DEPTH small; static unroll (see TODO)
        # ---------------- attention (pre-norm) ----------------
        h = _layernorm(x, ln1g_ref[l], ln1b_ref[l]).astype(jnp.bfloat16)   # (rows, D)
        # Fused QKV: one lane-dense (rows,128) @ (128,384) matmul.
        qkv = (jnp.dot(h, wqkv_ref[l], preferred_element_type=jnp.float32)
               + bqkv_ref[l])                                              # (rows, 3D)
        q = qkv[:, :d].astype(jnp.bfloat16)
        k = qkv[:, d:2 * d].astype(jnp.bfloat16)
        v = qkv[:, 2 * d:].astype(jnp.bfloat16)

        qh, kh, vh = split_heads(q), split_heads(k), split_heads(v)       # (H*B, N, dh)

        s = jax.lax.dot_general(qh, kh, (((2,), (2,)), ((0,), (0,))),
                                preferred_element_type=jnp.float32) * scale
        s = s + mask_bias
        s = s - jnp.max(s, axis=-1, keepdims=True)
        p = jnp.exp(s)
        p = p * pl.reciprocal(jnp.sum(p, axis=-1, keepdims=True), approx=True)

        ctx = jax.lax.dot_general(p.astype(jnp.bfloat16), vh,
                                  (((2,), (1,)), ((0,), (0,))),
                                  preferred_element_type=jnp.float32)     # (H*B, N, dh)
        # Merge heads back to a lane-dense (rows, 128) tile; the head-sum is then
        # folded into a single (128,128) MXU pass.
        ctx_cat = jnp.concatenate(
            [ctx[hh * batch:(hh + 1) * batch] for hh in range(num_heads)], axis=-1)
        ctx_cat = ctx_cat.reshape(rows, d).astype(jnp.bfloat16)
        attn = jnp.dot(ctx_cat, wo_ref[l],
                       preferred_element_type=jnp.float32) + bo_ref[l]
        x = x + attn

        # ---------------- MLP (pre-norm) ----------------
        h2 = _layernorm(x, ln2g_ref[l], ln2b_ref[l]).astype(jnp.bfloat16)
        m = jnp.dot(h2, w1_ref[l], preferred_element_type=jnp.float32) + b1_ref[l]
        m = _gelu(m).astype(jnp.bfloat16)
        m = jnp.dot(m, w2_ref[l], preferred_element_type=jnp.float32) + b2_ref[l]
        x = x + m

    # Final LayerNorm fused into the same kernel.
    o_ref[...] = _layernorm(x, nfg_ref[...], nfb_ref[...]).reshape(batch, n_pad, d)


# --------------------------- wrappers ----------------------------------------
def patchify(x):
    # (B, C, H, W) -> (B, Np, C*P*P); flatten order (C, P, P) matches torch
    # Conv2d weight (D, C, P, P) flattened over its last 3 dims.
    b, c, hh, ww = x.shape
    gh, gw = hh // PATCH, ww // PATCH
    x = x.reshape(b, c, gh, PATCH, gw, PATCH)
    x = x.transpose(0, 2, 4, 1, 3, 5)
    return x.reshape(b, gh * gw, c * PATCH * PATCH)


@jax.jit
def vit_encoder_forward(x, params):
    """x: (B, C, H, W) float32 -> (N_tokens, B, D) float32."""
    b = x.shape[0]

    # Patches, padded on the token axis (row 0 reserved for cls, tail rows = pad),
    # cast to bf16 at the boundary to halve the patch-embed DMA bytes.
    patches = patchify(x)                                              # (B, Np, CPP)
    patches = jnp.pad(patches, ((0, 0), (1, N_PAD - 1 - NUM_PATCHES), (0, 0)))
    patches = patches.astype(jnp.bfloat16)                             # (B, N_PAD, CPP)

    # Token-init tensor: cls+pos on row 0, pos+conv-bias on patch rows, 0 on pads.
    cls_row = params["cls_token"][0, 0] + params["pos_embed"][0, 0]            # (D,)
    patch_rows = params["pos_embed"][0, 1:] + params["patch_b"]                # (Np, D)
    tok_init = jnp.concatenate(
        [cls_row[None, :], patch_rows,
         jnp.zeros((N_PAD - NUM_TOKENS, EMBED_DIM), jnp.float32)], axis=0)     # (N_PAD, D)

    weights = [params[k] for k in (
        "ln1_g", "ln1_b", "wqkv", "bqkv", "wo", "bo",
        "ln2_g", "ln2_b", "w1", "b1", "w2", "b2", "norm_g", "norm_b")]

    out = pl.pallas_call(
        functools.partial(_vit_kernel, num_heads=NUM_HEADS, depth=DEPTH,
                          batch=b, num_valid=NUM_TOKENS),
        out_shape=jax.ShapeDtypeStruct((b, N_PAD, EMBED_DIM), jnp.float32),
        compiler_params=pltpu.CompilerParams(
            # Whole model fits trivially at demo scale; re-derive when streaming
            # layers for ViT-base (v7x physical VMEM is only 64 MiB).
            vmem_limit_bytes=32 * 1024 * 1024,
        ),
    )(patches, params["patch_w"], tok_init, *weights)                  # (B, N_PAD, D)

    # Drop pad tokens; output.permute(1, 0, 2).
    return jnp.transpose(out[:, :NUM_TOKENS], (1, 0, 2))               # (N, B, D)


# --------------------------- parameter init ----------------------------------
def init_params(key):
    keys = iter(jax.random.split(key, 3 + DEPTH * 6))

    def nrm(shape, std=0.02):
        return (std * jax.random.normal(next(keys), shape)).astype(jnp.float32)

    params = {}

    # Patch embed: torch Conv2d weight (D, C, P, P) -> matmul matrix (C*P*P, D).
    conv_w = nrm((EMBED_DIM, IN_CHANS, PATCH, PATCH))
    params["patch_w"] = conv_w.reshape(EMBED_DIM, -1).T.astype(jnp.bfloat16)
    params["patch_b"] = jnp.zeros((1, EMBED_DIM), jnp.float32)

    params["cls_token"] = nrm((1, 1, EMBED_DIM))
    params["pos_embed"] = nrm((1, NUM_TOKENS, EMBED_DIM))

    ln1_g, ln1_b, ln2_g, ln2_b = [], [], [], []
    wqkv, bqkv, wo, bo, w1, b1, w2, b2 = [], [], [], [], [], [], [], []
    for _ in range(DEPTH):
        ln1_g.append(jnp.ones((1, EMBED_DIM), jnp.float32))
        ln1_b.append(jnp.zeros((1, EMBED_DIM), jnp.float32))
        wq = nrm((EMBED_DIM, EMBED_DIM))
        wk = nrm((EMBED_DIM, EMBED_DIM))
        wv = nrm((EMBED_DIM, EMBED_DIM))
        # Flat, lane-dense fused QKV weight (D, 3D); heads split inside the kernel.
        wqkv.append(jnp.concatenate([wq, wk, wv], axis=1))
        bqkv.append(jnp.zeros((1, 3 * EMBED_DIM), jnp.float32))
        # Flat output projection (D, D); rows ordered per head (matches ctx concat).
        wo.append(nrm((EMBED_DIM, EMBED_DIM)))
        bo.append(jnp.zeros((1, EMBED_DIM), jnp.float32))
        ln2_g.append(jnp.ones((1, EMBED_DIM), jnp.float32))
        ln2_b.append(jnp.zeros((1, EMBED_DIM), jnp.float32))
        w1.append(nrm((EMBED_DIM, MLP_HIDDEN)))
        b1.append(jnp.zeros((1, MLP_HIDDEN), jnp.float32))
        w2.append(nrm((MLP_HIDDEN, EMBED_DIM)))
        b2.append(jnp.zeros((1, EMBED_DIM), jnp.float32))

    params["ln1_g"] = jnp.stack(ln1_g)
    params["ln1_b"] = jnp.stack(ln1_b)
    params["wqkv"] = jnp.stack(wqkv).astype(jnp.bfloat16)   # (DEPTH, D, 3D)
    params["bqkv"] = jnp.stack(bqkv)                        # (DEPTH, 1, 3D)
    params["wo"] = jnp.stack(wo).astype(jnp.bfloat16)       # (DEPTH, D, D)
    params["bo"] = jnp.stack(bo)                            # (DEPTH, 1, D)
    params["ln2_g"] = jnp.stack(ln2_g)
    params["ln2_b"] = jnp.stack(ln2_b)
    params["w1"] = jnp.stack(w1).astype(jnp.bfloat16)       # (DEPTH, D, 4D)
    params["b1"] = jnp.stack(b1)
    params["w2"] = jnp.stack(w2).astype(jnp.bfloat16)       # (DEPTH, 4D, D)
    params["b2"] = jnp.stack(b2)
    params["norm_g"] = jnp.ones((1, EMBED_DIM), jnp.float32)
    params["norm_b"] = jnp.zeros((1, EMBED_DIM), jnp.float32)
    return params


# ------------------------------- main -----------------------------------------
if __name__ == "__main__":
    key = jax.random.PRNGKey(0)
    pkey, xkey = jax.random.split(key)

    params = init_params(pkey)
    x = jax.random.normal(xkey, (2, IN_CHANS, IMG, IMG), dtype=jnp.float32)

    out = vit_encoder_forward(x, params)
    out = jax.block_until_ready(out)

    assert out.shape == (NUM_TOKENS, 2, EMBED_DIM), out.shape
    assert bool(jnp.all(jnp.isfinite(out)))
    print("KERNEL_OK")
</pallas_src>

<mosaic_0001>
module attributes {stable_mosaic.version = 11 : i64} {
  func.func @_vit_kernel(%arg0: memref<2x8x256xbf16, #tpu.memory_space<vmem>>, %arg1: memref<256x128xbf16, #tpu.memory_space<vmem>>, %arg2: memref<8x128xf32, #tpu.memory_space<vmem>>, %arg3: memref<2x1x128xf32, #tpu.memory_space<vmem>>, %arg4: memref<2x1x128xf32, #tpu.memory_space<vmem>>, %arg5: memref<2x128x384xbf16, #tpu.memory_space<vmem>>, %arg6: memref<2x1x384xf32, #tpu.memory_space<vmem>>, %arg7: memref<2x128x128xbf16, #tpu.memory_space<vmem>>, %arg8: memref<2x1x128xf32, #tpu.memory_space<vmem>>, %arg9: memref<2x1x128xf32, #tpu.memory_space<vmem>>, %arg10: memref<2x1x128xf32, #tpu.memory_space<vmem>>, %arg11: memref<2x128x512xbf16, #tpu.memory_space<vmem>>, %arg12: memref<2x1x512xf32, #tpu.memory_space<vmem>>, %arg13: memref<2x512x128xbf16, #tpu.memory_space<vmem>>, %arg14: memref<2x1x128xf32, #tpu.memory_space<vmem>>, %arg15: memref<1x128xf32, #tpu.memory_space<vmem>>, %arg16: memref<1x128xf32, #tpu.memory_space<vmem>>, %arg17: memref<2x8x128xf32, #tpu.memory_space<vmem>>) attributes {dimension_semantics = [], scalar_prefetch = 0 : i64, scratch_operands = 0 : i64, tpu.core_type = #tpu.core_type<tc>} {
    %c0 = arith.constant 0 : index
    %c0_0 = arith.constant 0 : index
    %c0_1 = arith.constant 0 : index
    %0 = vector.load %arg0[%c0, %c0_0, %c0_1] : memref<2x8x256xbf16, #tpu.memory_space<vmem>>, vector<2x8x256xbf16>
    %1 = vector.shape_cast %0 : vector<2x8x256xbf16> to vector<16x256xbf16>
    %c0_2 = arith.constant 0 : index
    %c0_3 = arith.constant 0 : index
    %2 = vector.load %arg1[%c0_2, %c0_3] : memref<256x128xbf16, #tpu.memory_space<vmem>>, vector<256x128xbf16>
    %cst = arith.constant dense<0.000000e+00> : vector<16x128xf32>
    %3 = tpu.matmul %1, %2, %cst {dimension_numbers = #tpu.dot_dimension_numbers<[1], [0], [0], [1], [0, 0, 1, 1], [], []>} : vector<16x256xbf16>, vector<256x128xbf16>, vector<16x128xf32> -> vector<16x128xf32>
    %4 = vector.shape_cast %3 : vector<16x128xf32> to vector<2x8x128xf32>
    %c0_4 = arith.constant 0 : index
    %c0_5 = arith.constant 0 : index
    %5 = vector.load %arg2[%c0_4, %c0_5] : memref<8x128xf32, #tpu.memory_space<vmem>>, vector<8x128xf32>
    %6 = vector.shape_cast %5 : vector<8x128xf32> to vector<1x8x128xf32>
    %7 = vector.broadcast %6 : vector<1x8x128xf32> to vector<2x8x128xf32>
    %8 = arith.addf %4, %7 : vector<2x8x128xf32>
    %9 = vector.shape_cast %8 : vector<2x8x128xf32> to vector<16x128xf32>
    %10 = tpu.iota {dimensions = array<i32: 2>} : vector<1x1x8xi32>
    %c5_i32 = arith.constant 5 : i32
    %11 = vector.broadcast %c5_i32 : i32 to vector<1x1x8xi32>
    %12 = arith.cmpi slt, %10, %11 : vector<1x1x8xi32>
    %cst_6 = arith.constant 0.000000e+00 : f32
    %cst_7 = arith.constant -1.000000e+09 : f32
    %13 = vector.broadcast %cst_6 : f32 to vector<1x1x8xf32>
    %14 = vector.broadcast %cst_7 : f32 to vector<1x1x8xf32>
    %15 = arith.select %12, %13, %14 : vector<1x1x8xi1>, vector<1x1x8xf32>
    %c0_8 = arith.constant 0 : index
    %c0_9 = arith.constant 0 : index
    %c0_10 = arith.constant 0 : index
    %16 = vector.load %arg3[%c0_8, %c0_9, %c0_10] : memref<2x1x128xf32, #tpu.memory_space<vmem>>, vector<1x1x128xf32>
    %17 = vector.shape_cast %16 : vector<1x1x128xf32> to vector<1x128xf32>
    %c0_11 = arith.constant 0 : index
    %c0_12 = arith.constant 0 : index
    %c0_13 = arith.constant 0 : index
    %18 = vector.load %arg4[%c0_11, %c0_12, %c0_13] : memref<2x1x128xf32, #tpu.memory_space<vmem>>, vector<1x1x128xf32>
    %19 = vector.shape_cast %18 : vector<1x1x128xf32> to vector<1x128xf32>
    %cst_14 = arith.constant dense<0.000000e+00> : vector<16xf32>
    %20 = vector.multi_reduction <add>, %9, %cst_14 [1] : vector<16x128xf32> to vector<16xf32>
    %21 = vector.shape_cast %20 : vector<16xf32> to vector<16x1xf32>
    %cst_15 = arith.constant 1.280000e+02 : f32
    %22 = vector.broadcast %cst_15 : f32 to vector<16x1xf32>
    %23 = arith.divf %21, %22 : vector<16x1xf32>
    %24 = vector.broadcast %23 : vector<16x1xf32> to vector<16x128xf32>
    %25 = arith.subf %9, %24 : vector<16x128xf32>
    %26 = arith.mulf %25, %25 : vector<16x128xf32>
    %cst_16 = arith.constant dense<0.000000e+00> : vector<16xf32>
    %27 = vector.multi_reduction <add>, %26, %cst_16 [1] : vector<16x128xf32> to vector<16xf32>
    %28 = vector.shape_cast %27 : vector<16xf32> to vector<16x1xf32>
    %cst_17 = arith.constant 1.280000e+02 : f32
    %29 = vector.broadcast %cst_17 : f32 to vector<16x1xf32>
    %30 = arith.divf %28, %29 : vector<16x1xf32>
    %31 = vector.broadcast %23 : vector<16x1xf32> to vector<16x128xf32>
    %32 = arith.subf %9, %31 : vector<16x128xf32>
    %cst_18 = arith.constant 9.99999997E-7 : f32
    %33 = vector.broadcast %cst_18 : f32 to vector<16x1xf32>
    %34 = arith.addf %30, %33 : vector<16x1xf32>
    %35 = math.rsqrt %34 : vector<16x1xf32>
    %36 = vector.broadcast %35 : vector<16x1xf32> to vector<16x128xf32>
    %37 = arith.mulf %32, %36 : vector<16x128xf32>
    %38 = vector.broadcast %17 : vector<1x128xf32> to vector<16x128xf32>
    %39 = arith.mulf %37, %38 : vector<16x128xf32>
    %40 = vector.broadcast %19 : vector<1x128xf32> to vector<16x128xf32>
    %41 = arith.addf %39, %40 : vector<16x128xf32>
    %42 = arith.truncf %41 : vector<16x128xf32> to vector<16x128xbf16>
    %c0_19 = arith.constant 0 : index
    %c0_20 = arith.constant 0 : index
    %c0_21 = arith.constant 0 : index
    %43 = vector.load %arg5[%c0_19, %c0_20, %c0_21] : memref<2x128x384xbf16, #tpu.memory_space<vmem>>, vector<1x128x384xbf16>
    %44 = vector.shape_cast %43 : vector<1x128x384xbf16> to vector<128x384xbf16>
    %cst_22 = arith.constant dense<0.000000e+00> : vector<16x384xf32>
    %45 = tpu.matmul %42, %44, %cst_22 {dimension_numbers = #tpu.dot_dimension_numbers<[1], [0], [0], [1], [0, 0, 1, 1], [], []>} : vector<16x128xbf16>, vector<128x384xbf16>, vector<16x384xf32> -> vector<16x384xf32>
    %c0_23 = arith.constant 0 : index
    %c0_24 = arith.constant 0 : index
    %c0_25 = arith.constant 0 : index
    %46 = vector.load %arg6[%c0_23, %c0_24, %c0_25] : memref<2x1x384xf32, #tpu.memory_space<vmem>>, vector<1x1x384xf32>
    %47 = vector.shape_cast %46 : vector<1x1x384xf32> to vector<1x384xf32>
    %48 = vector.broadcast %47 : vector<1x384xf32> to vector<16x384xf32>
    %49 = arith.addf %45, %48 : vector<16x384xf32>
    %50 = vector.extract_strided_slice %49 {offsets = [0, 0], sizes = [16, 128], strides = [1, 1]} : vector<16x384xf32> to vector<16x128xf32>
    %51 = arith.truncf %50 : vector<16x128xf32> to vector<16x128xbf16>
    %52 = vector.extract_strided_slice %49 {offsets = [0, 128], sizes = [16, 128], strides = [1, 1]} : vector<16x384xf32> to vector<16x128xf32>
    %53 = arith.truncf %52 : vector<16x128xf32> to vector<16x128xbf16>
    %54 = vector.extract_strided_slice %49 {offsets = [0, 256], sizes = [16, 128], strides = [1, 1]} : vector<16x384xf32> to vector<16x128xf32>
    %55 = arith.truncf %54 : vector<16x128xf32> to vector<16x128xbf16>
    %56 = vector.shape_cast %51 : vector<16x128xbf16> to vector<2x8x128xbf16>
    %57 = vector.extract_strided_slice %56 {offsets = [0, 0, 0], sizes = [2, 8, 32], strides = [1, 1, 1]} : vector<2x8x128xbf16> to vector<2x8x32xbf16>
    %58 = vector.extract_strided_slice %56 {offsets = [0, 0, 32], sizes = [2, 8, 32], strides = [1, 1, 1]} : vector<2x8x128xbf16> to vector<2x8x32xbf16>
    %59 = vector.extract_strided_slice %56 {offsets = [0, 0, 64], sizes = [2, 8, 32], strides = [1, 1, 1]} : vector<2x8x128xbf16> to vector<2x8x32xbf16>
    %60 = vector.extract_strided_slice %56 {offsets = [0, 0, 96], sizes = [2, 8, 32], strides = [1, 1, 1]} : vector<2x8x128xbf16> to vector<2x8x32xbf16>
    %61 = tpu.concatenate %57, %58, %59, %60 in 0 : vector<2x8x32xbf16>, vector<2x8x32xbf16>, vector<2x8x32xbf16>, vector<2x8x32xbf16> -> vector<8x8x32xbf16>
    %62 = vector.shape_cast %53 : vector<16x128xbf16> to vector<2x8x128xbf16>
    %63 = vector.extract_strided_slice %62 {offsets = [0, 0, 0], sizes = [2, 8, 32], strides = [1, 1, 1]} : vector<2x8x128xbf16> to vector<2x8x32xbf16>
    %64 = vector.extract_strided_slice %62 {offsets = [0, 0, 32], sizes = [2, 8, 32], strides = [1, 1, 1]} : vector<2x8x128xbf16> to vector<2x8x32xbf16>
    %65 = vector.extract_strided_slice %62 {offsets = [0, 0, 64], sizes = [2, 8, 32], strides = [1, 1, 1]} : vector<2x8x128xbf16> to vector<2x8x32xbf16>
    %66 = vector.extract_strided_slice %62 {offsets = [0, 0, 96], sizes = [2, 8, 32], strides = [1, 1, 1]} : vector<2x8x128xbf16> to vector<2x8x32xbf16>
    %67 = tpu.concatenate %63, %64, %65, %66 in 0 : vector<2x8x32xbf16>, vector<2x8x32xbf16>, vector<2x8x32xbf16>, vector<2x8x32xbf16> -> vector<8x8x32xbf16>
    %68 = vector.shape_cast %55 : vector<16x128xbf16> to vector<2x8x128xbf16>
    %69 = vector.extract_strided_slice %68 {offsets = [0, 0, 0], sizes = [2, 8, 32], strides = [1, 1, 1]} : vector<2x8x128xbf16> to vector<2x8x32xbf16>
    %70 = vector.extract_strided_slice %68 {offsets = [0, 0, 32], sizes = [2, 8, 32], strides = [1, 1, 1]} : vector<2x8x128xbf16> to vector<2x8x32xbf16>
    %71 = vector.extract_strided_slice %68 {offsets = [0, 0, 64], sizes = [2, 8, 32], strides = [1, 1, 1]} : vector<2x8x128xbf16> to vector<2x8x32xbf16>
    %72 = vector.extract_strided_slice %68 {offsets = [0, 0, 96], sizes = [2, 8, 32], strides = [1, 1, 1]} : vector<2x8x128xbf16> to vector<2x8x32xbf16>
    %73 = tpu.concatenate %69, %70, %71, %72 in 0 : vector<2x8x32xbf16>, vector<2x8x32xbf16>, vector<2x8x32xbf16>, vector<2x8x32xbf16> -> vector<8x8x32xbf16>
    %cst_26 = arith.constant dense<0.000000e+00> : vector<8x8x8xf32>
    %74 = tpu.matmul %61, %67, %cst_26 {dimension_numbers = #tpu.dot_dimension_numbers<[2], [2], [1], [1], [0, 0, 0, 1, 1, 1], [0], [0]>} : vector<8x8x32xbf16>, vector<8x8x32xbf16>, vector<8x8x8xf32> -> vector<8x8x8xf32>
    %cst_27 = arith.constant 0.176776692 : f32
    %75 = vector.broadcast %cst_27 : f32 to vector<8x8x8xf32>
    %76 = arith.mulf %74, %75 : vector<8x8x8xf32>
    %77 = vector.broadcast %15 : vector<1x1x8xf32> to vector<8x8x8xf32>
    %78 = arith.addf %76, %77 : vector<8x8x8xf32>
    %cst_28 = arith.constant dense<0xFF800000> : vector<8x8xf32>
    %79 = vector.multi_reduction <maximumf>, %78, %cst_28 [2] : vector<8x8x8xf32> to vector<8x8xf32>
    %80 = vector.shape_cast %79 : vector<8x8xf32> to vector<8x8x1xf32>
    %81 = vector.broadcast %80 : vector<8x8x1xf32> to vector<8x8x8xf32>
    %82 = arith.subf %78, %81 : vector<8x8x8xf32>
    %83 = math.exp %82 : vector<8x8x8xf32>
    %cst_29 = arith.constant dense<0.000000e+00> : vector<8x8xf32>
    %84 = vector.multi_reduction <add>, %83, %cst_29 [2] : vector<8x8x8xf32> to vector<8x8xf32>
    %85 = vector.shape_cast %84 : vector<8x8xf32> to vector<8x8x1xf32>
    %86 = tpu.reciprocal %85 {approx = true} : vector<8x8x1xf32> -> vector<8x8x1xf32>
    %87 = vector.broadcast %86 : vector<8x8x1xf32> to vector<8x8x8xf32>
    %88 = arith.mulf %83, %87 : vector<8x8x8xf32>
    %89 = arith.truncf %88 : vector<8x8x8xf32> to vector<8x8x8xbf16>
    %cst_30 = arith.constant dense<0.000000e+00> : vector<8x8x32xf32>
    %90 = tpu.matmul %89, %73, %cst_30 {dimension_numbers = #tpu.dot_dimension_numbers<[2], [1], [1], [2], [0, 0, 0, 1, 1, 2], [0], [0]>} : vector<8x8x8xbf16>, vector<8x8x32xbf16>, vector<8x8x32xf32> -> vector<8x8x32xf32>
    %91 = vector.extract_strided_slice %90 {offsets = [0, 0, 0], sizes = [2, 8, 32], strides = [1, 1, 1]} : vector<8x8x32xf32> to vector<2x8x32xf32>
    %92 = vector.extract_strided_slice %90 {offsets = [2, 0, 0], sizes = [2, 8, 32], strides = [1, 1, 1]} : vector<8x8x32xf32> to vector<2x8x32xf32>
    %93 = vector.extract_strided_slice %90 {offsets = [4, 0, 0], sizes = [2, 8, 32], strides = [1, 1, 1]} : vector<8x8x32xf32> to vector<2x8x32xf32>
    %94 = vector.extract_strided_slice %90 {offsets = [6, 0, 0], sizes = [2, 8, 32], strides = [1, 1, 1]} : vector<8x8x32xf32> to vector<2x8x32xf32>
    %95 = tpu.concatenate %91, %92, %93, %94 in 2 : vector<2x8x32xf32>, vector<2x8x32xf32>, vector<2x8x32xf32>, vector<2x8x32xf32> -> vector<2x8x128xf32>
    %96 = vector.shape_cast %95 : vector<2x8x128xf32> to vector<16x128xf32>
    %97 = arith.truncf %96 : vector<16x128xf32> to vector<16x128xbf16>
    %c0_31 = arith.constant 0 : index
    %c0_32 = arith.constant 0 : index
    %c0_33 = arith.constant 0 : index
    %98 = vector.load %arg7[%c0_31, %c0_32, %c0_33] : memref<2x128x128xbf16, #tpu.memory_space<vmem>>, vector<1x128x128xbf16>
    %99 = vector.shape_cast %98 : vector<1x128x128xbf16> to vector<128x128xbf16>
    %cst_34 = arith.constant dense<0.000000e+00> : vector<16x128xf32>
    %100 = tpu.matmul %97, %99, %cst_34 {dimension_numbers = #tpu.dot_dimension_numbers<[1], [0], [0], [1], [0, 0, 1, 1], [], []>} : vector<16x128xbf16>, vector<128x128xbf16>, vector<16x128xf32> -> vector<16x128xf32>
    %c0_35 = arith.constant 0 : index
    %c0_36 = arith.constant 0 : index
    %c0_37 = arith.constant 0 : index
    %101 = vector.load %arg8[%c0_35, %c0_36, %c0_37] : memref<2x1x128xf32, #tpu.memory_space<vmem>>, vector<1x1x128xf32>
    %102 = vector.shape_cast %101 : vector<1x1x128xf32> to vector<1x128xf32>
    %103 = vector.broadcast %102 : vector<1x128xf32> to vector<16x128xf32>
    %104 = arith.addf %100, %103 : vector<16x128xf32>
    %105 = arith.addf %9, %104 : vector<16x128xf32>
    %c0_38 = arith.constant 0 : index
    %c0_39 = arith.constant 0 : index
    %c0_40 = arith.constant 0 : index
    %106 = vector.load %arg9[%c0_38, %c0_39, %c0_40] : memref<2x1x128xf32, #tpu.memory_space<vmem>>, vector<1x1x128xf32>
    %107 = vector.shape_cast %106 : vector<1x1x128xf32> to vector<1x128xf32>
    %c0_41 = arith.constant 0 : index
    %c0_42 = arith.constant 0 : index
    %c0_43 = arith.constant 0 : index
    %108 = vector.load %arg10[%c0_41, %c0_42, %c0_43] : memref<2x1x128xf32, #tpu.memory_space<vmem>>, vector<1x1x128xf32>
    %109 = vector.shape_cast %108 : vector<1x1x128xf32> to vector<1x128xf32>
    %cst_44 = arith.constant dense<0.000000e+00> : vector<16xf32>
    %110 = vector.multi_reduction <add>, %105, %cst_44 [1] : vector<16x128xf32> to vector<16xf32>
    %111 = vector.shape_cast %110 : vector<16xf32> to vector<16x1xf32>
    %cst_45 = arith.constant 1.280000e+02 : f32
    %112 = vector.broadcast %cst_45 : f32 to vector<16x1xf32>
    %113 = arith.divf %111, %112 : vector<16x1xf32>
    %114 = vector.broadcast %113 : vector<16x1xf32> to vector<16x128xf32>
    %115 = arith.subf %105, %114 : vector<16x128xf32>
    %116 = arith.mulf %115, %115 : vector<16x128xf32>
    %cst_46 = arith.constant dense<0.000000e+00> : vector<16xf32>
    %117 = vector.multi_reduction <add>, %116, %cst_46 [1] : vector<16x128xf32> to vector<16xf32>
    %118 = vector.shape_cast %117 : vector<16xf32> to vector<16x1xf32>
    %cst_47 = arith.constant 1.280000e+02 : f32
    %119 = vector.broadcast %cst_47 : f32 to vector<16x1xf32>
    %120 = arith.divf %118, %119 : vector<16x1xf32>
    %121 = vector.broadcast %113 : vector<16x1xf32> to vector<16x128xf32>
    %122 = arith.subf %105, %121 : vector<16x128xf32>
    %cst_48 = arith.constant 9.99999997E-7 : f32
    %123 = vector.broadcast %cst_48 : f32 to vector<16x1xf32>
    %124 = arith.addf %120, %123 : vector<16x1xf32>
    %125 = math.rsqrt %124 : vector<16x1xf32>
    %126 = vector.broadcast %125 : vector<16x1xf32> to vector<16x128xf32>
    %127 = arith.mulf %122, %126 : vector<16x128xf32>
    %128 = vector.broadcast %107 : vector<1x128xf32> to vector<16x128xf32>
    %129 = arith.mulf %127, %128 : vector<16x128xf32>
    %130 = vector.broadcast %109 : vector<1x128xf32> to vector<16x128xf32>
    %131 = arith.addf %129, %130 : vector<16x128xf32>
    %132 = arith.truncf %131 : vector<16x128xf32> to vector<16x128xbf16>
    %c0_49 = arith.constant 0 : index
    %c0_50 = arith.constant 0 : index
    %c0_51 = arith.constant 0 : index
    %133 = vector.load %arg11[%c0_49, %c0_50, %c0_51] : memref<2x128x512xbf16, #tpu.memory_space<vmem>>, vector<1x128x512xbf16>
    %134 = vector.shape_cast %133 : vector<1x128x512xbf16> to vector<128x512xbf16>
    %cst_52 = arith.constant dense<0.000000e+00> : vector<16x512xf32>
    %135 = tpu.matmul %132, %134, %cst_52 {dimension_numbers = #tpu.dot_dimension_numbers<[1], [0], [0], [1], [0, 0, 1, 1], [], []>} : vector<16x128xbf16>, vector<128x512xbf16>, vector<16x512xf32> -> vector<16x512xf32>
    %c0_53 = arith.constant 0 : index
    %c0_54 = arith.constant 0 : index
    %c0_55 = arith.constant 0 : index
    %136 = vector.load %arg12[%c0_53, %c0_54, %c0_55] : memref<2x1x512xf32, #tpu.memory_space<vmem>>, vector<1x1x512xf32>
    %137 = vector.shape_cast %136 : vector<1x1x512xf32> to vector<1x512xf32>
    %138 = vector.broadcast %137 : vector<1x512xf32> to vector<16x512xf32>
    %139 = arith.addf %135, %138 : vector<16x512xf32>
    %140 = arith.mulf %139, %139 : vector<16x512xf32>
    %141 = arith.mulf %139, %140 : vector<16x512xf32>
    %cst_56 = arith.constant 4.471500e-02 : f32
    %142 = vector.broadcast %cst_56 : f32 to vector<16x512xf32>
    %143 = arith.mulf %142, %141 : vector<16x512xf32>
    %144 = arith.addf %139, %143 : vector<16x512xf32>
    %cst_57 = arith.constant 0.797884583 : f32
    %145 = vector.broadcast %cst_57 : f32 to vector<16x512xf32>
    %146 = arith.mulf %145, %144 : vector<16x512xf32>
    %147 = math.tanh %146 : vector<16x512xf32>
    %cst_58 = arith.constant 1.000000e+00 : f32
    %148 = vector.broadcast %cst_58 : f32 to vector<16x512xf32>
    %149 = arith.addf %148, %147 : vector<16x512xf32>
    %cst_59 = arith.constant 5.000000e-01 : f32
    %150 = vector.broadcast %cst_59 : f32 to vector<16x512xf32>
    %151 = arith.mulf %150, %149 : vector<16x512xf32>
    %152 = arith.mulf %139, %151 : vector<16x512xf32>
    %153 = arith.truncf %152 : vector<16x512xf32> to vector<16x512xbf16>
    %c0_60 = arith.constant 0 : index
    %c0_61 = arith.constant 0 : index
    %c0_62 = arith.constant 0 : index
    %154 = vector.load %arg13[%c0_60, %c0_61, %c0_62] : memref<2x512x128xbf16, #tpu.memory_space<vmem>>, vector<1x512x128xbf16>
    %155 = vector.shape_cast %154 : vector<1x512x128xbf16> to vector<512x128xbf16>
    %cst_63 = arith.constant dense<0.000000e+00> : vector<16x128xf32>
    %156 = tpu.matmul %153, %155, %cst_63 {dimension_numbers = #tpu.dot_dimension_numbers<[1], [0], [0], [1], [0, 0, 1, 1], [], []>} : vector<16x512xbf16>, vector<512x128xbf16>, vector<16x128xf32> -> vector<16x128xf32>
    %c0_64 = arith.constant 0 : index
    %c0_65 = arith.constant 0 : index
    %c0_66 = arith.constant 0 : index
    %157 = vector.load %arg14[%c0_64, %c0_65, %c0_66] : memref<2x1x128xf32, #tpu.memory_space<vmem>>, vector<1x1x128xf32>
    %158 = vector.shape_cast %157 : vector<1x1x128xf32> to vector<1x128xf32>
    %159 = vector.broadcast %158 : vector<1x128xf32> to vector<16x128xf32>
    %160 = arith.addf %156, %159 : vector<16x128xf32>
    %161 = arith.addf %105, %160 : vector<16x128xf32>
    %c1 = arith.constant 1 : index
    %c0_67 = arith.constant 0 : index
    %c0_68 = arith.constant 0 : index
    %162 = vector.load %arg3[%c1, %c0_67, %c0_68] : memref<2x1x128xf32, #tpu.memory_space<vmem>>, vector<1x1x128xf32>
    %163 = vector.shape_cast %162 : vector<1x1x128xf32> to vector<1x128xf32>
    %c1_69 = arith.constant 1 : index
    %c0_70 = arith.constant 0 : index
    %c0_71 = arith.constant 0 : index
    %164 = vector.load %arg4[%c1_69, %c0_70, %c0_71] : memref<2x1x128xf32, #tpu.memory_space<vmem>>, vector<1x1x128xf32>
    %165 = vector.shape_cast %164 : vector<1x1x128xf32> to vector<1x128xf32>
    %cst_72 = arith.constant dense<0.000000e+00> : vector<16xf32>
    %166 = vector.multi_reduction <add>, %161, %cst_72 [1] : vector<16x128xf32> to vector<16xf32>
    %167 = vector.shape_cast %166 : vector<16xf32> to vector<16x1xf32>
    %cst_73 = arith.constant 1.280000e+02 : f32
    %168 = vector.broadcast %cst_73 : f32 to vector<16x1xf32>
    %169 = arith.divf %167, %168 : vector<16x1xf32>
    %170 = vector.broadcast %169 : vector<16x1xf32> to vector<16x128xf32>
    %171 = arith.subf %161, %170 : vector<16x128xf32>
    %172 = arith.mulf %171, %171 : vector<16x128xf32>
    %cst_74 = arith.constant dense<0.000000e+00> : vector<16xf32>
    %173 = vector.multi_reduction <add>, %172, %cst_74 [1] : vector<16x128xf32> to vector<16xf32>
    %174 = vector.shape_cast %173 : vector<16xf32> to vector<16x1xf32>
    %cst_75 = arith.constant 1.280000e+02 : f32
    %175 = vector.broadcast %cst_75 : f32 to vector<16x1xf32>
    %176 = arith.divf %174, %175 : vector<16x1xf32>
    %177 = vector.broadcast %169 : vector<16x1xf32> to vector<16x128xf32>
    %178 = arith.subf %161, %177 : vector<16x128xf32>
    %cst_76 = arith.constant 9.99999997E-7 : f32
    %179 = vector.broadcast %cst_76 : f32 to vector<16x1xf32>
    %180 = arith.addf %176, %179 : vector<16x1xf32>
    %181 = math.rsqrt %180 : vector<16x1xf32>
    %182 = vector.broadcast %181 : vector<16x1xf32> to vector<16x128xf32>
    %183 = arith.mulf %178, %182 : vector<16x128xf32>
    %184 = vector.broadcast %163 : vector<1x128xf32> to vector<16x128xf32>
    %185 = arith.mulf %183, %184 : vector<16x128xf32>
    %186 = vector.broadcast %165 : vector<1x128xf32> to vector<16x128xf32>
    %187 = arith.addf %185, %186 : vector<16x128xf32>
    %188 = arith.truncf %187 : vector<16x128xf32> to vector<16x128xbf16>
    %c1_77 = arith.constant 1 : index
    %c0_78 = arith.constant 0 : index
    %c0_79 = arith.constant 0 : index
    %189 = vector.load %arg5[%c1_77, %c0_78, %c0_79] : memref<2x128x384xbf16, #tpu.memory_space<vmem>>, vector<1x128x384xbf16>
    %190 = vector.shape_cast %189 : vector<1x128x384xbf16> to vector<128x384xbf16>
    %cst_80 = arith.constant dense<0.000000e+00> : vector<16x384xf32>
    %191 = tpu.matmul %188, %190, %cst_80 {dimension_numbers = #tpu.dot_dimension_numbers<[1], [0], [0], [1], [0, 0, 1, 1], [], []>} : vector<16x128xbf16>, vector<128x384xbf16>, vector<16x384xf32> -> vector<16x384xf32>
    %c1_81 = arith.constant 1 : index
    %c0_82 = arith.constant 0 : index
    %c0_83 = arith.constant 0 : index
    %192 = vector.load %arg6[%c1_81, %c0_82, %c0_83] : memref<2x1x384xf32, #tpu.memory_space<vmem>>, vector<1x1x384xf32>
    %193 = vector.shape_cast %192 : vector<1x1x384xf32> to vector<1x384xf32>
    %194 = vector.broadcast %193 : vector<1x384xf32> to vector<16x384xf32>
    %195 = arith.addf %191, %194 : vector<16x384xf32>
    %196 = vector.extract_strided_slice %195 {offsets = [0, 0], sizes = [16, 128], strides = [1, 1]} : vector<16x384xf32> to vector<16x128xf32>
    %197 = arith.truncf %196 : vector<16x128xf32> to vector<16x128xbf16>
    %198 = vector.extract_strided_slice %195 {offsets = [0, 128], sizes = [16, 128], strides = [1, 1]} : vector<16x384xf32> to vector<16x128xf32>
    %199 = arith.truncf %198 : vector<16x128xf32> to vector<16x128xbf16>
    %200 = vector.extract_strided_slice %195 {offsets = [0, 256], sizes = [16, 128], strides = [1, 1]} : vector<16x384xf32> to vector<16x128xf32>
    %201 = arith.truncf %200 : vector<16x128xf32> to vector<16x128xbf16>
    %202 = vector.shape_cast %197 : vector<16x128xbf16> to vector<2x8x128xbf16>
    %203 = vector.extract_strided_slice %202 {offsets = [0, 0, 0], sizes = [2, 8, 32], strides = [1, 1, 1]} : vector<2x8x128xbf16> to vector<2x8x32xbf16>
    %204 = vector.extract_strided_slice %202 {offsets = [0, 0, 32], sizes = [2, 8, 32], strides = [1, 1, 1]} : vector<2x8x128xbf16> to vector<2x8x32xbf16>
    %205 = vector.extract_strided_slice %202 {offsets = [0, 0, 64], sizes = [2, 8, 32], strides = [1, 1, 1]} : vector<2x8x128xbf16> to vector<2x8x32xbf16>
    %206 = vector.extract_strided_slice %202 {offsets = [0, 0, 96], sizes = [2, 8, 32], strides = [1, 1, 1]} : vector<2x8x128xbf16> to vector<2x8x32xbf16>
    %207 = tpu.concatenate %203, %204, %205, %206 in 0 : vector<2x8x32xbf16>, vector<2x8x32xbf16>, vector<2x8x32xbf16>, vector<2x8x32xbf16> -> vector<8x8x32xbf16>
    %208 = vector.shape_cast %199 : vector<16x128xbf16> to vector<2x8x128xbf16>
    %209 = vector.extract_strided_slice %208 {offsets = [0, 0, 0], sizes = [2, 8, 32], strides = [1, 1, 1]} : vector<2x8x128xbf16> to vector<2x8x32xbf16>
    %210 = vector.extract_strided_slice %208 {offsets = [0, 0, 32], sizes = [2, 8, 32], strides = [1, 1, 1]} : vector<2x8x128xbf16> to vector<2x8x32xbf16>
    %211 = vector.extract_strided_slice %208 {offsets = [0, 0, 64], sizes = [2, 8, 32], strides = [1, 1, 1]} : vector<2x8x128xbf16> to vector<2x8x32xbf16>
    %212 = vector.extract_strided_slice %208 {offsets = [0, 0, 96], sizes = [2, 8, 32], strides = [1, 1, 1]} : vector<2x8x128xbf16> to vector<2x8x32xbf16>
    %213 = tpu.concatenate %209, %210, %211, %212 in 0 : vector<2x8x32xbf16>, vector<2x8x32xbf16>, vector<2x8x32xbf16>, vector<2x8x32xbf16> -> vector<8x8x32xbf16>
    %214 = vector.shape_cast %201 : vector<16x128xbf16> to vector<2x8x128xbf16>
    %215 = vector.extract_strided_slice %214 {offsets = [0, 0, 0], sizes = [2, 8, 32], strides = [1, 1, 1]} : vector<2x8x128xbf16> to vector<2x8x32xbf16>
    %216 = vector.extract_strided_slice %214 {offsets = [0, 0, 32], sizes = [2, 8, 32], strides = [1, 1, 1]} : vector<2x8x128xbf16> to vector<2x8x32xbf16>
    %217 = vector.extract_strided_slice %214 {offsets = [0, 0, 64], sizes = [2, 8, 32], strides = [1, 1, 1]} : vector<2x8x128xbf16> to vector<2x8x32xbf16>
    %218 = vector.extract_strided_slice %214 {offsets = [0, 0, 96], sizes = [2, 8, 32], strides = [1, 1, 1]} : vector<2x8x128xbf16> to vector<2x8x32xbf16>
    %219 = tpu.concatenate %215, %216, %217, %218 in 0 : vector<2x8x32xbf16>, vector<2x8x32xbf16>, vector<2x8x32xbf16>, vector<2x8x32xbf16> -> vector<8x8x32xbf16>
    %cst_84 = arith.constant dense<0.000000e+00> : vector<8x8x8xf32>
    %220 = tpu.matmul %207, %213, %cst_84 {dimension_numbers = #tpu.dot_dimension_numbers<[2], [2], [1], [1], [0, 0, 0, 1, 1, 1], [0], [0]>} : vector<8x8x32xbf16>, vector<8x8x32xbf16>, vector<8x8x8xf32> -> vector<8x8x8xf32>
    %cst_85 = arith.constant 0.176776692 : f32
    %221 = vector.broadcast %cst_85 : f32 to vector<8x8x8xf32>
    %222 = arith.mulf %220, %221 : vector<8x8x8xf32>
    %223 = vector.broadcast %15 : vector<1x1x8xf32> to vector<8x8x8xf32>
    %224 = arith.addf %222, %223 : vector<8x8x8xf32>
    %cst_86 = arith.constant dense<0xFF800000> : vector<8x8xf32>
    %225 = vector.multi_reduction <maximumf>, %224, %cst_86 [2] : vector<8x8x8xf32> to vector<8x8xf32>
    %226 = vector.shape_cast %225 : vector<8x8xf32> to vector<8x8x1xf32>
    %227 = vector.broadcast %226 : vector<8x8x1xf32> to vector<8x8x8xf32>
    %228 = arith.subf %224, %227 : vector<8x8x8xf32>
    %229 = math.exp %228 : vector<8x8x8xf32>
    %cst_87 = arith.constant dense<0.000000e+00> : vector<8x8xf32>
    %230 = vector.multi_reduction <add>, %229, %cst_87 [2] : vector<8x8x8xf32> to vector<8x8xf32>
    %231 = vector.shape_cast %230 : vector<8x8xf32> to vector<8x8x1xf32>
    %232 = tpu.reciprocal %231 {approx = true} : vector<8x8x1xf32> -> vector<8x8x1xf32>
    %233 = vector.broadcast %232 : vector<8x8x1xf32> to vector<8x8x8xf32>
    %234 = arith.mulf %229, %233 : vector<8x8x8xf32>
    %235 = arith.truncf %234 : vector<8x8x8xf32> to vector<8x8x8xbf16>
    %cst_88 = arith.constant dense<0.000000e+00> : vector<8x8x32xf32>
    %236 = tpu.matmul %235, %219, %cst_88 {dimension_numbers = #tpu.dot_dimension_numbers<[2], [1], [1], [2], [0, 0, 0, 1, 1, 2], [0], [0]>} : vector<8x8x8xbf16>, vector<8x8x32xbf16>, vector<8x8x32xf32> -> vector<8x8x32xf32>
    %237 = vector.extract_strided_slice %236 {offsets = [0, 0, 0], sizes = [2, 8, 32], strides = [1, 1, 1]} : vector<8x8x32xf32> to vector<2x8x32xf32>
    %238 = vector.extract_strided_slice %236 {offsets = [2, 0, 0], sizes = [2, 8, 32], strides = [1, 1, 1]} : vector<8x8x32xf32> to vector<2x8x32xf32>
    %239 = vector.extract_strided_slice %236 {offsets = [4, 0, 0], sizes = [2, 8, 32], strides = [1, 1, 1]} : vector<8x8x32xf32> to vector<2x8x32xf32>
    %240 = vector.extract_strided_slice %236 {offsets = [6, 0, 0], sizes = [2, 8, 32], strides = [1, 1, 1]} : vector<8x8x32xf32> to vector<2x8x32xf32>
    %241 = tpu.concatenate %237, %238, %239, %240 in 2 : vector<2x8x32xf32>, vector<2x8x32xf32>, vector<2x8x32xf32>, vector<2x8x32xf32> -> vector<2x8x128xf32>
    %242 = vector.shape_cast %241 : vector<2x8x128xf32> to vector<16x128xf32>
    %243 = arith.truncf %242 : vector<16x128xf32> to vector<16x128xbf16>
    %c1_89 = arith.constant 1 : index
    %c0_90 = arith.constant 0 : index
    %c0_91 = arith.constant 0 : index
    %244 = vector.load %arg7[%c1_89, %c0_90, %c0_91] : memref<2x128x128xbf16, #tpu.memory_space<vmem>>, vector<1x128x128xbf16>
    %245 = vector.shape_cast %244 : vector<1x128x128xbf16> to vector<128x128xbf16>
    %cst_92 = arith.constant dense<0.000000e+00> : vector<16x128xf32>
    %246 = tpu.matmul %243, %245, %cst_92 {dimension_numbers = #tpu.dot_dimension_numbers<[1], [0], [0], [1], [0, 0, 1, 1], [], []>} : vector<16x128xbf16>, vector<128x128xbf16>, vector<16x128xf32> -> vector<16x128xf32>
    %c1_93 = arith.constant 1 : index
    %c0_94 = arith.constant 0 : index
    %c0_95 = arith.constant 0 : index
    %247 = vector.load %arg8[%c1_93, %c0_94, %c0_95] : memref<2x1x128xf32, #tpu.memory_space<vmem>>, vector<1x1x128xf32>
    %248 = vector.shape_cast %247 : vector<1x1x128xf32> to vector<1x128xf32>
    %249 = vector.broadcast %248 : vector<1x128xf32> to vector<16x128xf32>
    %250 = arith.addf %246, %249 : vector<16x128xf32>
    %251 = arith.addf %161, %250 : vector<16x128xf32>
    %c1_96 = arith.constant 1 : index
    %c0_97 = arith.constant 0 : index
    %c0_98 = arith.constant 0 : index
    %252 = vector.load %arg9[%c1_96, %c0_97, %c0_98] : memref<2x1x128xf32, #tpu.memory_space<vmem>>, vector<1x1x128xf32>
    %253 = vector.shape_cast %252 : vector<1x1x128xf32> to vector<1x128xf32>
    %c1_99 = arith.constant 1 : index
    %c0_100 = arith.constant 0 : index
    %c0_101 = arith.constant 0 : index
    %254 = vector.load %arg10[%c1_99, %c0_100, %c0_101] : memref<2x1x128xf32, #tpu.memory_space<vmem>>, vector<1x1x128xf32>
    %255 = vector.shape_cast %254 : vector<1x1x128xf32> to vector<1x128xf32>
    %cst_102 = arith.constant dense<0.000000e+00> : vector<16xf32>
    %256 = vector.multi_reduction <add>, %251, %cst_102 [1] : vector<16x128xf32> to vector<16xf32>
    %257 = vector.shape_cast %256 : vector<16xf32> to vector<16x1xf32>
    %cst_103 = arith.constant 1.280000e+02 : f32
    %258 = vector.broadcast %cst_103 : f32 to vector<16x1xf32>
    %259 = arith.divf %257, %258 : vector<16x1xf32>
    %260 = vector.broadcast %259 : vector<16x1xf32> to vector<16x128xf32>
    %261 = arith.subf %251, %260 : vector<16x128xf32>
    %262 = arith.mulf %261, %261 : vector<16x128xf32>
    %cst_104 = arith.constant dense<0.000000e+00> : vector<16xf32>
    %263 = vector.multi_reduction <add>, %262, %cst_104 [1] : vector<16x128xf32> to vector<16xf32>
    %264 = vector.shape_cast %263 : vector<16xf32> to vector<16x1xf32>
    %cst_105 = arith.constant 1.280000e+02 : f32
    %265 = vector.broadcast %cst_105 : f32 to vector<16x1xf32>
    %266 = arith.divf %264, %265 : vector<16x1xf32>
    %267 = vector.broadcast %259 : vector<16x1xf32> to vector<16x128xf32>
    %268 = arith.subf %251, %267 : vector<16x128xf32>
    %cst_106 = arith.constant 9.99999997E-7 : f32
    %269 = vector.broadcast %cst_106 : f32 to vector<16x1xf32>
    %270 = arith.addf %266, %269 : vector<16x1xf32>
    %271 = math.rsqrt %270 : vector<16x1xf32>
    %272 = vector.broadcast %271 : vector<16x1xf32> to vector<16x128xf32>
    %273 = arith.mulf %268, %272 : vector<16x128xf32>
    %274 = vector.broadcast %253 : vector<1x128xf32> to vector<16x128xf32>
    %275 = arith.mulf %273, %274 : vector<16x128xf32>
    %276 = vector.broadcast %255 : vector<1x128xf32> to vector<16x128xf32>
    %277 = arith.addf %275, %276 : vector<16x128xf32>
    %278 = arith.truncf %277 : vector<16x128xf32> to vector<16x128xbf16>
    %c1_107 = arith.constant 1 : index
    %c0_108 = arith.constant 0 : index
    %c0_109 = arith.constant 0 : index
    %279 = vector.load %arg11[%c1_107, %c0_108, %c0_109] : memref<2x128x512xbf16, #tpu.memory_space<vmem>>, vector<1x128x512xbf16>
    %280 = vector.shape_cast %279 : vector<1x128x512xbf16> to vector<128x512xbf16>
    %cst_110 = arith.constant dense<0.000000e+00> : vector<16x512xf32>
    %281 = tpu.matmul %278, %280, %cst_110 {dimension_numbers = #tpu.dot_dimension_numbers<[1], [0], [0], [1], [0, 0, 1, 1], [], []>} : vector<16x128xbf16>, vector<128x512xbf16>, vector<16x512xf32> -> vector<16x512xf32>
    %c1_111 = arith.constant 1 : index
    %c0_112 = arith.constant 0 : index
    %c0_113 = arith.constant 0 : index
    %282 = vector.load %arg12[%c1_111, %c0_112, %c0_113] : memref<2x1x512xf32, #tpu.memory_space<vmem>>, vector<1x1x512xf32>
    %283 = vector.shape_cast %282 : vector<1x1x512xf32> to vector<1x512xf32>
    %284 = vector.broadcast %283 : vector<1x512xf32> to vector<16x512xf32>
    %285 = arith.addf %281, %284 : vector<16x512xf32>
    %286 = arith.mulf %285, %285 : vector<16x512xf32>
    %287 = arith.mulf %285, %286 : vector<16x512xf32>
    %cst_114 = arith.constant 4.471500e-02 : f32
    %288 = vector.broadcast %cst_114 : f32 to vector<16x512xf32>
    %289 = arith.mulf %288, %287 : vector<16x512xf32>
    %290 = arith.addf %285, %289 : vector<16x512xf32>
    %cst_115 = arith.constant 0.797884583 : f32
    %291 = vector.broadcast %cst_115 : f32 to vector<16x512xf32>
    %292 = arith.mulf %291, %290 : vector<16x512xf32>
    %293 = math.tanh %292 : vector<16x512xf32>
    %cst_116 = arith.constant 1.000000e+00 : f32
    %294 = vector.broadcast %cst_116 : f32 to vector<16x512xf32>
    %295 = arith.addf %294, %293 : vector<16x512xf32>
    %cst_117 = arith.constant 5.000000e-01 : f32
    %296 = vector.broadcast %cst_117 : f32 to vector<16x512xf32>
    %297 = arith.mulf %296, %295 : vector<16x512xf32>
    %298 = arith.mulf %285, %297 : vector<16x512xf32>
    %299 = arith.truncf %298 : vector<16x512xf32> to vector<16x512xbf16>
    %c1_118 = arith.constant 1 : index
    %c0_119 = arith.constant 0 : index
    %c0_120 = arith.constant 0 : index
    %300 = vector.load %arg13[%c1_118, %c0_119, %c0_120] : memref<2x512x128xbf16, #tpu.memory_space<vmem>>, vector<1x512x128xbf16>
    %301 = vector.shape_cast %300 : vector<1x512x128xbf16> to vector<512x128xbf16>
    %cst_121 = arith.constant dense<0.000000e+00> : vector<16x128xf32>
    %302 = tpu.matmul %299, %301, %cst_121 {dimension_numbers = #tpu.dot_dimension_numbers<[1], [0], [0], [1], [0, 0, 1, 1], [], []>} : vector<16x512xbf16>, vector<512x128xbf16>, vector<16x128xf32> -> vector<16x128xf32>
    %c1_122 = arith.constant 1 : index
    %c0_123 = arith.constant 0 : index
    %c0_124 = arith.constant 0 : index
    %303 = vector.load %arg14[%c1_122, %c0_123, %c0_124] : memref<2x1x128xf32, #tpu.memory_space<vmem>>, vector<1x1x128xf32>
    %304 = vector.shape_cast %303 : vector<1x1x128xf32> to vector<1x128xf32>
    %305 = vector.broadcast %304 : vector<1x128xf32> to vector<16x128xf32>
    %306 = arith.addf %302, %305 : vector<16x128xf32>
    %307 = arith.addf %251, %306 : vector<16x128xf32>
    %c0_125 = arith.constant 0 : index
    %c0_126 = arith.constant 0 : index
    %308 = vector.load %arg15[%c0_125, %c0_126] : memref<1x128xf32, #tpu.memory_space<vmem>>, vector<1x128xf32>
    %c0_127 = arith.constant 0 : index
    %c0_128 = arith.constant 0 : index
    %309 = vector.load %arg16[%c0_127, %c0_128] : memref<1x128xf32, #tpu.memory_space<vmem>>, vector<1x128xf32>
    %cst_129 = arith.constant dense<0.000000e+00> : vector<16xf32>
    %310 = vector.multi_reduction <add>, %307, %cst_129 [1] : vector<16x128xf32> to vector<16xf32>
    %311 = vector.shape_cast %310 : vector<16xf32> to vector<16x1xf32>
    %cst_130 = arith.constant 1.280000e+02 : f32
    %312 = vector.broadcast %cst_130 : f32 to vector<16x1xf32>
    %313 = arith.divf %311, %312 : vector<16x1xf32>
    %314 = vector.broadcast %313 : vector<16x1xf32> to vector<16x128xf32>
    %315 = arith.subf %307, %314 : vector<16x128xf32>
    %316 = arith.mulf %315, %315 : vector<16x128xf32>
    %cst_131 = arith.constant dense<0.000000e+00> : vector<16xf32>
    %317 = vector.multi_reduction <add>, %316, %cst_131 [1] : vector<16x128xf32> to vector<16xf32>
    %318 = vector.shape_cast %317 : vector<16xf32> to vector<16x1xf32>
    %cst_132 = arith.constant 1.280000e+02 : f32
    %319 = vector.broadcast %cst_132 : f32 to vector<16x1xf32>
    %320 = arith.divf %318, %319 : vector<16x1xf32>
    %321 = vector.broadcast %313 : vector<16x1xf32> to vector<16x128xf32>
    %322 = arith.subf %307, %321 : vector<16x128xf32>
    %cst_133 = arith.constant 9.99999997E-7 : f32
    %323 = vector.broadcast %cst_133 : f32 to vector<16x1xf32>
    %324 = arith.addf %320, %323 : vector<16x1xf32>
    %325 = math.rsqrt %324 : vector<16x1xf32>
    %326 = vector.broadcast %325 : vector<16x1xf32> to vector<16x128xf32>
    %327 = arith.mulf %322, %326 : vector<16x128xf32>
    %328 = vector.broadcast %308 : vector<1x128xf32> to vector<16x128xf32>
    %329 = arith.mulf %327, %328 : vector<16x128xf32>
    %330 = vector.broadcast %309 : vector<1x128xf32> to vector<16x128xf32>
    %331 = arith.addf %329, %330 : vector<16x128xf32>
    %332 = vector.shape_cast %331 : vector<16x128xf32> to vector<2x8x128xf32>
    %c0_134 = arith.constant 0 : index
    %c0_135 = arith.constant 0 : index
    %c0_136 = arith.constant 0 : index
    %333 = vector.load %arg17[%c0_134, %c0_135, %c0_136] : memref<2x8x128xf32, #tpu.memory_space<vmem>>, vector<2x8x128xf32>
    tpu.vector_store %arg17[%c0_134, %c0_135, %c0_136], %332 {strides = array<i32>} : memref<2x8x128xf32, #tpu.memory_space<vmem>>, vector<2x8x128xf32>,
    return
  }
}

</mosaic_0001>

<llo_original>
// kernel: vit_encoder_forward.1
$region0: #{vit_encoder_forward.1}
  #allocation0 [shape = 'u32[]', space=smem, size = 0x4, offset = 0x4, fixed_abs, tag = 'smem constant byte address 0x4 - core index']
  #allocation1 [shape = 'u32[144,128]{1,0:T(1,128)}', space=vmem, size = 0x12000, scoped, tag = 'internal scratch']
  %s0 = inlined_call_operand.vmem [shape: bf16[2,8,256], index: 0, kind: input, shape index: {}]
  %s1 = inlined_call_operand.vmem [shape: bf16[256,128], index: 1, kind: input, shape index: {}]
  %s2 = inlined_call_operand.vmem [shape: f32[8,128], index: 2, kind: input, shape index: {}]
  %s3 = inlined_call_operand.vmem [shape: f32[2,1,128], index: 3, kind: input, shape index: {}]
  %s4 = inlined_call_operand.vmem [shape: f32[2,1,128], index: 4, kind: input, shape index: {}]
  %s5 = inlined_call_operand.hbm [shape: bf16[2,128,384], index: 5, kind: input, shape index: {}]
  %s6 = inlined_call_operand.vmem [shape: f32[2,1,384], index: 6, kind: input, shape index: {}]
  %s7 = inlined_call_operand.vmem [shape: bf16[2,128,128], index: 7, kind: input, shape index: {}]
  %s8 = inlined_call_operand.vmem [shape: f32[2,1,128], index: 8, kind: input, shape index: {}]
  %s9 = inlined_call_operand.vmem [shape: f32[2,1,128], index: 9, kind: input, shape index: {}]
  %s10 = inlined_call_operand.vmem [shape: f32[2,1,128], index: 10, kind: input, shape index: {}]
  %s11 = inlined_call_operand.vmem [shape: bf16[2,128,512], index: 11, kind: input, shape index: {}]
  %s12 = inlined_call_operand.vmem [shape: f32[2,1,512], index: 12, kind: input, shape index: {}]
  %s13 = inlined_call_operand.hbm [shape: bf16[2,512,128], index: 13, kind: input, shape index: {}]
  %s14 = inlined_call_operand.vmem [shape: f32[2,1,128], index: 14, kind: input, shape index: {}]
  %s15 = inlined_call_operand.vmem [shape: f32[1,128], index: 15, kind: input, shape index: {}]
  %s16 = inlined_call_operand.vmem [shape: f32[1,128], index: 16, kind: input, shape index: {}]
  %s17 = inlined_call_operand.vmem [shape: f32[2,8,128], index: 17, kind: output, shape index: {}]
  %s18 = sld [smem:[#allocation0]]
  $region86: #{vit_encoder_forward.1} parent=0
    _
  %s20 = ssub.s32 1, %s18
  %s21 = scalar_select 0, %s20, %s18
  $region1: #{vit_encoder_forward.1} parent=0
    #allocation2 [shape = 'u8[196608]{0}', space=vmem, size = 0x30000, scoped, tag = 'input window, operand 5, single buffered']
    #allocation3 [shape = 's32[1]{0}', space=sflag, size = 0x4, scoped, tag = 'scoped memory for vit_encoder_forward.1']
    #allocation4 [shape = 'u8[262144]{0}', space=vmem, size = 0x40000, scoped, tag = 'input window, operand 13, single buffered']
    #allocation5 [shape = 's32[1]{0}', space=sflag, size = 0x4, scoped, tag = 'scoped memory for vit_encoder_forward.1']
    %22 = vsyncpa [#allocation3], 0
    %23 = vsyncpa [#allocation5], 0
    // Predicated region
    $region2: #{vit_encoder_forward.1} parent=1 // pred_check
      _
    $region3: #{vit_encoder_forward.1} parent=1 // pred_check_branch
      %25 = sbr.rel (0) target = $region5
    $region4: #{vit_encoder_forward.1} parent=1 // pred_region
      _
    $region5: #{vit_encoder_forward.1} parent=1 // pred_fallthru
      _
    // Predicated region
    $region6: #{vit_encoder_forward.1} parent=1 // pred_check
      _
    $region7: #{vit_encoder_forward.1} parent=1 // pred_check_branch
      %27 = sbr.rel (0) target = $region9
    $region8: #{vit_encoder_forward.1} parent=1 // pred_region
      _
    $region9: #{vit_encoder_forward.1} parent=1 // pred_fallthru
      _
    // Predicated region
    $region10: #{vit_encoder_forward.1} parent=1 // pred_check
      _
    $region11: #{vit_encoder_forward.1} parent=1 // pred_check_branch
      %29 = sbr.rel (0) target = $region13
    $region12: #{vit_encoder_forward.1} parent=1 // pred_region
      _
    $region13: #{vit_encoder_forward.1} parent=1 // pred_fallthru
      _
    // Predicated region
    $region14: #{vit_encoder_forward.1} parent=1 // pred_check
      _
    $region15: #{vit_encoder_forward.1} parent=1 // pred_check_branch
      %31 = sbr.rel (0) target = $region17
    $region16: #{vit_encoder_forward.1} parent=1 // pred_region
      _
    $region17: #{vit_encoder_forward.1} parent=1 // pred_fallthru
      _
    // Predicated region
    $region18: #{vit_encoder_forward.1} parent=1 // pred_check
      _
    $region19: #{vit_encoder_forward.1} parent=1 // pred_check_branch
      %33 = sbr.rel (0) target = $region21
    $region20: #{vit_encoder_forward.1} parent=1 // pred_region
      _
    $region21: #{vit_encoder_forward.1} parent=1 // pred_fallthru
      _
    // Predicated region
    $region22: #{vit_encoder_forward.1} parent=1 // pred_check
      _
    $region23: #{vit_encoder_forward.1} parent=1 // pred_check_branch
      %35 = sbr.rel (0) target = $region25
    $region24: #{vit_encoder_forward.1} parent=1 // pred_region
      %s37 = ssub.s32 6144, 6144
      %38 = vsyncadd [#allocation3], %s37
      %s39 = sshll.u32 [#allocation2], 4
      %s40 = int_to_ptr.vmem [resolvable:$true] %s39
      %45 = dma.hbm_to_vmem [thread:$0]  %s5, 6144, %s40, [#allocation3], 192, 192, 12
    $region25: #{vit_encoder_forward.1} parent=1 // pred_fallthru
      _
    // Predicated region
    $region26: #{vit_encoder_forward.1} parent=1 // pred_check
      _
    $region27: #{vit_encoder_forward.1} parent=1 // pred_check_branch
      %47 = sbr.rel (0) target = $region29
    $region28: #{vit_encoder_forward.1} parent=1 // pred_region
      _
    $region29: #{vit_encoder_forward.1} parent=1 // pred_fallthru
      _
    // Predicated region
    $region30: #{vit_encoder_forward.1} parent=1 // pred_check
      _
    $region31: #{vit_encoder_forward.1} parent=1 // pred_check_branch
      %49 = sbr.rel (0) target = $region33
    $region32: #{vit_encoder_forward.1} parent=1 // pred_region
      _
    $region33: #{vit_encoder_forward.1} parent=1 // pred_fallthru
      _
    // Predicated region
    $region34: #{vit_encoder_forward.1} parent=1 // pred_check
      _
    $region35: #{vit_encoder_forward.1} parent=1 // pred_check_branch
      %51 = sbr.rel (0) target = $region37
    $region36: #{vit_encoder_forward.1} parent=1 // pred_region
      _
    $region37: #{vit_encoder_forward.1} parent=1 // pred_fallthru
      _
    // Predicated region
    $region38: #{vit_encoder_forward.1} parent=1 // pred_check
      _
    $region39: #{vit_encoder_forward.1} parent=1 // pred_check_branch
      %53 = sbr.rel (0) target = $region41
    $region40: #{vit_encoder_forward.1} parent=1 // pred_region
      _
    $region41: #{vit_encoder_forward.1} parent=1 // pred_fallthru
      _
    // Predicated region
    $region42: #{vit_encoder_forward.1} parent=1 // pred_check
      _
    $region43: #{vit_encoder_forward.1} parent=1 // pred_check_branch
      %55 = sbr.rel (0) target = $region45
    $region44: #{vit_encoder_forward.1} parent=1 // pred_region
      _
    $region45: #{vit_encoder_forward.1} parent=1 // pred_fallthru
      _
    // Predicated region
    $region46: #{vit_encoder_forward.1} parent=1 // pred_check
      _
    $region47: #{vit_encoder_forward.1} parent=1 // pred_check_branch
      %57 = sbr.rel (0) target = $region49
    $region48: #{vit_encoder_forward.1} parent=1 // pred_region
      _
    $region49: #{vit_encoder_forward.1} parent=1 // pred_fallthru
      _
    // Predicated region
    $region50: #{vit_encoder_forward.1} parent=1 // pred_check
      _
    $region51: #{vit_encoder_forward.1} parent=1 // pred_check_branch
      %59 = sbr.rel (0) target = $region53
    $region52: #{vit_encoder_forward.1} parent=1 // pred_region
      _
    $region53: #{vit_encoder_forward.1} parent=1 // pred_fallthru
      _
    // Predicated region
    $region54: #{vit_encoder_forward.1} parent=1 // pred_check
      _
    $region55: #{vit_encoder_forward.1} parent=1 // pred_check_branch
      %61 = sbr.rel (0) target = $region57
    $region56: #{vit_encoder_forward.1} parent=1 // pred_region
      %s63 = ssub.s32 8192, 8192
      %64 = vsyncadd [#allocation5], %s63
      %s65 = sshll.u32 [#allocation4], 4
      %s66 = int_to_ptr.vmem [resolvable:$true] %s65
      %71 = dma.hbm_to_vmem [thread:$0]  %s13, 8192, %s66, [#allocation5], 64, 64, 4
    $region57: #{vit_encoder_forward.1} parent=1 // pred_fallthru
      _
    // Predicated region
    $region58: #{vit_encoder_forward.1} parent=1 // pred_check
      _
    $region59: #{vit_encoder_forward.1} parent=1 // pred_check_branch
      %73 = sbr.rel (0) target = $region61
    $region60: #{vit_encoder_forward.1} parent=1 // pred_region
      _
    $region61: #{vit_encoder_forward.1} parent=1 // pred_fallthru
      _
    // Predicated region
    $region62: #{vit_encoder_forward.1} parent=1 // pred_check
      _
    $region63: #{vit_encoder_forward.1} parent=1 // pred_check_branch
      %75 = sbr.rel (0) target = $region65
    $region64: #{vit_encoder_forward.1} parent=1 // pred_region
      _
    $region65: #{vit_encoder_forward.1} parent=1 // pred_fallthru
      _
    // Predicated region
    $region66: #{vit_encoder_forward.1} parent=1 // pred_check
      _
    $region67: #{vit_encoder_forward.1} parent=1 // pred_check_branch
      %77 = sbr.rel (0) target = $region69
    $region68: #{vit_encoder_forward.1} parent=1 // pred_region
      _
    $region69: #{vit_encoder_forward.1} parent=1 // pred_fallthru
      _
    // Predicated region
    $region70: #{vit_encoder_forward.1} parent=1 // pred_check
      _
    $region71: #{vit_encoder_forward.1} parent=1 // pred_check_branch
      %79 = sbr.rel (0) target = $region73
    $region72: #{vit_encoder_forward.1} parent=1 // pred_region
      %80 = dma.done [#allocation3], 6144
    $region73: #{vit_encoder_forward.1} parent=1 // pred_fallthru
      _
    // Predicated region
    $region74: #{vit_encoder_forward.1} parent=1 // pred_check
      _
    $region75: #{vit_encoder_forward.1} parent=1 // pred_check_branch
      %82 = sbr.rel (0) target = $region77
    $region76: #{vit_encoder_forward.1} parent=1 // pred_region
      %83 = dma.done [#allocation5], 8192
    $region77: #{vit_encoder_forward.1} parent=1 // pred_fallthru
      _
    %v85 = vld [vmem:[%s0] sm:$0xff]
    %v86 = vld [vmem:[%s0 + $0x8] sm:$0xff]
    %v87 = vld [vmem:[%s1] sm:$0xf]
    %v88 = vld [vmem:[%s1 + $0x4] sm:$0xf]
    %v89 = vld [vmem:[%s1 + $0x8] sm:$0xf]
    %v90 = vld [vmem:[%s1 + $0xc] sm:$0xf]
    %v91 = vld [vmem:[%s1 + $0x10] sm:$0xf]
    %v92 = vld [vmem:[%s1 + $0x14] sm:$0xf]
    %v93 = vld [vmem:[%s1 + $0x18] sm:$0xf]
    %v94 = vld [vmem:[%s1 + $0x1c] sm:$0xf]
    %v95 = vld [vmem:[%s1 + $0x20] sm:$0xf]
    %v96 = vld [vmem:[%s1 + $0x24] sm:$0xf]
    %v97 = vld [vmem:[%s1 + $0x28] sm:$0xf]
    %v98 = vld [vmem:[%s1 + $0x2c] sm:$0xf]
    %v99 = vld [vmem:[%s1 + $0x30] sm:$0xf]
    %v100 = vld [vmem:[%s1 + $0x34] sm:$0xf]
    %v101 = vld [vmem:[%s1 + $0x38] sm:$0xf]
    %v102 = vld [vmem:[%s1 + $0x3c] sm:$0xf]
    %v103 = vld [vmem:[%s1 + $0x40] sm:$0xf]
    %v104 = vld [vmem:[%s1 + $0x44] sm:$0xf]
    %v105 = vld [vmem:[%s1 + $0x48] sm:$0xf]
    %v106 = vld [vmem:[%s1 + $0x4c] sm:$0xf]
    %v107 = vld [vmem:[%s1 + $0x50] sm:$0xf]
    %v108 = vld [vmem:[%s1 + $0x54] sm:$0xf]
    %v109 = vld [vmem:[%s1 + $0x58] sm:$0xf]
    %v110 = vld [vmem:[%s1 + $0x5c] sm:$0xf]
    %v111 = vld [vmem:[%s1 + $0x60] sm:$0xf]
    %v112 = vld [vmem:[%s1 + $0x64] sm:$0xf]
    %v113 = vld [vmem:[%s1 + $0x68] sm:$0xf]
    %v114 = vld [vmem:[%s1 + $0x6c] sm:$0xf]
    %v115 = vld [vmem:[%s1 + $0x70] sm:$0xf]
    %v116 = vld [vmem:[%s1 + $0x74] sm:$0xf]
    %v117 = vld [vmem:[%s1 + $0x78] sm:$0xf]
    %v118 = vld [vmem:[%s1 + $0x7c] sm:$0xf]
    %v121 = vunpack.c.l.b16 %v85
    %v122 = vunpack.c.h.b16 %v85
    %v123 = vunpack.c.l.b16 %v86
    %v124 = vunpack.c.h.b16 %v86
    %v125 = vpack.c.b16 %v123, %v121
    %v126 = vpack.c.b16 %v124, %v122
    %v161 = vunpack.c.l.b16 %v87
    %v162 = vunpack.c.l.b16 %v88
    %v163 = vunpack.c.l.b16 %v89
    %v164 = vunpack.c.l.b16 %v90
    %v165 = vunpack.c.l.b16 %v91
    %v166 = vunpack.c.l.b16 %v92
    %v167 = vunpack.c.l.b16 %v93
    %v168 = vunpack.c.l.b16 %v94
    %v169 = vunpack.c.l.b16 %v95
    %v170 = vunpack.c.l.b16 %v96
    %v171 = vunpack.c.l.b16 %v97
    %v172 = vunpack.c.l.b16 %v98
    %v173 = vunpack.c.l.b16 %v99
    %v174 = vunpack.c.l.b16 %v100
    %v175 = vunpack.c.l.b16 %v101
    %v176 = vunpack.c.l.b16 %v102
    %v177 = vunpack.c.l.b16 %v103
    %v178 = vunpack.c.l.b16 %v104
    %v179 = vunpack.c.l.b16 %v105
    %v180 = vunpack.c.l.b16 %v106
    %v181 = vunpack.c.l.b16 %v107
    %v182 = vunpack.c.l.b16 %v108
    %v183 = vunpack.c.l.b16 %v109
    %v184 = vunpack.c.l.b16 %v110
    %v185 = vunpack.c.l.b16 %v111
    %v186 = vunpack.c.l.b16 %v112
    %v187 = vunpack.c.l.b16 %v113
    %v188 = vunpack.c.l.b16 %v114
    %v189 = vunpack.c.l.b16 %v115
    %v190 = vunpack.c.l.b16 %v116
    %v191 = vunpack.c.l.b16 %v117
    %v192 = vunpack.c.l.b16 %v118
    %v193 = vpack.c.b16 %v162, %v161
    %v194 = vpack.c.b16 %v164, %v163
    %v195 = vpack.c.b16 %v166, %v165
    %v196 = vpack.c.b16 %v168, %v167
    %v197 = vpack.c.b16 %v170, %v169
    %v198 = vpack.c.b16 %v172, %v171
    %v199 = vpack.c.b16 %v174, %v173
    %v200 = vpack.c.b16 %v176, %v175
    %v201 = vpack.c.b16 %v178, %v177
    %v202 = vpack.c.b16 %v180, %v179
    %v203 = vpack.c.b16 %v182, %v181
    %v204 = vpack.c.b16 %v184, %v183
    %v205 = vpack.c.b16 %v186, %v185
    %v206 = vpack.c.b16 %v188, %v187
    %v207 = vpack.c.b16 %v190, %v189
    %v208 = vpack.c.b16 %v192, %v191
    %225 = vmatprep.subr.bf16.mxu0 0
    %226 = vmatpush1.bf16.msra.mxu0 %v200
    %227 = vmatprep.subr.bf16.mxu0 0
    %228 = vmatpush1.bf16.msra.mxu0 %v199
    %229 = vmatprep.subr.bf16.mxu0 0
    %230 = vmatpush1.bf16.msra.mxu0 %v198
    %231 = vmatprep.subr.bf16.mxu0 0
    %232 = vmatpush1.bf16.msra.mxu0 %v197
    %233 = vmatprep.subr.bf16.mxu0 0
    %234 = vmatpush1.bf16.msra.mxu0 %v196
    %235 = vmatprep.subr.bf16.mxu0 0
    %236 = vmatpush1.bf16.msra.mxu0 %v195
    %237 = vmatprep.subr.bf16.mxu0 0
    %238 = vmatpush1.bf16.msra.mxu0 %v194
    %239 = vmatprep.subr.bf16.mxu0 0
    %240 = vmatpush1.bf16.msra.mxu0 %v193
    %241 = vmatprep.subr.bf16.mxu0 0
    %242 = vmatpush2.bf16.msra.mxu0 %v208
    %243 = vmatprep.subr.bf16.mxu0 0
    %244 = vmatpush2.bf16.msra.mxu0 %v207
    %245 = vmatprep.subr.bf16.mxu0 0
    %246 = vmatpush2.bf16.msra.mxu0 %v206
    %247 = vmatprep.subr.bf16.mxu0 0
    %248 = vmatpush2.bf16.msra.mxu0 %v205
    %249 = vmatprep.subr.bf16.mxu0 0
    %250 = vmatpush2.bf16.msra.mxu0 %v204
    %251 = vmatprep.subr.bf16.mxu0 0
    %252 = vmatpush2.bf16.msra.mxu0 %v203
    %253 = vmatprep.subr.bf16.mxu0 0
    %254 = vmatpush2.bf16.msra.mxu0 %v202
    %255 = vmatprep.subr.bf16.mxu0 0
    %256 = vmatpush2.bf16.msra.mxu0 %v201
    %257 = vmatprep.mubr.bf16.mxu0 %v126
    %258 = vmatmul.mubr.bf16.gmra.mxu0 %v125
    %v259 = vpop.f32.mrf.mxu0
    %v260 = vadd.f32 0.0, %v259
    %v261 = vpop.f32.mrf.mxu0
    %v262 = vpop.f32.mrf.mxu0
    %v263 = vadd.f32 0.0, %v262
    %v264 = vpop.f32.mrf.mxu0
    %265 = vdwg.mxu0
    %v266 = vld [vmem:[%s2] sm:$0xff]
    %v267 = vadd.f32 %v260, %v266
    %v268 = vadd.f32 %v263, %v266
    %v269 = vlaneseq
    %v270 = vand.u32 %v269, 127
    %vm271 = vcmp.lt.s32.totalorder %v270, 5
    %v272 = vsel %vm271, 0.0, -1e+09
    %v273 = vld [vmem:[%s3] sm:$0x1]
    %v274 = vld [vmem:[%s4] sm:$0x1]
    %275 = vadd.xlane.f32.xlu0 %v267
    %v276 = vpop.xlane.xlu0 %275
    %277 = vadd.xlane.f32.xlu0 %v268
    %v278 = vpop.xlane.xlu0 %277
    %v279 = vrcp.pop 128.0
    %v280 = vmul.f32 %v276, %v279
    %v281 = vmul.f32 %v278, %v279
    %v282 = vsub.f32 %v267, %v280
    %v283 = vsub.f32 %v268, %v281
    %v284 = vmul.f32 %v282, %v282
    %v285 = vmul.f32 %v283, %v283
    %286 = vadd.xlane.f32.xlu0 %v284
    %v287 = vpop.xlane.xlu0 %286
    %288 = vadd.xlane.f32.xlu0 %v285
    %v289 = vpop.xlane.xlu0 %288
    %v290 = vmul.f32 %v287, %v279
    %v291 = vmul.f32 %v289, %v279
    %v292 = vadd.f32 %v290, 1e-06
    %v293 = vadd.f32 %v291, 1e-06
    %v294 = vrsqrt.pop %v292
    %v295 = vrsqrt.pop %v293
    %v296 = vmul.f32 %v282, %v294
    %v297 = vmul.f32 %v283, %v295
    %v299 = vlaneseq
    %v300 = vshrl.u32 %v299, 7
    %v301 = vsub.s32 0, %v300
    %v302 = vrot.slane %v273, %v301
    %v304 = vmul.f32 %v296, %v302
    %v305 = vmul.f32 %v297, %v302
    %v307 = vlaneseq
    %v308 = vshrl.u32 %v307, 7
    %v309 = vsub.s32 0, %v308
    %v310 = vrot.slane %v274, %v309
    %v312 = vadd.f32 %v304, %v310
    %v313 = vadd.f32 %v305, %v310
    %v314 = vpack.c.bf16 %v313, %v312
    %v315 = vld [vmem:[#allocation2] sm:$0xff]
    %v316 = vld [vmem:[#allocation2 + $0x8] sm:$0xf]
    %v317 = vld [vmem:[#allocation2 + $0xc] sm:$0xff]
    %v318 = vld [vmem:[#allocation2 + $0x14] sm:$0xf]
    %v319 = vld [vmem:[#allocation2 + $0x18] sm:$0xff]
    %v320 = vld [vmem:[#allocation2 + $0x20] sm:$0xf]
    %v321 = vld [vmem:[#allocation2 + $0x24] sm:$0xff]
    %v322 = vld [vmem:[#allocation2 + $0x2c] sm:$0xf]
    %v323 = vld [vmem:[#allocation2 + $0x30] sm:$0xff]
    %v324 = vld [vmem:[#allocation2 + $0x38] sm:$0xf]
    %v325 = vld [vmem:[#allocation2 + $0x3c] sm:$0xff]
    %v326 = vld [vmem:[#allocation2 + $0x44] sm:$0xf]
    %v327 = vld [vmem:[#allocation2 + $0x48] sm:$0xff]
    %v328 = vld [vmem:[#allocation2 + $0x50] sm:$0xf]
    %v329 = vld [vmem:[#allocation2 + $0x54] sm:$0xff]
    %v330 = vld [vmem:[#allocation2 + $0x5c] sm:$0xf]
    %v331 = vld [vmem:[#allocation2 + $0x60] sm:$0xff]
    %v332 = vld [vmem:[#allocation2 + $0x68] sm:$0xf]
    %v333 = vld [vmem:[#allocation2 + $0x6c] sm:$0xff]
    %v334 = vld [vmem:[#allocation2 + $0x74] sm:$0xf]
    %v335 = vld [vmem:[#allocation2 + $0x78] sm:$0xff]
    %v336 = vld [vmem:[#allocation2 + $0x80] sm:$0xf]
    %v337 = vld [vmem:[#allocation2 + $0x84] sm:$0xff]
    %v338 = vld [vmem:[#allocation2 + $0x8c] sm:$0xf]
    %v339 = vld [vmem:[#allocation2 + $0x90] sm:$0xff]
    %v340 = vld [vmem:[#allocation2 + $0x98] sm:$0xf]
    %v341 = vld [vmem:[#allocation2 + $0x9c] sm:$0xff]
    %v342 = vld [vmem:[#allocation2 + $0xa4] sm:$0xf]
    %v343 = vld [vmem:[#allocation2 + $0xa8] sm:$0xff]
    %v344 = vld [vmem:[#allocation2 + $0xb0] sm:$0xf]
    %v345 = vld [vmem:[#allocation2 + $0xb4] sm:$0xff]
    %v346 = vld [vmem:[#allocation2 + $0xbc] sm:$0xf]
    %v347 = vld [vmem:[%s6] sm:$0x7]
    %v349 = vlaneseq
    %v350 = vshrl.u32 %v349, 7
    %v351 = vsub.s32 0, %v350
    %v352 = vrot.slane %v347, %v351
    %v353 = vlaneseq
    %v354 = vshrl.u32 %v353, 7
    %v355 = vsub.s32 1, %v354
    %v356 = vrot.slane %v347, %v355
    %v357 = vlaneseq
    %v358 = vshrl.u32 %v357, 7
    %v359 = vsub.s32 2, %v358
    %v360 = vrot.slane %v347, %v359
    %v396 = vunpack.c.l.b16 %v315
    %v397 = vunpack.c.h.b16 %v315
    %v398 = vunpack.c.l.b16 %v316
    %v399 = vunpack.c.l.b16 %v317
    %v400 = vunpack.c.h.b16 %v317
    %v401 = vunpack.c.l.b16 %v318
    %v402 = vunpack.c.l.b16 %v319
    %v403 = vunpack.c.h.b16 %v319
    %v404 = vunpack.c.l.b16 %v320
    %v405 = vunpack.c.l.b16 %v321
    %v406 = vunpack.c.h.b16 %v321
    %v407 = vunpack.c.l.b16 %v322
    %v408 = vunpack.c.l.b16 %v323
    %v409 = vunpack.c.h.b16 %v323
    %v410 = vunpack.c.l.b16 %v324
    %v411 = vunpack.c.l.b16 %v325
    %v412 = vunpack.c.h.b16 %v325
    %v413 = vunpack.c.l.b16 %v326
    %v414 = vunpack.c.l.b16 %v327
    %v415 = vunpack.c.h.b16 %v327
    %v416 = vunpack.c.l.b16 %v328
    %v417 = vunpack.c.l.b16 %v329
    %v418 = vunpack.c.h.b16 %v329
    %v419 = vunpack.c.l.b16 %v330
    %v420 = vunpack.c.l.b16 %v331
    %v421 = vunpack.c.h.b16 %v331
    %v422 = vunpack.c.l.b16 %v332
    %v423 = vunpack.c.l.b16 %v333
    %v424 = vunpack.c.h.b16 %v333
    %v425 = vunpack.c.l.b16 %v334
    %v426 = vunpack.c.l.b16 %v335
    %v427 = vunpack.c.h.b16 %v335
    %v428 = vunpack.c.l.b16 %v336
    %v429 = vunpack.c.l.b16 %v337
    %v430 = vunpack.c.h.b16 %v337
    %v431 = vunpack.c.l.b16 %v338
    %v432 = vunpack.c.l.b16 %v339
    %v433 = vunpack.c.h.b16 %v339
    %v434 = vunpack.c.l.b16 %v340
    %v435 = vunpack.c.l.b16 %v341
    %v436 = vunpack.c.h.b16 %v341
    %v437 = vunpack.c.l.b16 %v342
    %v438 = vunpack.c.l.b16 %v343
    %v439 = vunpack.c.h.b16 %v343
    %v440 = vunpack.c.l.b16 %v344
    %v441 = vunpack.c.l.b16 %v345
    %v442 = vunpack.c.h.b16 %v345
    %v443 = vunpack.c.l.b16 %v346
    %v444 = vpack.c.b16 %v399, %v396
    %v445 = vpack.c.b16 %v400, %v397
    %v446 = vpack.c.b16 %v401, %v398
    %v447 = vpack.c.b16 %v405, %v402
    %v448 = vpack.c.b16 %v406, %v403
    %v449 = vpack.c.b16 %v407, %v404
    %v450 = vpack.c.b16 %v411, %v408
    %v451 = vpack.c.b16 %v412, %v409
    %v452 = vpack.c.b16 %v413, %v410
    %v453 = vpack.c.b16 %v417, %v414
    %v454 = vpack.c.b16 %v418, %v415
    %v455 = vpack.c.b16 %v419, %v416
    %v456 = vpack.c.b16 %v423, %v420
    %v457 = vpack.c.b16 %v424, %v421
    %v458 = vpack.c.b16 %v425, %v422
    %v459 = vpack.c.b16 %v429, %v426
    %v460 = vpack.c.b16 %v430, %v427
    %v461 = vpack.c.b16 %v431, %v428
    %v462 = vpack.c.b16 %v435, %v432
    %v463 = vpack.c.b16 %v436, %v433
    %v464 = vpack.c.b16 %v437, %v434
    %v465 = vpack.c.b16 %v441, %v438
    %v466 = vpack.c.b16 %v442, %v439
    %v467 = vpack.c.b16 %v443, %v440
    %492 = vmatprep.subr.bf16.mxu0 %v466
    %493 = vmatpush1.bf16.msra.mxu0 %v465
    %494 = vmatprep.subr.bf16.mxu0 %v463
    %495 = vmatpush1.bf16.msra.mxu0 %v462
    %496 = vmatprep.subr.bf16.mxu0 %v460
    %497 = vmatpush1.bf16.msra.mxu0 %v459
    %498 = vmatprep.subr.bf16.mxu0 %v457
    %499 = vmatpush1.bf16.msra.mxu0 %v456
    %500 = vmatprep.subr.bf16.mxu0 %v454
    %501 = vmatpush1.bf16.msra.mxu0 %v453
    %502 = vmatprep.subr.bf16.mxu0 %v451
    %503 = vmatpush1.bf16.msra.mxu0 %v450
    %504 = vmatprep.subr.bf16.mxu0 %v448
    %505 = vmatpush1.bf16.msra.mxu0 %v447
    %506 = vmatprep.subr.bf16.mxu0 %v445
    %507 = vmatpush1.bf16.msra.mxu0 %v444
    %508 = vmatprep.subr.bf16.mxu0 0
    %509 = vmatpush2.bf16.msra.mxu0 0
    %510 = vmatprep.subr.bf16.mxu0 0
    %511 = vmatpush2.bf16.msra.mxu0 0
    %512 = vmatprep.subr.bf16.mxu0 0
    %513 = vmatpush2.bf16.msra.mxu0 0
    %514 = vmatprep.subr.bf16.mxu0 0
    %515 = vmatpush2.bf16.msra.mxu0 0
    %516 = vmatprep.subr.bf16.mxu0 0
    %517 = vmatpush2.bf16.msra.mxu0 0
    %518 = vmatprep.subr.bf16.mxu0 0
    %519 = vmatpush2.bf16.msra.mxu0 0
    %520 = vmatprep.subr.bf16.mxu0 0
    %521 = vmatpush2.bf16.msra.mxu0 0
    %522 = vmatprep.subr.bf16.mxu0 0
    %523 = vmatpush2.bf16.msra.mxu0 0
    %524 = vmatprep.mubr.bf16.mxu0 0
    %525 = vmatmul.mubr.bf16.gmra.mxu0 %v314
    %v526 = vpop.f32.mrf.mxu0
    %v527 = vadd.f32 %v352, %v526
    %v528 = vpop.f32.mrf.mxu0
    %v529 = vadd.f32 %v356, %v528
    %v530 = vpop.f32.mrf.mxu0
    %v531 = vadd.f32 %v352, %v530
    %v532 = vpop.f32.mrf.mxu0
    %v533 = vadd.f32 %v356, %v532
    %534 = vdwg.mxu0
    %535 = vmatprep.subr.bf16.mxu0 0
    %536 = vmatpush1.bf16.msra.mxu0 %v467
    %537 = vmatprep.subr.bf16.mxu0 0
    %538 = vmatpush1.bf16.msra.mxu0 %v464
    %539 = vmatprep.subr.bf16.mxu0 0
    %540 = vmatpush1.bf16.msra.mxu0 %v461
    %541 = vmatprep.subr.bf16.mxu0 0
    %542 = vmatpush1.bf16.msra.mxu0 %v458
    %543 = vmatprep.subr.bf16.mxu0 0
    %544 = vmatpush1.bf16.msra.mxu0 %v455
    %545 = vmatprep.subr.bf16.mxu0 0
    %546 = vmatpush1.bf16.msra.mxu0 %v452
    %547 = vmatprep.subr.bf16.mxu0 0
    %548 = vmatpush1.bf16.msra.mxu0 %v449
    %549 = vmatprep.subr.bf16.mxu0 0
    %550 = vmatpush1.bf16.msra.mxu0 %v446
    %551 = vmatprep.subr.bf16.mxu0 0
    %552 = vmatpush2.bf16.msra.mxu0 0
    %553 = vmatprep.subr.bf16.mxu0 0
    %554 = vmatpush2.bf16.msra.mxu0 0
    %555 = vmatprep.subr.bf16.mxu0 0
    %556 = vmatpush2.bf16.msra.mxu0 0
    %557 = vmatprep.subr.bf16.mxu0 0
    %558 = vmatpush2.bf16.msra.mxu0 0
    %559 = vmatprep.subr.bf16.mxu0 0
    %560 = vmatpush2.bf16.msra.mxu0 0
    %561 = vmatprep.subr.bf16.mxu0 0
    %562 = vmatpush2.bf16.msra.mxu0 0
    %563 = vmatprep.subr.bf16.mxu0 0
    %564 = vmatpush2.bf16.msra.mxu0 0
    %565 = vmatprep.subr.bf16.mxu0 0
    %566 = vmatpush2.bf16.msra.mxu0 0
    %567 = vmatprep.mubr.bf16.mxu0 0
    %568 = vmatmul.mubr.bf16.gmra.mxu0 %v314
    %v569 = vpop.f32.mrf.mxu0
    %v570 = vadd.f32 %v360, %v569
    %v571 = vpop.f32.mrf.mxu0
    %v572 = vpop.f32.mrf.mxu0
    %v573 = vadd.f32 %v360, %v572
    %v574 = vpop.f32.mrf.mxu0
    %575 = vdwg.mxu0
    %v576 = vpack.c.bf16 %v531, %v527
    %v577 = vpack.c.bf16 %v533, %v529
    %v578 = vpack.c.bf16 %v573, %v570
    %v580 = vunpack.c.l.b16 %v576
    %v581 = vunpack.c.h.b16 %v576
    %v582 = vpack.c.b16 %v580, %v580
    %v583 = vpack.c.b16 %v581, %v581
    %584 = vrot.lane.b32.xlu0 %v582, 96
    %v585 = vpop.permute.xlu0 %584
    %586 = vrot.lane.b32.xlu0 %v583, 96
    %v587 = vpop.permute.xlu0 %586
    %588 = vrot.lane.b32.xlu0 %v582, 64
    %v589 = vpop.permute.xlu0 %588
    %590 = vrot.lane.b32.xlu0 %v583, 64
    %v591 = vpop.permute.xlu0 %590
    %592 = vrot.lane.b32.xlu0 %v582, 32
    %v593 = vpop.permute.xlu0 %592
    %594 = vrot.lane.b32.xlu0 %v583, 32
    %v595 = vpop.permute.xlu0 %594
    %v597 = vunpack.c.l.b16 %v577
    %v598 = vunpack.c.h.b16 %v577
    %v599 = vpack.c.b16 %v597, %v597
    %v600 = vpack.c.b16 %v598, %v598
    %601 = vrot.lane.b32.xlu0 %v599, 96
    %v602 = vpop.permute.xlu0 %601
    %603 = vrot.lane.b32.xlu0 %v600, 96
    %v604 = vpop.permute.xlu0 %603
    %605 = vrot.lane.b32.xlu0 %v599, 64
    %v606 = vpop.permute.xlu0 %605
    %607 = vrot.lane.b32.xlu0 %v600, 64
    %v608 = vpop.permute.xlu0 %607
    %609 = vrot.lane.b32.xlu0 %v599, 32
    %v610 = vpop.permute.xlu0 %609
    %611 = vrot.lane.b32.xlu0 %v600, 32
    %v612 = vpop.permute.xlu0 %611
    %v614 = vunpack.c.l.b16 %v578
    %v615 = vunpack.c.h.b16 %v578
    %v616 = vpack.c.b16 %v614, %v614
    %v617 = vpack.c.b16 %v615, %v615
    %618 = vrot.lane.b32.xlu0 %v616, 96
    %v619 = vpop.permute.xlu0 %618
    %620 = vrot.lane.b32.xlu0 %v617, 96
    %v621 = vpop.permute.xlu0 %620
    %622 = vrot.lane.b32.xlu0 %v616, 64
    %v623 = vpop.permute.xlu0 %622
    %624 = vrot.lane.b32.xlu0 %v617, 64
    %v625 = vpop.permute.xlu0 %624
    %626 = vrot.lane.b32.xlu0 %v616, 32
    %v627 = vpop.permute.xlu0 %626
    %628 = vrot.lane.b32.xlu0 %v617, 32
    %v629 = vpop.permute.xlu0 %628
    %vm630 = vcmask 261120
    %v632 = vsel %vm630, %v582, 0
    %v635 = vsel %vm630, %v599, 0
    %637 = vmatprep.subr.bf16.mxu0 0
    %638 = vmatpush1.bf16.xpose.msra.mxu0 0
    %639 = vmatprep.subr.bf16.mxu0 0
    %640 = vmatpush1.bf16.xpose.msra.mxu0 0
    %641 = vmatprep.subr.bf16.mxu0 0
    %642 = vmatpush1.bf16.xpose.msra.mxu0 0
    %643 = vmatprep.subr.bf16.mxu0 0
    %644 = vmatpush1.bf16.xpose.msra.mxu0 0
    %645 = vmatprep.subr.bf16.mxu0 0
    %646 = vmatpush1.bf16.xpose.msra.mxu0 0
    %647 = vmatprep.subr.bf16.mxu0 0
    %648 = vmatpush1.bf16.xpose.msra.mxu0 0
    %649 = vmatprep.subr.bf16.mxu0 0
    %650 = vmatpush1.bf16.xpose.msra.mxu0 0
    %651 = vmatprep.subr.bf16.mxu0 0
    %652 = vmatpush1.bf16.xpose.msra.mxu0 %v635
    %653 = vmatprep.subr.bf16.mxu0 0
    %654 = vmatpush2.bf16.xpose.msra.mxu0 0
    %655 = vmatprep.subr.bf16.mxu0 0
    %656 = vmatpush2.bf16.xpose.msra.mxu0 0
    %657 = vmatprep.subr.bf16.mxu0 0
    %658 = vmatpush2.bf16.xpose.msra.mxu0 0
    %659 = vmatprep.subr.bf16.mxu0 0
    %660 = vmatpush2.bf16.xpose.msra.mxu0 0
    %661 = vmatprep.subr.bf16.mxu0 0
    %662 = vmatpush2.bf16.xpose.msra.mxu0 0
    %663 = vmatprep.subr.bf16.mxu0 0
    %664 = vmatpush2.bf16.xpose.msra.mxu0 0
    %665 = vmatprep.subr.bf16.mxu0 0
    %666 = vmatpush2.bf16.xpose.msra.mxu0 0
    %667 = vmatprep.subr.bf16.mxu0 0
    %668 = vmatpush2.bf16.xpose.msra.mxu0 0
    %669 = vmatprep.mubr.bf16.mxu0 0
    %670 = vmatmul.mubr.bf16.gmra.mxu0 %v632
    %v671 = vpop.f32.mrf.mxu0
    %v672 = vadd.f32 0.0, %v671
    %v673 = vpop.f32.mrf.mxu0
    %v674 = vpop.f32.mrf.mxu0
    %v675 = vpop.f32.mrf.mxu0
    %676 = vdwg.mxu0
    %v678 = vsel %vm630, %v583, 0
    %v681 = vsel %vm630, %v600, 0
    %683 = vmatprep.subr.bf16.mxu0 0
    %684 = vmatpush1.bf16.xpose.msra.mxu0 0
    %685 = vmatprep.subr.bf16.mxu0 0
    %686 = vmatpush1.bf16.xpose.msra.mxu0 0
    %687 = vmatprep.subr.bf16.mxu0 0
    %688 = vmatpush1.bf16.xpose.msra.mxu0 0
    %689 = vmatprep.subr.bf16.mxu0 0
    %690 = vmatpush1.bf16.xpose.msra.mxu0 0
    %691 = vmatprep.subr.bf16.mxu0 0
    %692 = vmatpush1.bf16.xpose.msra.mxu0 0
    %693 = vmatprep.subr.bf16.mxu0 0
    %694 = vmatpush1.bf16.xpose.msra.mxu0 0
    %695 = vmatprep.subr.bf16.mxu0 0
    %696 = vmatpush1.bf16.xpose.msra.mxu0 0
    %697 = vmatprep.subr.bf16.mxu0 0
    %698 = vmatpush1.bf16.xpose.msra.mxu0 %v681
    %699 = vmatprep.subr.bf16.mxu0 0
    %700 = vmatpush2.bf16.xpose.msra.mxu0 0
    %701 = vmatprep.subr.bf16.mxu0 0
    %702 = vmatpush2.bf16.xpose.msra.mxu0 0
    %703 = vmatprep.subr.bf16.mxu0 0
    %704 = vmatpush2.bf16.xpose.msra.mxu0 0
    %705 = vmatprep.subr.bf16.mxu0 0
    %706 = vmatpush2.bf16.xpose.msra.mxu0 0
    %707 = vmatprep.subr.bf16.mxu0 0
    %708 = vmatpush2.bf16.xpose.msra.mxu0 0
    %709 = vmatprep.subr.bf16.mxu0 0
    %710 = vmatpush2.bf16.xpose.msra.mxu0 0
    %711 = vmatprep.subr.bf16.mxu0 0
    %712 = vmatpush2.bf16.xpose.msra.mxu0 0
    %713 = vmatprep.subr.bf16.mxu0 0
    %714 = vmatpush2.bf16.xpose.msra.mxu0 0
    %715 = vmatprep.mubr.bf16.mxu0 0
    %716 = vmatmul.mubr.bf16.gmra.mxu0 %v678
    %v717 = vpop.f32.mrf.mxu0
    %v718 = vadd.f32 0.0, %v717
    %v719 = vpop.f32.mrf.mxu0
    %v720 = vpop.f32.mrf.mxu0
    %v721 = vpop.f32.mrf.mxu0
    %722 = vdwg.mxu0
    %v724 = vsel %vm630, %v585, 0
    %v727 = vsel %vm630, %v602, 0
    %729 = vmatprep.subr.bf16.mxu0 0
    %730 = vmatpush1.bf16.xpose.msra.mxu0 0
    %731 = vmatprep.subr.bf16.mxu0 0
    %732 = vmatpush1.bf16.xpose.msra.mxu0 0
    %733 = vmatprep.subr.bf16.mxu0 0
    %734 = vmatpush1.bf16.xpose.msra.mxu0 0
    %735 = vmatprep.subr.bf16.mxu0 0
    %736 = vmatpush1.bf16.xpose.msra.mxu0 0
    %737 = vmatprep.subr.bf16.mxu0 0
    %738 = vmatpush1.bf16.xpose.msra.mxu0 0
    %739 = vmatprep.subr.bf16.mxu0 0
    %740 = vmatpush1.bf16.xpose.msra.mxu0 0
    %741 = vmatprep.subr.bf16.mxu0 0
    %742 = vmatpush1.bf16.xpose.msra.mxu0 0
    %743 = vmatprep.subr.bf16.mxu0 0
    %744 = vmatpush1.bf16.xpose.msra.mxu0 %v727
    %745 = vmatprep.subr.bf16.mxu0 0
    %746 = vmatpush2.bf16.xpose.msra.mxu0 0
    %747 = vmatprep.subr.bf16.mxu0 0
    %748 = vmatpush2.bf16.xpose.msra.mxu0 0
    %749 = vmatprep.subr.bf16.mxu0 0
    %750 = vmatpush2.bf16.xpose.msra.mxu0 0
    %751 = vmatprep.subr.bf16.mxu0 0
    %752 = vmatpush2.bf16.xpose.msra.mxu0 0
    %753 = vmatprep.subr.bf16.mxu0 0
    %754 = vmatpush2.bf16.xpose.msra.mxu0 0
    %755 = vmatprep.subr.bf16.mxu0 0
    %756 = vmatpush2.bf16.xpose.msra.mxu0 0
    %757 = vmatprep.subr.bf16.mxu0 0
    %758 = vmatpush2.bf16.xpose.msra.mxu0 0
    %759 = vmatprep.subr.bf16.mxu0 0
    %760 = vmatpush2.bf16.xpose.msra.mxu0 0
    %761 = vmatprep.mubr.bf16.mxu0 0
    %762 = vmatmul.mubr.bf16.gmra.mxu0 %v724
    %v763 = vpop.f32.mrf.mxu0
    %v764 = vadd.f32 0.0, %v763
    %v765 = vpop.f32.mrf.mxu0
    %v766 = vpop.f32.mrf.mxu0
    %v767 = vpop.f32.mrf.mxu0
    %768 = vdwg.mxu0
    %v770 = vsel %vm630, %v587, 0
    %v773 = vsel %vm630, %v604, 0
    %775 = vmatprep.subr.bf16.mxu0 0
    %776 = vmatpush1.bf16.xpose.msra.mxu0 0
    %777 = vmatprep.subr.bf16.mxu0 0
    %778 = vmatpush1.bf16.xpose.msra.mxu0 0
    %779 = vmatprep.subr.bf16.mxu0 0
    %780 = vmatpush1.bf16.xpose.msra.mxu0 0
    %781 = vmatprep.subr.bf16.mxu0 0
    %782 = vmatpush1.bf16.xpose.msra.mxu0 0
    %783 = vmatprep.subr.bf16.mxu0 0
    %784 = vmatpush1.bf16.xpose.msra.mxu0 0
    %785 = vmatprep.subr.bf16.mxu0 0
    %786 = vmatpush1.bf16.xpose.msra.mxu0 0
    %787 = vmatprep.subr.bf16.mxu0 0
    %788 = vmatpush1.bf16.xpose.msra.mxu0 0
    %789 = vmatprep.subr.bf16.mxu0 0
    %790 = vmatpush1.bf16.xpose.msra.mxu0 %v773
    %791 = vmatprep.subr.bf16.mxu0 0
    %792 = vmatpush2.bf16.xpose.msra.mxu0 0
    %793 = vmatprep.subr.bf16.mxu0 0
    %794 = vmatpush2.bf16.xpose.msra.mxu0 0
    %795 = vmatprep.subr.bf16.mxu0 0
    %796 = vmatpush2.bf16.xpose.msra.mxu0 0
    %797 = vmatprep.subr.bf16.mxu0 0
    %798 = vmatpush2.bf16.xpose.msra.mxu0 0
    %799 = vmatprep.subr.bf16.mxu0 0
    %800 = vmatpush2.bf16.xpose.msra.mxu0 0
    %801 = vmatprep.subr.bf16.mxu0 0
    %802 = vmatpush2.bf16.xpose.msra.mxu0 0
    %803 = vmatprep.subr.bf16.mxu0 0
    %804 = vmatpush2.bf16.xpose.msra.mxu0 0
    %805 = vmatprep.subr.bf16.mxu0 0
    %806 = vmatpush2.bf16.xpose.msra.mxu0 0
    %807 = vmatprep.mubr.bf16.mxu0 0
    %808 = vmatmul.mubr.bf16.gmra.mxu0 %v770
    %v809 = vpop.f32.mrf.mxu0
    %v810 = vadd.f32 0.0, %v809
    %v811 = vpop.f32.mrf.mxu0
    %v812 = vpop.f32.mrf.mxu0
    %v813 = vpop.f32.mrf.mxu0
    %814 = vdwg.mxu0
    %v816 = vsel %vm630, %v589, 0
    %v819 = vsel %vm630, %v606, 0
    %821 = vmatprep.subr.bf16.mxu0 0
    %822 = vmatpush1.bf16.xpose.msra.mxu0 0
    %823 = vmatprep.subr.bf16.mxu0 0
    %824 = vmatpush1.bf16.xpose.msra.mxu0 0
    %825 = vmatprep.subr.bf16.mxu0 0
    %826 = vmatpush1.bf16.xpose.msra.mxu0 0
    %827 = vmatprep.subr.bf16.mxu0 0
    %828 = vmatpush1.bf16.xpose.msra.mxu0 0
    %829 = vmatprep.subr.bf16.mxu0 0
    %830 = vmatpush1.bf16.xpose.msra.mxu0 0
    %831 = vmatprep.subr.bf16.mxu0 0
    %832 = vmatpush1.bf16.xpose.msra.mxu0 0
    %833 = vmatprep.subr.bf16.mxu0 0
    %834 = vmatpush1.bf16.xpose.msra.mxu0 0
    %835 = vmatprep.subr.bf16.mxu0 0
    %836 = vmatpush1.bf16.xpose.msra.mxu0 %v819
    %837 = vmatprep.subr.bf16.mxu0 0
    %838 = vmatpush2.bf16.xpose.msra.mxu0 0
    %839 = vmatprep.subr.bf16.mxu0 0
    %840 = vmatpush2.bf16.xpose.msra.mxu0 0
    %841 = vmatprep.subr.bf16.mxu0 0
    %842 = vmatpush2.bf16.xpose.msra.mxu0 0
    %843 = vmatprep.subr.bf16.mxu0 0
    %844 = vmatpush2.bf16.xpose.msra.mxu0 0
    %845 = vmatprep.subr.bf16.mxu0 0
    %846 = vmatpush2.bf16.xpose.msra.mxu0 0
    %847 = vmatprep.subr.bf16.mxu0 0
    %848 = vmatpush2.bf16.xpose.msra.mxu0 0
    %849 = vmatprep.subr.bf16.mxu0 0
    %850 = vmatpush2.bf16.xpose.msra.mxu0 0
    %851 = vmatprep.subr.bf16.mxu0 0
    %852 = vmatpush2.bf16.xpose.msra.mxu0 0
    %853 = vmatprep.mubr.bf16.mxu0 0
    %854 = vmatmul.mubr.bf16.gmra.mxu0 %v816
    %v855 = vpop.f32.mrf.mxu0
    %v856 = vadd.f32 0.0, %v855
    %v857 = vpop.f32.mrf.mxu0
    %v858 = vpop.f32.mrf.mxu0
    %v859 = vpop.f32.mrf.mxu0
    %860 = vdwg.mxu0
    %v862 = vsel %vm630, %v591, 0
    %v865 = vsel %vm630, %v608, 0
    %867 = vmatprep.subr.bf16.mxu0 0
    %868 = vmatpush1.bf16.xpose.msra.mxu0 0
    %869 = vmatprep.subr.bf16.mxu0 0
    %870 = vmatpush1.bf16.xpose.msra.mxu0 0
    %871 = vmatprep.subr.bf16.mxu0 0
    %872 = vmatpush1.bf16.xpose.msra.mxu0 0
    %873 = vmatprep.subr.bf16.mxu0 0
    %874 = vmatpush1.bf16.xpose.msra.mxu0 0
    %875 = vmatprep.subr.bf16.mxu0 0
    %876 = vmatpush1.bf16.xpose.msra.mxu0 0
    %877 = vmatprep.subr.bf16.mxu0 0
    %878 = vmatpush1.bf16.xpose.msra.mxu0 0
    %879 = vmatprep.subr.bf16.mxu0 0
    %880 = vmatpush1.bf16.xpose.msra.mxu0 0
    %881 = vmatprep.subr.bf16.mxu0 0
    %882 = vmatpush1.bf16.xpose.msra.mxu0 %v865
    %883 = vmatprep.subr.bf16.mxu0 0
    %884 = vmatpush2.bf16.xpose.msra.mxu0 0
    %885 = vmatprep.subr.bf16.mxu0 0
    %886 = vmatpush2.bf16.xpose.msra.mxu0 0
    %887 = vmatprep.subr.bf16.mxu0 0
    %888 = vmatpush2.bf16.xpose.msra.mxu0 0
    %889 = vmatprep.subr.bf16.mxu0 0
    %890 = vmatpush2.bf16.xpose.msra.mxu0 0
    %891 = vmatprep.subr.bf16.mxu0 0
    %892 = vmatpush2.bf16.xpose.msra.mxu0 0
    %893 = vmatprep.subr.bf16.mxu0 0
    %894 = vmatpush2.bf16.xpose.msra.mxu0 0
    %895 = vmatprep.subr.bf16.mxu0 0
    %896 = vmatpush2.bf16.xpose.msra.mxu0 0
    %897 = vmatprep.subr.bf16.mxu0 0
    %898 = vmatpush2.bf16.xpose.msra.mxu0 0
    %899 = vmatprep.mubr.bf16.mxu0 0
    %900 = vmatmul.mubr.bf16.gmra.mxu0 %v862
    %v901 = vpop.f32.mrf.mxu0
    %v902 = vadd.f32 0.0, %v901
    %v903 = vpop.f32.mrf.mxu0
    %v904 = vpop.f32.mrf.mxu0
    %v905 = vpop.f32.mrf.mxu0
    %906 = vdwg.mxu0
    %v908 = vsel %vm630, %v593, 0
    %v911 = vsel %vm630, %v610, 0
    %913 = vmatprep.subr.bf16.mxu0 0
    %914 = vmatpush1.bf16.xpose.msra.mxu0 0
    %915 = vmatprep.subr.bf16.mxu0 0
    %916 = vmatpush1.bf16.xpose.msra.mxu0 0
    %917 = vmatprep.subr.bf16.mxu0 0
    %918 = vmatpush1.bf16.xpose.msra.mxu0 0
    %919 = vmatprep.subr.bf16.mxu0 0
    %920 = vmatpush1.bf16.xpose.msra.mxu0 0
    %921 = vmatprep.subr.bf16.mxu0 0
    %922 = vmatpush1.bf16.xpose.msra.mxu0 0
    %923 = vmatprep.subr.bf16.mxu0 0
    %924 = vmatpush1.bf16.xpose.msra.mxu0 0
    %925 = vmatprep.subr.bf16.mxu0 0
    %926 = vmatpush1.bf16.xpose.msra.mxu0 0
    %927 = vmatprep.subr.bf16.mxu0 0
    %928 = vmatpush1.bf16.xpose.msra.mxu0 %v911
    %929 = vmatprep.subr.bf16.mxu0 0
    %930 = vmatpush2.bf16.xpose.msra.mxu0 0
    %931 = vmatprep.subr.bf16.mxu0 0
    %932 = vmatpush2.bf16.xpose.msra.mxu0 0
    %933 = vmatprep.subr.bf16.mxu0 0
    %934 = vmatpush2.bf16.xpose.msra.mxu0 0
    %935 = vmatprep.subr.bf16.mxu0 0
    %936 = vmatpush2.bf16.xpose.msra.mxu0 0
    %937 = vmatprep.subr.bf16.mxu0 0
    %938 = vmatpush2.bf16.xpose.msra.mxu0 0
    %939 = vmatprep.subr.bf16.mxu0 0
    %940 = vmatpush2.bf16.xpose.msra.mxu0 0
    %941 = vmatprep.subr.bf16.mxu0 0
    %942 = vmatpush2.bf16.xpose.msra.mxu0 0
    %943 = vmatprep.subr.bf16.mxu0 0
    %944 = vmatpush2.bf16.xpose.msra.mxu0 0
    %945 = vmatprep.mubr.bf16.mxu0 0
    %946 = vmatmul.mubr.bf16.gmra.mxu0 %v908
    %v947 = vpop.f32.mrf.mxu0
    %v948 = vadd.f32 0.0, %v947
    %v949 = vpop.f32.mrf.mxu0
    %v950 = vpop.f32.mrf.mxu0
    %v951 = vpop.f32.mrf.mxu0
    %952 = vdwg.mxu0
    %v954 = vsel %vm630, %v595, 0
    %v957 = vsel %vm630, %v612, 0
    %959 = vmatprep.subr.bf16.mxu0 0
    %960 = vmatpush1.bf16.xpose.msra.mxu0 0
    %961 = vmatprep.subr.bf16.mxu0 0
    %962 = vmatpush1.bf16.xpose.msra.mxu0 0
    %963 = vmatprep.subr.bf16.mxu0 0
    %964 = vmatpush1.bf16.xpose.msra.mxu0 0
    %965 = vmatprep.subr.bf16.mxu0 0
    %966 = vmatpush1.bf16.xpose.msra.mxu0 0
    %967 = vmatprep.subr.bf16.mxu0 0
    %968 = vmatpush1.bf16.xpose.msra.mxu0 0
    %969 = vmatprep.subr.bf16.mxu0 0
    %970 = vmatpush1.bf16.xpose.msra.mxu0 0
    %971 = vmatprep.subr.bf16.mxu0 0
    %972 = vmatpush1.bf16.xpose.msra.mxu0 0
    %973 = vmatprep.subr.bf16.mxu0 0
    %974 = vmatpush1.bf16.xpose.msra.mxu0 %v957
    %975 = vmatprep.subr.bf16.mxu0 0
    %976 = vmatpush2.bf16.xpose.msra.mxu0 0
    %977 = vmatprep.subr.bf16.mxu0 0
    %978 = vmatpush2.bf16.xpose.msra.mxu0 0
    %979 = vmatprep.subr.bf16.mxu0 0
    %980 = vmatpush2.bf16.xpose.msra.mxu0 0
    %981 = vmatprep.subr.bf16.mxu0 0
    %982 = vmatpush2.bf16.xpose.msra.mxu0 0
    %983 = vmatprep.subr.bf16.mxu0 0
    %984 = vmatpush2.bf16.xpose.msra.mxu0 0
    %985 = vmatprep.subr.bf16.mxu0 0
    %986 = vmatpush2.bf16.xpose.msra.mxu0 0
    %987 = vmatprep.subr.bf16.mxu0 0
    %988 = vmatpush2.bf16.xpose.msra.mxu0 0
    %989 = vmatprep.subr.bf16.mxu0 0
    %990 = vmatpush2.bf16.xpose.msra.mxu0 0
    %991 = vmatprep.mubr.bf16.mxu0 0
    %992 = vmatmul.mubr.bf16.gmra.mxu0 %v954
    %v993 = vpop.f32.mrf.mxu0
    %v994 = vadd.f32 0.0, %v993
    %v995 = vpop.f32.mrf.mxu0
    %v996 = vpop.f32.mrf.mxu0
    %v997 = vpop.f32.mrf.mxu0
    %998 = vdwg.mxu0
    %v999 = vmul.f32 %v672, 0.17677669
    %v1000 = vmul.f32 %v718, 0.17677669
    %v1001 = vmul.f32 %v764, 0.17677669
    %v1002 = vmul.f32 %v810, 0.17677669
    %v1003 = vmul.f32 %v856, 0.17677669
    %v1004 = vmul.f32 %v902, 0.17677669
    %v1005 = vmul.f32 %v948, 0.17677669
    %v1006 = vmul.f32 %v994, 0.17677669
    %v1007 = vadd.f32 %v999, %v272
    %v1008 = vadd.f32 %v1000, %v272
    %v1009 = vadd.f32 %v1001, %v272
    %v1010 = vadd.f32 %v1002, %v272
    %v1011 = vadd.f32 %v1003, %v272
    %v1012 = vadd.f32 %v1004, %v272
    %v1013 = vadd.f32 %v1005, %v272
    %v1014 = vadd.f32 %v1006, %v272
    %vm1015 = vcmask 64512
    %v1016 = vsel %vm1015, %v1007, -inf
    %1017 = vmax.xlane.f32.xlu0 %v1016
    %v1018 = vpop.xlane.xlu0 %1017
    %v1019 = vsel %vm1015, %v1008, -inf
    %1020 = vmax.xlane.f32.xlu0 %v1019
    %v1021 = vpop.xlane.xlu0 %1020
    %v1022 = vsel %vm1015, %v1009, -inf
    %1023 = vmax.xlane.f32.xlu0 %v1022
    %v1024 = vpop.xlane.xlu0 %1023
    %v1025 = vsel %vm1015, %v1010, -inf
    %1026 = vmax.xlane.f32.xlu0 %v1025
    %v1027 = vpop.xlane.xlu0 %1026
    %v1028 = vsel %vm1015, %v1011, -inf
    %1029 = vmax.xlane.f32.xlu0 %v1028
    %v1030 = vpop.xlane.xlu0 %1029
    %v1031 = vsel %vm1015, %v1012, -inf
    %1032 = vmax.xlane.f32.xlu0 %v1031
    %v1033 = vpop.xlane.xlu0 %1032
    %v1034 = vsel %vm1015, %v1013, -inf
    %1035 = vmax.xlane.f32.xlu0 %v1034
    %v1036 = vpop.xlane.xlu0 %1035
    %v1037 = vsel %vm1015, %v1014, -inf
    %1038 = vmax.xlane.f32.xlu0 %v1037
    %v1039 = vpop.xlane.xlu0 %1038
    %v1040 = vsub.f32 %v1007, %v1018
    %v1041 = vsub.f32 %v1008, %v1021
    %v1042 = vsub.f32 %v1009, %v1024
    %v1043 = vsub.f32 %v1010, %v1027
    %v1044 = vsub.f32 %v1011, %v1030
    %v1045 = vsub.f32 %v1012, %v1033
    %v1046 = vsub.f32 %v1013, %v1036
    %v1047 = vsub.f32 %v1014, %v1039
    %v1048 = vmul.f32 %v1040, 1.442695
    %v1049 = vpow.pop %v1048
    %v1050 = vmul.f32 %v1041, 1.442695
    %v1051 = vpow.pop %v1050
    %v1052 = vmul.f32 %v1042, 1.442695
    %v1053 = vpow.pop %v1052
    %v1054 = vmul.f32 %v1043, 1.442695
    %v1055 = vpow.pop %v1054
    %v1056 = vmul.f32 %v1044, 1.442695
    %v1057 = vpow.pop %v1056
    %v1058 = vmul.f32 %v1045, 1.442695
    %v1059 = vpow.pop %v1058
    %v1060 = vmul.f32 %v1046, 1.442695
    %v1061 = vpow.pop %v1060
    %v1062 = vmul.f32 %v1047, 1.442695
    %v1063 = vpow.pop %v1062
    %v1064 = vsel %vm1015, %v1049, 0.0
    %1065 = vadd.xlane.f32.xlu0 %v1064
    %v1066 = vpop.xlane.xlu0 %1065
    %v1067 = vsel %vm1015, %v1051, 0.0
    %1068 = vadd.xlane.f32.xlu0 %v1067
    %v1069 = vpop.xlane.xlu0 %1068
    %v1070 = vsel %vm1015, %v1053, 0.0
    %1071 = vadd.xlane.f32.xlu0 %v1070
    %v1072 = vpop.xlane.xlu0 %1071
    %v1073 = vsel %vm1015, %v1055, 0.0
    %1074 = vadd.xlane.f32.xlu0 %v1073
    %v1075 = vpop.xlane.xlu0 %1074
    %v1076 = vsel %vm1015, %v1057, 0.0
    %1077 = vadd.xlane.f32.xlu0 %v1076
    %v1078 = vpop.xlane.xlu0 %1077
    %v1079 = vsel %vm1015, %v1059, 0.0
    %1080 = vadd.xlane.f32.xlu0 %v1079
    %v1081 = vpop.xlane.xlu0 %1080
    %v1082 = vsel %vm1015, %v1061, 0.0
    %1083 = vadd.xlane.f32.xlu0 %v1082
    %v1084 = vpop.xlane.xlu0 %1083
    %v1085 = vsel %vm1015, %v1063, 0.0
    %1086 = vadd.xlane.f32.xlu0 %v1085
    %v1087 = vpop.xlane.xlu0 %1086
    %v1088 = vrcp.pop %v1066
    %v1089 = vrcp.pop %v1069
    %v1090 = vrcp.pop %v1072
    %v1091 = vrcp.pop %v1075
    %v1092 = vrcp.pop %v1078
    %v1093 = vrcp.pop %v1081
    %v1094 = vrcp.pop %v1084
    %v1095 = vrcp.pop %v1087
    %v1096 = vmul.f32 %v1049, %v1088
    %v1097 = vmul.f32 %v1051, %v1089
    %v1098 = vmul.f32 %v1053, %v1090
    %v1099 = vmul.f32 %v1055, %v1091
    %v1100 = vmul.f32 %v1057, %v1092
    %v1101 = vmul.f32 %v1059, %v1093
    %v1102 = vmul.f32 %v1061, %v1094
    %v1103 = vmul.f32 %v1063, %v1095
    %v1104 = vpack.c.bf16 %v1096, %v1096
    %v1105 = vpack.c.bf16 %v1097, %v1097
    %v1106 = vpack.c.bf16 %v1098, %v1098
    %v1107 = vpack.c.bf16 %v1099, %v1099
    %v1108 = vpack.c.bf16 %v1100, %v1100
    %v1109 = vpack.c.bf16 %v1101, %v1101
    %v1110 = vpack.c.bf16 %v1102, %v1102
    %v1111 = vpack.c.bf16 %v1103, %v1103
    %v1113 = vsel %vm1015, %v1104, 0
    %vm1115 = vcmask 1043456
    %v1117 = vsel %vm1115, %v616, 0
    %1119 = vmatprep.subr.bf16.mxu0 0
    %1120 = vmatpush1.bf16.msra.mxu0 0
    %1121 = vmatprep.subr.bf16.mxu0 0
    %1122 = vmatpush1.bf16.msra.mxu0 0
    %1123 = vmatprep.subr.bf16.mxu0 0
    %1124 = vmatpush1.bf16.msra.mxu0 0
    %1125 = vmatprep.subr.bf16.mxu0 0
    %1126 = vmatpush1.bf16.msra.mxu0 0
    %1127 = vmatprep.subr.bf16.mxu0 0
    %1128 = vmatpush1.bf16.msra.mxu0 0
    %1129 = vmatprep.subr.bf16.mxu0 0
    %1130 = vmatpush1.bf16.msra.mxu0 0
    %1131 = vmatprep.subr.bf16.mxu0 0
    %1132 = vmatpush1.bf16.msra.mxu0 0
    %1133 = vmatprep.subr.bf16.mxu0 0
    %1134 = vmatpush1.bf16.msra.mxu0 %v1117
    %1135 = vmatprep.subr.bf16.mxu0 0
    %1136 = vmatpush2.bf16.msra.mxu0 0
    %1137 = vmatprep.subr.bf16.mxu0 0
    %1138 = vmatpush2.bf16.msra.mxu0 0
    %1139 = vmatprep.subr.bf16.mxu0 0
    %1140 = vmatpush2.bf16.msra.mxu0 0
    %1141 = vmatprep.subr.bf16.mxu0 0
    %1142 = vmatpush2.bf16.msra.mxu0 0
    %1143 = vmatprep.subr.bf16.mxu0 0
    %1144 = vmatpush2.bf16.msra.mxu0 0
    %1145 = vmatprep.subr.bf16.mxu0 0
    %1146 = vmatpush2.bf16.msra.mxu0 0
    %1147 = vmatprep.subr.bf16.mxu0 0
    %1148 = vmatpush2.bf16.msra.mxu0 0
    %1149 = vmatprep.subr.bf16.mxu0 0
    %1150 = vmatpush2.bf16.msra.mxu0 0
    %1151 = vmatprep.mubr.bf16.mxu0 0
    %1152 = vmatmul.mubr.bf16.gmra.mxu0 %v1113
    %v1153 = vpop.f32.mrf.mxu0
    %v1154 = vadd.f32 0.0, %v1153
    %v1155 = vpop.f32.mrf.mxu0
    %v1156 = vpop.f32.mrf.mxu0
    %v1157 = vpop.f32.mrf.mxu0
    %1158 = vdwg.mxu0
    %v1160 = vsel %vm1015, %v1105, 0
    %v1163 = vsel %vm1115, %v617, 0
    %1165 = vmatprep.subr.bf16.mxu0 0
    %1166 = vmatpush1.bf16.msra.mxu0 0
    %1167 = vmatprep.subr.bf16.mxu0 0
    %1168 = vmatpush1.bf16.msra.mxu0 0
    %1169 = vmatprep.subr.bf16.mxu0 0
    %1170 = vmatpush1.bf16.msra.mxu0 0
    %1171 = vmatprep.subr.bf16.mxu0 0
    %1172 = vmatpush1.bf16.msra.mxu0 0
    %1173 = vmatprep.subr.bf16.mxu0 0
    %1174 = vmatpush1.bf16.msra.mxu0 0
    %1175 = vmatprep.subr.bf16.mxu0 0
    %1176 = vmatpush1.bf16.msra.mxu0 0
    %1177 = vmatprep.subr.bf16.mxu0 0
    %1178 = vmatpush1.bf16.msra.mxu0 0
    %1179 = vmatprep.subr.bf16.mxu0 0
    %1180 = vmatpush1.bf16.msra.mxu0 %v1163
    %1181 = vmatprep.subr.bf16.mxu0 0
    %1182 = vmatpush2.bf16.msra.mxu0 0
    %1183 = vmatprep.subr.bf16.mxu0 0
    %1184 = vmatpush2.bf16.msra.mxu0 0
    %1185 = vmatprep.subr.bf16.mxu0 0
    %1186 = vmatpush2.bf16.msra.mxu0 0
    %1187 = vmatprep.subr.bf16.mxu0 0
    %1188 = vmatpush2.bf16.msra.mxu0 0
    %1189 = vmatprep.subr.bf16.mxu0 0
    %1190 = vmatpush2.bf16.msra.mxu0 0
    %1191 = vmatprep.subr.bf16.mxu0 0
    %1192 = vmatpush2.bf16.msra.mxu0 0
    %1193 = vmatprep.subr.bf16.mxu0 0
    %1194 = vmatpush2.bf16.msra.mxu0 0
    %1195 = vmatprep.subr.bf16.mxu0 0
    %1196 = vmatpush2.bf16.msra.mxu0 0
    %1197 = vmatprep.mubr.bf16.mxu0 0
    %1198 = vmatmul.mubr.bf16.gmra.mxu0 %v1160
    %v1199 = vpop.f32.mrf.mxu0
    %v1200 = vadd.f32 0.0, %v1199
    %v1201 = vpop.f32.mrf.mxu0
    %v1202 = vpop.f32.mrf.mxu0
    %v1203 = vpop.f32.mrf.mxu0
    %1204 = vdwg.mxu0
    %v1206 = vsel %vm1015, %v1106, 0
    %v1209 = vsel %vm1115, %v619, 0
    %1211 = vmatprep.subr.bf16.mxu0 0
    %1212 = vmatpush1.bf16.msra.mxu0 0
    %1213 = vmatprep.subr.bf16.mxu0 0
    %1214 = vmatpush1.bf16.msra.mxu0 0
    %1215 = vmatprep.subr.bf16.mxu0 0
    %1216 = vmatpush1.bf16.msra.mxu0 0
    %1217 = vmatprep.subr.bf16.mxu0 0
    %1218 = vmatpush1.bf16.msra.mxu0 0
    %1219 = vmatprep.subr.bf16.mxu0 0
    %1220 = vmatpush1.bf16.msra.mxu0 0
    %1221 = vmatprep.subr.bf16.mxu0 0
    %1222 = vmatpush1.bf16.msra.mxu0 0
    %1223 = vmatprep.subr.bf16.mxu0 0
    %1224 = vmatpush1.bf16.msra.mxu0 0
    %1225 = vmatprep.subr.bf16.mxu0 0
    %1226 = vmatpush1.bf16.msra.mxu0 %v1209
    %1227 = vmatprep.subr.bf16.mxu0 0
    %1228 = vmatpush2.bf16.msra.mxu0 0
    %1229 = vmatprep.subr.bf16.mxu0 0
    %1230 = vmatpush2.bf16.msra.mxu0 0
    %1231 = vmatprep.subr.bf16.mxu0 0
    %1232 = vmatpush2.bf16.msra.mxu0 0
    %1233 = vmatprep.subr.bf16.mxu0 0
    %1234 = vmatpush2.bf16.msra.mxu0 0
    %1235 = vmatprep.subr.bf16.mxu0 0
    %1236 = vmatpush2.bf16.msra.mxu0 0
    %1237 = vmatprep.subr.bf16.mxu0 0
    %1238 = vmatpush2.bf16.msra.mxu0 0
    %1239 = vmatprep.subr.bf16.mxu0 0
    %1240 = vmatpush2.bf16.msra.mxu0 0
    %1241 = vmatprep.subr.bf16.mxu0 0
    %1242 = vmatpush2.bf16.msra.mxu0 0
    %1243 = vmatprep.mubr.bf16.mxu0 0
    %1244 = vmatmul.mubr.bf16.gmra.mxu0 %v1206
    %v1245 = vpop.f32.mrf.mxu0
    %v1246 = vadd.f32 0.0, %v1245
    %v1247 = vpop.f32.mrf.mxu0
    %v1248 = vpop.f32.mrf.mxu0
    %v1249 = vpop.f32.mrf.mxu0
    %1250 = vdwg.mxu0
    %v1252 = vsel %vm1015, %v1107, 0
    %v1255 = vsel %vm1115, %v621, 0
    %1257 = vmatprep.subr.bf16.mxu0 0
    %1258 = vmatpush1.bf16.msra.mxu0 0
    %1259 = vmatprep.subr.bf16.mxu0 0
    %1260 = vmatpush1.bf16.msra.mxu0 0
    %1261 = vmatprep.subr.bf16.mxu0 0
    %1262 = vmatpush1.bf16.msra.mxu0 0
    %1263 = vmatprep.subr.bf16.mxu0 0
    %1264 = vmatpush1.bf16.msra.mxu0 0
    %1265 = vmatprep.subr.bf16.mxu0 0
    %1266 = vmatpush1.bf16.msra.mxu0 0
    %1267 = vmatprep.subr.bf16.mxu0 0
    %1268 = vmatpush1.bf16.msra.mxu0 0
    %1269 = vmatprep.subr.bf16.mxu0 0
    %1270 = vmatpush1.bf16.msra.mxu0 0
    %1271 = vmatprep.subr.bf16.mxu0 0
    %1272 = vmatpush1.bf16.msra.mxu0 %v1255
    %1273 = vmatprep.subr.bf16.mxu0 0
    %1274 = vmatpush2.bf16.msra.mxu0 0
    %1275 = vmatprep.subr.bf16.mxu0 0
    %1276 = vmatpush2.bf16.msra.mxu0 0
    %1277 = vmatprep.subr.bf16.mxu0 0
    %1278 = vmatpush2.bf16.msra.mxu0 0
    %1279 = vmatprep.subr.bf16.mxu0 0
    %1280 = vmatpush2.bf16.msra.mxu0 0
    %1281 = vmatprep.subr.bf16.mxu0 0
    %1282 = vmatpush2.bf16.msra.mxu0 0
    %1283 = vmatprep.subr.bf16.mxu0 0
    %1284 = vmatpush2.bf16.msra.mxu0 0
    %1285 = vmatprep.subr.bf16.mxu0 0
    %1286 = vmatpush2.bf16.msra.mxu0 0
    %1287 = vmatprep.subr.bf16.mxu0 0
    %1288 = vmatpush2.bf16.msra.mxu0 0
    %1289 = vmatprep.mubr.bf16.mxu0 0
    %1290 = vmatmul.mubr.bf16.gmra.mxu0 %v1252
    %v1291 = vpop.f32.mrf.mxu0
    %v1292 = vadd.f32 0.0, %v1291
    %v1293 = vpop.f32.mrf.mxu0
    %v1294 = vpop.f32.mrf.mxu0
    %v1295 = vpop.f32.mrf.mxu0
    %1296 = vdwg.mxu0
    %v1298 = vsel %vm1015, %v1108, 0
    %v1301 = vsel %vm1115, %v623, 0
    %1303 = vmatprep.subr.bf16.mxu0 0
    %1304 = vmatpush1.bf16.msra.mxu0 0
    %1305 = vmatprep.subr.bf16.mxu0 0
    %1306 = vmatpush1.bf16.msra.mxu0 0
    %1307 = vmatprep.subr.bf16.mxu0 0
    %1308 = vmatpush1.bf16.msra.mxu0 0
    %1309 = vmatprep.subr.bf16.mxu0 0
    %1310 = vmatpush1.bf16.msra.mxu0 0
    %1311 = vmatprep.subr.bf16.mxu0 0
    %1312 = vmatpush1.bf16.msra.mxu0 0
    %1313 = vmatprep.subr.bf16.mxu0 0
    %1314 = vmatpush1.bf16.msra.mxu0 0
    %1315 = vmatprep.subr.bf16.mxu0 0
    %1316 = vmatpush1.bf16.msra.mxu0 0
    %1317 = vmatprep.subr.bf16.mxu0 0
    %1318 = vmatpush1.bf16.msra.mxu0 %v1301
    %1319 = vmatprep.subr.bf16.mxu0 0
    %1320 = vmatpush2.bf16.msra.mxu0 0
    %1321 = vmatprep.subr.bf16.mxu0 0
    %1322 = vmatpush2.bf16.msra.mxu0 0
    %1323 = vmatprep.subr.bf16.mxu0 0
    %1324 = vmatpush2.bf16.msra.mxu0 0
    %1325 = vmatprep.subr.bf16.mxu0 0
    %1326 = vmatpush2.bf16.msra.mxu0 0
    %1327 = vmatprep.subr.bf16.mxu0 0
    %1328 = vmatpush2.bf16.msra.mxu0 0
    %1329 = vmatprep.subr.bf16.mxu0 0
    %1330 = vmatpush2.bf16.msra.mxu0 0
    %1331 = vmatprep.subr.bf16.mxu0 0
    %1332 = vmatpush2.bf16.msra.mxu0 0
    %1333 = vmatprep.subr.bf16.mxu0 0
    %1334 = vmatpush2.bf16.msra.mxu0 0
    %1335 = vmatprep.mubr.bf16.mxu0 0
    %1336 = vmatmul.mubr.bf16.gmra.mxu0 %v1298
    %v1337 = vpop.f32.mrf.mxu0
    %v1338 = vadd.f32 0.0, %v1337
    %v1339 = vpop.f32.mrf.mxu0
    %v1340 = vpop.f32.mrf.mxu0
    %v1341 = vpop.f32.mrf.mxu0
    %1342 = vdwg.mxu0
    %v1344 = vsel %vm1015, %v1109, 0
    %v1347 = vsel %vm1115, %v625, 0
    %1349 = vmatprep.subr.bf16.mxu0 0
    %1350 = vmatpush1.bf16.msra.mxu0 0
    %1351 = vmatprep.subr.bf16.mxu0 0
    %1352 = vmatpush1.bf16.msra.mxu0 0
    %1353 = vmatprep.subr.bf16.mxu0 0
    %1354 = vmatpush1.bf16.msra.mxu0 0
    %1355 = vmatprep.subr.bf16.mxu0 0
    %1356 = vmatpush1.bf16.msra.mxu0 0
    %1357 = vmatprep.subr.bf16.mxu0 0
    %1358 = vmatpush1.bf16.msra.mxu0 0
    %1359 = vmatprep.subr.bf16.mxu0 0
    %1360 = vmatpush1.bf16.msra.mxu0 0
    %1361 = vmatprep.subr.bf16.mxu0 0
    %1362 = vmatpush1.bf16.msra.mxu0 0
    %1363 = vmatprep.subr.bf16.mxu0 0
    %1364 = vmatpush1.bf16.msra.mxu0 %v1347
    %1365 = vmatprep.subr.bf16.mxu0 0
    %1366 = vmatpush2.bf16.msra.mxu0 0
    %1367 = vmatprep.subr.bf16.mxu0 0
    %1368 = vmatpush2.bf16.msra.mxu0 0
    %1369 = vmatprep.subr.bf16.mxu0 0
    %1370 = vmatpush2.bf16.msra.mxu0 0
    %1371 = vmatprep.subr.bf16.mxu0 0
    %1372 = vmatpush2.bf16.msra.mxu0 0
    %1373 = vmatprep.subr.bf16.mxu0 0
    %1374 = vmatpush2.bf16.msra.mxu0 0
    %1375 = vmatprep.subr.bf16.mxu0 0
    %1376 = vmatpush2.bf16.msra.mxu0 0
    %1377 = vmatprep.subr.bf16.mxu0 0
    %1378 = vmatpush2.bf16.msra.mxu0 0
    %1379 = vmatprep.subr.bf16.mxu0 0
    %1380 = vmatpush2.bf16.msra.mxu0 0
    %1381 = vmatprep.mubr.bf16.mxu0 0
    %1382 = vmatmul.mubr.bf16.gmra.mxu0 %v1344
    %v1383 = vpop.f32.mrf.mxu0
    %v1384 = vadd.f32 0.0, %v1383
    %v1385 = vpop.f32.mrf.mxu0
    %v1386 = vpop.f32.mrf.mxu0
    %v1387 = vpop.f32.mrf.mxu0
    %1388 = vdwg.mxu0
    %v1390 = vsel %vm1015, %v1110, 0
    %v1393 = vsel %vm1115, %v627, 0
    %1395 = vmatprep.subr.bf16.mxu0 0
    %1396 = vmatpush1.bf16.msra.mxu0 0
    %1397 = vmatprep.subr.bf16.mxu0 0
    %1398 = vmatpush1.bf16.msra.mxu0 0
    %1399 = vmatprep.subr.bf16.mxu0 0
    %1400 = vmatpush1.bf16.msra.mxu0 0
    %1401 = vmatprep.subr.bf16.mxu0 0
    %1402 = vmatpush1.bf16.msra.mxu0 0
    %1403 = vmatprep.subr.bf16.mxu0 0
    %1404 = vmatpush1.bf16.msra.mxu0 0
    %1405 = vmatprep.subr.bf16.mxu0 0
    %1406 = vmatpush1.bf16.msra.mxu0 0
    %1407 = vmatprep.subr.bf16.mxu0 0
    %1408 = vmatpush1.bf16.msra.mxu0 0
    %1409 = vmatprep.subr.bf16.mxu0 0
    %1410 = vmatpush1.bf16.msra.mxu0 %v1393
    %1411 = vmatprep.subr.bf16.mxu0 0
    %1412 = vmatpush2.bf16.msra.mxu0 0
    %1413 = vmatprep.subr.bf16.mxu0 0
    %1414 = vmatpush2.bf16.msra.mxu0 0
    %1415 = vmatprep.subr.bf16.mxu0 0
    %1416 = vmatpush2.bf16.msra.mxu0 0
    %1417 = vmatprep.subr.bf16.mxu0 0
    %1418 = vmatpush2.bf16.msra.mxu0 0
    %1419 = vmatprep.subr.bf16.mxu0 0
    %1420 = vmatpush2.bf16.msra.mxu0 0
    %1421 = vmatprep.subr.bf16.mxu0 0
    %1422 = vmatpush2.bf16.msra.mxu0 0
    %1423 = vmatprep.subr.bf16.mxu0 0
    %1424 = vmatpush2.bf16.msra.mxu0 0
    %1425 = vmatprep.subr.bf16.mxu0 0
    %1426 = vmatpush2.bf16.msra.mxu0 0
    %1427 = vmatprep.mubr.bf16.mxu0 0
    %1428 = vmatmul.mubr.bf16.gmra.mxu0 %v1390
    %v1429 = vpop.f32.mrf.mxu0
    %v1430 = vadd.f32 0.0, %v1429
    %v1431 = vpop.f32.mrf.mxu0
    %v1432 = vpop.f32.mrf.mxu0
    %v1433 = vpop.f32.mrf.mxu0
    %1434 = vdwg.mxu0
    %v1436 = vsel %vm1015, %v1111, 0
    %v1439 = vsel %vm1115, %v629, 0
    %1441 = vmatprep.subr.bf16.mxu0 0
    %1442 = vmatpush1.bf16.msra.mxu0 0
    %1443 = vmatprep.subr.bf16.mxu0 0
    %1444 = vmatpush1.bf16.msra.mxu0 0
    %1445 = vmatprep.subr.bf16.mxu0 0
    %1446 = vmatpush1.bf16.msra.mxu0 0
    %1447 = vmatprep.subr.bf16.mxu0 0
    %1448 = vmatpush1.bf16.msra.mxu0 0
    %1449 = vmatprep.subr.bf16.mxu0 0
    %1450 = vmatpush1.bf16.msra.mxu0 0
    %1451 = vmatprep.subr.bf16.mxu0 0
    %1452 = vmatpush1.bf16.msra.mxu0 0
    %1453 = vmatprep.subr.bf16.mxu0 0
    %1454 = vmatpush1.bf16.msra.mxu0 0
    %1455 = vmatprep.subr.bf16.mxu0 0
    %1456 = vmatpush1.bf16.msra.mxu0 %v1439
    %1457 = vmatprep.subr.bf16.mxu0 0
    %1458 = vmatpush2.bf16.msra.mxu0 0
    %1459 = vmatprep.subr.bf16.mxu0 0
    %1460 = vmatpush2.bf16.msra.mxu0 0
    %1461 = vmatprep.subr.bf16.mxu0 0
    %1462 = vmatpush2.bf16.msra.mxu0 0
    %1463 = vmatprep.subr.bf16.mxu0 0
    %1464 = vmatpush2.bf16.msra.mxu0 0
    %1465 = vmatprep.subr.bf16.mxu0 0
    %1466 = vmatpush2.bf16.msra.mxu0 0
    %1467 = vmatprep.subr.bf16.mxu0 0
    %1468 = vmatpush2.bf16.msra.mxu0 0
    %1469 = vmatprep.subr.bf16.mxu0 0
    %1470 = vmatpush2.bf16.msra.mxu0 0
    %1471 = vmatprep.subr.bf16.mxu0 0
    %1472 = vmatpush2.bf16.msra.mxu0 0
    %1473 = vmatprep.mubr.bf16.mxu0 0
    %1474 = vmatmul.mubr.bf16.gmra.mxu0 %v1436
    %v1475 = vpop.f32.mrf.mxu0
    %v1476 = vadd.f32 0.0, %v1475
    %v1477 = vpop.f32.mrf.mxu0
    %v1478 = vpop.f32.mrf.mxu0
    %v1479 = vpop.f32.mrf.mxu0
    %1480 = vdwg.mxu0
    %1483 = vrot.lane.b32.xlu0 %v1246, 32
    %v1484 = vpop.permute.xlu0 %1483
    %1485 = vrot.lane.b32.xlu0 %v1292, 32
    %v1486 = vpop.permute.xlu0 %1485
    %1491 = vrot.lane.b32.xlu0 %v1338, 64
    %v1492 = vpop.permute.xlu0 %1491
    %1493 = vrot.lane.b32.xlu0 %v1384, 64
    %v1494 = vpop.permute.xlu0 %1493
    %1499 = vrot.lane.b32.xlu0 %v1430, 96
    %v1500 = vpop.permute.xlu0 %1499
    %1501 = vrot.lane.b32.xlu0 %v1476, 96
    %v1502 = vpop.permute.xlu0 %1501
    %v1505 = vsel %vm630, %v1154, %v1484
    %v1506 = vsel %vm630, %v1200, %v1486
    %vm1507 = vcmask 523264
    %v1508 = vsel %vm1507, %v1505, %v1492
    %v1509 = vsel %vm1507, %v1506, %v1494
    %vm1510 = vcmask 785408
    %v1511 = vsel %vm1510, %v1508, %v1500
    %v1512 = vsel %vm1510, %v1509, %v1502
    %v1513 = vpack.c.bf16 %v1512, %v1511
    %v1514 = vld [vmem:[%s7] sm:$0xf]
    %v1515 = vld [vmem:[%s7 + $0x4] sm:$0xf]
    %v1516 = vld [vmem:[%s7 + $0x8] sm:$0xf]
    %v1517 = vld [vmem:[%s7 + $0xc] sm:$0xf]
    %v1518 = vld [vmem:[%s7 + $0x10] sm:$0xf]
    %v1519 = vld [vmem:[%s7 + $0x14] sm:$0xf]
    %v1520 = vld [vmem:[%s7 + $0x18] sm:$0xf]
    %v1521 = vld [vmem:[%s7 + $0x1c] sm:$0xf]
    %v1522 = vld [vmem:[%s7 + $0x20] sm:$0xf]
    %v1523 = vld [vmem:[%s7 + $0x24] sm:$0xf]
    %v1524 = vld [vmem:[%s7 + $0x28] sm:$0xf]
    %v1525 = vld [vmem:[%s7 + $0x2c] sm:$0xf]
    %v1526 = vld [vmem:[%s7 + $0x30] sm:$0xf]
    %v1527 = vld [vmem:[%s7 + $0x34] sm:$0xf]
    %v1528 = vld [vmem:[%s7 + $0x38] sm:$0xf]
    %v1529 = vld [vmem:[%s7 + $0x3c] sm:$0xf]
    %v1530 = vld [vmem:[%s8] sm:$0x1]
    %v1532 = vlaneseq
    %v1533 = vshrl.u32 %v1532, 7
    %v1534 = vsub.s32 0, %v1533
    %v1535 = vrot.slane %v1530, %v1534
    %v1553 = vunpack.c.l.b16 %v1514
    %v1554 = vunpack.c.l.b16 %v1515
    %v1555 = vunpack.c.l.b16 %v1516
    %v1556 = vunpack.c.l.b16 %v1517
    %v1557 = vunpack.c.l.b16 %v1518
    %v1558 = vunpack.c.l.b16 %v1519
    %v1559 = vunpack.c.l.b16 %v1520
    %v1560 = vunpack.c.l.b16 %v1521
    %v1561 = vunpack.c.l.b16 %v1522
    %v1562 = vunpack.c.l.b16 %v1523
    %v1563 = vunpack.c.l.b16 %v1524
    %v1564 = vunpack.c.l.b16 %v1525
    %v1565 = vunpack.c.l.b16 %v1526
    %v1566 = vunpack.c.l.b16 %v1527
    %v1567 = vunpack.c.l.b16 %v1528
    %v1568 = vunpack.c.l.b16 %v1529
    %v1569 = vpack.c.b16 %v1554, %v1553
    %v1570 = vpack.c.b16 %v1556, %v1555
    %v1571 = vpack.c.b16 %v1558, %v1557
    %v1572 = vpack.c.b16 %v1560, %v1559
    %v1573 = vpack.c.b16 %v1562, %v1561
    %v1574 = vpack.c.b16 %v1564, %v1563
    %v1575 = vpack.c.b16 %v1566, %v1565
    %v1576 = vpack.c.b16 %v1568, %v1567
    %1585 = vmatprep.subr.bf16.mxu0 0
    %1586 = vmatpush1.bf16.msra.mxu0 %v1576
    %1587 = vmatprep.subr.bf16.mxu0 0
    %1588 = vmatpush1.bf16.msra.mxu0 %v1575
    %1589 = vmatprep.subr.bf16.mxu0 0
    %1590 = vmatpush1.bf16.msra.mxu0 %v1574
    %1591 = vmatprep.subr.bf16.mxu0 0
    %1592 = vmatpush1.bf16.msra.mxu0 %v1573
    %1593 = vmatprep.subr.bf16.mxu0 0
    %1594 = vmatpush1.bf16.msra.mxu0 %v1572
    %1595 = vmatprep.subr.bf16.mxu0 0
    %1596 = vmatpush1.bf16.msra.mxu0 %v1571
    %1597 = vmatprep.subr.bf16.mxu0 0
    %1598 = vmatpush1.bf16.msra.mxu0 %v1570
    %1599 = vmatprep.subr.bf16.mxu0 0
    %1600 = vmatpush1.bf16.msra.mxu0 %v1569
    %1601 = vmatprep.subr.bf16.mxu0 0
    %1602 = vmatpush2.bf16.msra.mxu0 0
    %1603 = vmatprep.subr.bf16.mxu0 0
    %1604 = vmatpush2.bf16.msra.mxu0 0
    %1605 = vmatprep.subr.bf16.mxu0 0
    %1606 = vmatpush2.bf16.msra.mxu0 0
    %1607 = vmatprep.subr.bf16.mxu0 0
    %1608 = vmatpush2.bf16.msra.mxu0 0
    %1609 = vmatprep.subr.bf16.mxu0 0
    %1610 = vmatpush2.bf16.msra.mxu0 0
    %1611 = vmatprep.subr.bf16.mxu0 0
    %1612 = vmatpush2.bf16.msra.mxu0 0
    %1613 = vmatprep.subr.bf16.mxu0 0
    %1614 = vmatpush2.bf16.msra.mxu0 0
    %1615 = vmatprep.subr.bf16.mxu0 0
    %1616 = vmatpush2.bf16.msra.mxu0 0
    %1617 = vmatprep.mubr.bf16.mxu0 0
    %1618 = vmatmul.mubr.bf16.gmra.mxu0 %v1513
    %v1619 = vpop.f32.mrf.mxu0
    %v1620 = vadd.f32 %v1535, %v1619
    %v1621 = vpop.f32.mrf.mxu0
    %v1622 = vpop.f32.mrf.mxu0
    %v1623 = vadd.f32 %v1535, %v1622
    %v1624 = vpop.f32.mrf.mxu0
    %1625 = vdwg.mxu0
    %v1626 = vadd.f32 %v267, %v1620
    %v1627 = vadd.f32 %v268, %v1623
    %v1628 = vld [vmem:[%s9] sm:$0x1]
    %v1629 = vld [vmem:[%s10] sm:$0x1]
    %1630 = vadd.xlane.f32.xlu0 %v1626
    %v1631 = vpop.xlane.xlu0 %1630
    %1632 = vadd.xlane.f32.xlu0 %v1627
    %v1633 = vpop.xlane.xlu0 %1632
    %v1634 = vmul.f32 %v1631, %v279
    %v1635 = vmul.f32 %v1633, %v279
    %v1636 = vsub.f32 %v1626, %v1634
    %v1637 = vsub.f32 %v1627, %v1635
    %v1638 = vmul.f32 %v1636, %v1636
    %v1639 = vmul.f32 %v1637, %v1637
    %1640 = vadd.xlane.f32.xlu0 %v1638
    %v1641 = vpop.xlane.xlu0 %1640
    %1642 = vadd.xlane.f32.xlu0 %v1639
    %v1643 = vpop.xlane.xlu0 %1642
    %v1644 = vmul.f32 %v1641, %v279
    %v1645 = vmul.f32 %v1643, %v279
    %v1646 = vadd.f32 %v1644, 1e-06
    %v1647 = vadd.f32 %v1645, 1e-06
    %v1648 = vrsqrt.pop %v1646
    %v1649 = vrsqrt.pop %v1647
    %v1650 = vmul.f32 %v1636, %v1648
    %v1651 = vmul.f32 %v1637, %v1649
    %v1653 = vlaneseq
    %v1654 = vshrl.u32 %v1653, 7
    %v1655 = vsub.s32 0, %v1654
    %v1656 = vrot.slane %v1628, %v1655
    %v1658 = vmul.f32 %v1650, %v1656
    %v1659 = vmul.f32 %v1651, %v1656
    %v1661 = vlaneseq
    %v1662 = vshrl.u32 %v1661, 7
    %v1663 = vsub.s32 0, %v1662
    %v1664 = vrot.slane %v1629, %v1663
    %v1666 = vadd.f32 %v1658, %v1664
    %v1667 = vadd.f32 %v1659, %v1664
    %v1668 = vpack.c.bf16 %v1667, %v1666
    %v1669 = vld [vmem:[%s11] sm:$0xff]
    %v1670 = vld [vmem:[%s11 + $0x8] sm:$0xff]
    %v1671 = vld [vmem:[%s11 + $0x10] sm:$0xff]
    %v1672 = vld [vmem:[%s11 + $0x18] sm:$0xff]
    %v1673 = vld [vmem:[%s11 + $0x20] sm:$0xff]
    %v1674 = vld [vmem:[%s11 + $0x28] sm:$0xff]
    %v1675 = vld [vmem:[%s11 + $0x30] sm:$0xff]
    %v1676 = vld [vmem:[%s11 + $0x38] sm:$0xff]
    %v1677 = vld [vmem:[%s11 + $0x40] sm:$0xff]
    %v1678 = vld [vmem:[%s11 + $0x48] sm:$0xff]
    %v1679 = vld [vmem:[%s11 + $0x50] sm:$0xff]
    %v1680 = vld [vmem:[%s11 + $0x58] sm:$0xff]
    %v1681 = vld [vmem:[%s11 + $0x60] sm:$0xff]
    %v1682 = vld [vmem:[%s11 + $0x68] sm:$0xff]
    %v1683 = vld [vmem:[%s11 + $0x70] sm:$0xff]
    %v1684 = vld [vmem:[%s11 + $0x78] sm:$0xff]
    %v1685 = vld [vmem:[%s11 + $0x80] sm:$0xff]
    %v1686 = vld [vmem:[%s11 + $0x88] sm:$0xff]
    %v1687 = vld [vmem:[%s11 + $0x90] sm:$0xff]
    %v1688 = vld [vmem:[%s11 + $0x98] sm:$0xff]
    %v1689 = vld [vmem:[%s11 + $0xa0] sm:$0xff]
    %v1690 = vld [vmem:[%s11 + $0xa8] sm:$0xff]
    %v1691 = vld [vmem:[%s11 + $0xb0] sm:$0xff]
    %v1692 = vld [vmem:[%s11 + $0xb8] sm:$0xff]
    %v1693 = vld [vmem:[%s11 + $0xc0] sm:$0xff]
    %v1694 = vld [vmem:[%s11 + $0xc8] sm:$0xff]
    %v1695 = vld [vmem:[%s11 + $0xd0] sm:$0xff]
    %v1696 = vld [vmem:[%s11 + $0xd8] sm:$0xff]
    %v1697 = vld [vmem:[%s11 + $0xe0] sm:$0xff]
    %v1698 = vld [vmem:[%s11 + $0xe8] sm:$0xff]
    %v1699 = vld [vmem:[%s11 + $0xf0] sm:$0xff]
    %v1700 = vld [vmem:[%s11 + $0xf8] sm:$0xff]
    %v1701 = vld [vmem:[%s12] sm:$0xf]
    %v1703 = vlaneseq
    %v1704 = vshrl.u32 %v1703, 7
    %v1705 = vsub.s32 0, %v1704
    %v1706 = vrot.slane %v1701, %v1705
    %v1707 = vlaneseq
    %v1708 = vshrl.u32 %v1707, 7
    %v1709 = vsub.s32 1, %v1708
    %v1710 = vrot.slane %v1701, %v1709
    %v1711 = vlaneseq
    %v1712 = vshrl.u32 %v1711, 7
    %v1713 = vsub.s32 2, %v1712
    %v1714 = vrot.slane %v1701, %v1713
    %v1715 = vlaneseq
    %v1716 = vshrl.u32 %v1715, 7
    %v1717 = vsub.s32 3, %v1716
    %v1718 = vrot.slane %v1701, %v1717
    %v1755 = vunpack.c.l.b16 %v1669
    %v1756 = vunpack.c.h.b16 %v1669
    %v1757 = vunpack.c.l.b16 %v1670
    %v1758 = vunpack.c.h.b16 %v1670
    %v1759 = vunpack.c.l.b16 %v1671
    %v1760 = vunpack.c.h.b16 %v1671
    %v1761 = vunpack.c.l.b16 %v1672
    %v1762 = vunpack.c.h.b16 %v1672
    %v1763 = vunpack.c.l.b16 %v1673
    %v1764 = vunpack.c.h.b16 %v1673
    %v1765 = vunpack.c.l.b16 %v1674
    %v1766 = vunpack.c.h.b16 %v1674
    %v1767 = vunpack.c.l.b16 %v1675
    %v1768 = vunpack.c.h.b16 %v1675
    %v1769 = vunpack.c.l.b16 %v1676
    %v1770 = vunpack.c.h.b16 %v1676
    %v1771 = vunpack.c.l.b16 %v1677
    %v1772 = vunpack.c.h.b16 %v1677
    %v1773 = vunpack.c.l.b16 %v1678
    %v1774 = vunpack.c.h.b16 %v1678
    %v1775 = vunpack.c.l.b16 %v1679
    %v1776 = vunpack.c.h.b16 %v1679
    %v1777 = vunpack.c.l.b16 %v1680
    %v1778 = vunpack.c.h.b16 %v1680
    %v1779 = vunpack.c.l.b16 %v1681
    %v1780 = vunpack.c.h.b16 %v1681
    %v1781 = vunpack.c.l.b16 %v1682
    %v1782 = vunpack.c.h.b16 %v1682
    %v1783 = vunpack.c.l.b16 %v1683
    %v1784 = vunpack.c.h.b16 %v1683
    %v1785 = vunpack.c.l.b16 %v1684
    %v1786 = vunpack.c.h.b16 %v1684
    %v1787 = vunpack.c.l.b16 %v1685
    %v1788 = vunpack.c.h.b16 %v1685
    %v1789 = vunpack.c.l.b16 %v1686
    %v1790 = vunpack.c.h.b16 %v1686
    %v1791 = vunpack.c.l.b16 %v1687
    %v1792 = vunpack.c.h.b16 %v1687
    %v1793 = vunpack.c.l.b16 %v1688
    %v1794 = vunpack.c.h.b16 %v1688
    %v1795 = vunpack.c.l.b16 %v1689
    %v1796 = vunpack.c.h.b16 %v1689
    %v1797 = vunpack.c.l.b16 %v1690
    %v1798 = vunpack.c.h.b16 %v1690
    %v1799 = vunpack.c.l.b16 %v1691
    %v1800 = vunpack.c.h.b16 %v1691
    %v1801 = vunpack.c.l.b16 %v1692
    %v1802 = vunpack.c.h.b16 %v1692
    %v1803 = vunpack.c.l.b16 %v1693
    %v1804 = vunpack.c.h.b16 %v1693
    %v1805 = vunpack.c.l.b16 %v1694
    %v1806 = vunpack.c.h.b16 %v1694
    %v1807 = vunpack.c.l.b16 %v1695
    %v1808 = vunpack.c.h.b16 %v1695
    %v1809 = vunpack.c.l.b16 %v1696
    %v1810 = vunpack.c.h.b16 %v1696
    %v1811 = vunpack.c.l.b16 %v1697
    %v1812 = vunpack.c.h.b16 %v1697
    %v1813 = vunpack.c.l.b16 %v1698
    %v1814 = vunpack.c.h.b16 %v1698
    %v1815 = vunpack.c.l.b16 %v1699
    %v1816 = vunpack.c.h.b16 %v1699
    %v1817 = vunpack.c.l.b16 %v1700
    %v1818 = vunpack.c.h.b16 %v1700
    %v1819 = vpack.c.b16 %v1759, %v1755
    %v1820 = vpack.c.b16 %v1760, %v1756
    %v1821 = vpack.c.b16 %v1761, %v1757
    %v1822 = vpack.c.b16 %v1762, %v1758
    %v1823 = vpack.c.b16 %v1767, %v1763
    %v1824 = vpack.c.b16 %v1768, %v1764
    %v1825 = vpack.c.b16 %v1769, %v1765
    %v1826 = vpack.c.b16 %v1770, %v1766
    %v1827 = vpack.c.b16 %v1775, %v1771
    %v1828 = vpack.c.b16 %v1776, %v1772
    %v1829 = vpack.c.b16 %v1777, %v1773
    %v1830 = vpack.c.b16 %v1778, %v1774
    %v1831 = vpack.c.b16 %v1783, %v1779
    %v1832 = vpack.c.b16 %v1784, %v1780
    %v1833 = vpack.c.b16 %v1785, %v1781
    %v1834 = vpack.c.b16 %v1786, %v1782
    %v1835 = vpack.c.b16 %v1791, %v1787
    %v1836 = vpack.c.b16 %v1792, %v1788
    %v1837 = vpack.c.b16 %v1793, %v1789
    %v1838 = vpack.c.b16 %v1794, %v1790
    %v1839 = vpack.c.b16 %v1799, %v1795
    %v1840 = vpack.c.b16 %v1800, %v1796
    %v1841 = vpack.c.b16 %v1801, %v1797
    %v1842 = vpack.c.b16 %v1802, %v1798
    %v1843 = vpack.c.b16 %v1807, %v1803
    %v1844 = vpack.c.b16 %v1808, %v1804
    %v1845 = vpack.c.b16 %v1809, %v1805
    %v1846 = vpack.c.b16 %v1810, %v1806
    %v1847 = vpack.c.b16 %v1815, %v1811
    %v1848 = vpack.c.b16 %v1816, %v1812
    %v1849 = vpack.c.b16 %v1817, %v1813
    %v1850 = vpack.c.b16 %v1818, %v1814
    %1883 = vmatprep.subr.bf16.mxu0 %v1848
    %1884 = vmatpush1.bf16.msra.mxu0 %v1847
    %1885 = vmatprep.subr.bf16.mxu0 %v1844
    %1886 = vmatpush1.bf16.msra.mxu0 %v1843
    %1887 = vmatprep.subr.bf16.mxu0 %v1840
    %1888 = vmatpush1.bf16.msra.mxu0 %v1839
    %1889 = vmatprep.subr.bf16.mxu0 %v1836
    %1890 = vmatpush1.bf16.msra.mxu0 %v1835
    %1891 = vmatprep.subr.bf16.mxu0 %v1832
    %1892 = vmatpush1.bf16.msra.mxu0 %v1831
    %1893 = vmatprep.subr.bf16.mxu0 %v1828
    %1894 = vmatpush1.bf16.msra.mxu0 %v1827
    %1895 = vmatprep.subr.bf16.mxu0 %v1824
    %1896 = vmatpush1.bf16.msra.mxu0 %v1823
    %1897 = vmatprep.subr.bf16.mxu0 %v1820
    %1898 = vmatpush1.bf16.msra.mxu0 %v1819
    %1899 = vmatprep.subr.bf16.mxu0 0
    %1900 = vmatpush2.bf16.msra.mxu0 0
    %1901 = vmatprep.subr.bf16.mxu0 0
    %1902 = vmatpush2.bf16.msra.mxu0 0
    %1903 = vmatprep.subr.bf16.mxu0 0
    %1904 = vmatpush2.bf16.msra.mxu0 0
    %1905 = vmatprep.subr.bf16.mxu0 0
    %1906 = vmatpush2.bf16.msra.mxu0 0
    %1907 = vmatprep.subr.bf16.mxu0 0
    %1908 = vmatpush2.bf16.msra.mxu0 0
    %1909 = vmatprep.subr.bf16.mxu0 0
    %1910 = vmatpush2.bf16.msra.mxu0 0
    %1911 = vmatprep.subr.bf16.mxu0 0
    %1912 = vmatpush2.bf16.msra.mxu0 0
    %1913 = vmatprep.subr.bf16.mxu0 0
    %1914 = vmatpush2.bf16.msra.mxu0 0
    %1915 = vmatprep.mubr.bf16.mxu0 0
    %1916 = vmatmul.mubr.bf16.gmra.mxu0 %v1668
    %v1917 = vpop.f32.mrf.mxu0
    %v1918 = vadd.f32 %v1706, %v1917
    %v1919 = vpop.f32.mrf.mxu0
    %v1920 = vadd.f32 %v1710, %v1919
    %v1921 = vpop.f32.mrf.mxu0
    %v1922 = vadd.f32 %v1706, %v1921
    %v1923 = vpop.f32.mrf.mxu0
    %v1924 = vadd.f32 %v1710, %v1923
    %1925 = vdwg.mxu0
    %1926 = vmatprep.subr.bf16.mxu0 %v1850
    %1927 = vmatpush1.bf16.msra.mxu0 %v1849
    %1928 = vmatprep.subr.bf16.mxu0 %v1846
    %1929 = vmatpush1.bf16.msra.mxu0 %v1845
    %1930 = vmatprep.subr.bf16.mxu0 %v1842
    %1931 = vmatpush1.bf16.msra.mxu0 %v1841
    %1932 = vmatprep.subr.bf16.mxu0 %v1838
    %1933 = vmatpush1.bf16.msra.mxu0 %v1837
    %1934 = vmatprep.subr.bf16.mxu0 %v1834
    %1935 = vmatpush1.bf16.msra.mxu0 %v1833
    %1936 = vmatprep.subr.bf16.mxu0 %v1830
    %1937 = vmatpush1.bf16.msra.mxu0 %v1829
    %1938 = vmatprep.subr.bf16.mxu0 %v1826
    %1939 = vmatpush1.bf16.msra.mxu0 %v1825
    %1940 = vmatprep.subr.bf16.mxu0 %v1822
    %1941 = vmatpush1.bf16.msra.mxu0 %v1821
    %1942 = vmatprep.subr.bf16.mxu0 0
    %1943 = vmatpush2.bf16.msra.mxu0 0
    %1944 = vmatprep.subr.bf16.mxu0 0
    %1945 = vmatpush2.bf16.msra.mxu0 0
    %1946 = vmatprep.subr.bf16.mxu0 0
    %1947 = vmatpush2.bf16.msra.mxu0 0
    %1948 = vmatprep.subr.bf16.mxu0 0
    %1949 = vmatpush2.bf16.msra.mxu0 0
    %1950 = vmatprep.subr.bf16.mxu0 0
    %1951 = vmatpush2.bf16.msra.mxu0 0
    %1952 = vmatprep.subr.bf16.mxu0 0
    %1953 = vmatpush2.bf16.msra.mxu0 0
    %1954 = vmatprep.subr.bf16.mxu0 0
    %1955 = vmatpush2.bf16.msra.mxu0 0
    %1956 = vmatprep.subr.bf16.mxu0 0
    %1957 = vmatpush2.bf16.msra.mxu0 0
    %1958 = vmatprep.mubr.bf16.mxu0 0
    %1959 = vmatmul.mubr.bf16.gmra.mxu0 %v1668
    %v1960 = vpop.f32.mrf.mxu0
    %v1961 = vadd.f32 %v1714, %v1960
    %v1962 = vpop.f32.mrf.mxu0
    %v1963 = vadd.f32 %v1718, %v1962
    %v1964 = vpop.f32.mrf.mxu0
    %v1965 = vadd.f32 %v1714, %v1964
    %v1966 = vpop.f32.mrf.mxu0
    %v1967 = vadd.f32 %v1718, %v1966
    %1968 = vdwg.mxu0
    %v1969 = vmul.f32 %v1918, %v1918
    %v1970 = vmul.f32 %v1920, %v1920
    %v1971 = vmul.f32 %v1961, %v1961
    %v1972 = vmul.f32 %v1963, %v1963
    %v1973 = vmul.f32 %v1922, %v1922
    %v1974 = vmul.f32 %v1924, %v1924
    %v1975 = vmul.f32 %v1965, %v1965
    %v1976 = vmul.f32 %v1967, %v1967
    %v1977 = vmul.f32 %v1918, %v1969
    %v1978 = vmul.f32 %v1920, %v1970
    %v1979 = vmul.f32 %v1961, %v1971
    %v1980 = vmul.f32 %v1963, %v1972
    %v1981 = vmul.f32 %v1922, %v1973
    %v1982 = vmul.f32 %v1924, %v1974
    %v1983 = vmul.f32 %v1965, %v1975
    %v1984 = vmul.f32 %v1967, %v1976
    %v1985 = vmul.f32 %v1977, 0.044715
    %v1986 = vmul.f32 %v1978, 0.044715
    %v1987 = vmul.f32 %v1979, 0.044715
    %v1988 = vmul.f32 %v1980, 0.044715
    %v1989 = vmul.f32 %v1981, 0.044715
    %v1990 = vmul.f32 %v1982, 0.044715
    %v1991 = vmul.f32 %v1983, 0.044715
    %v1992 = vmul.f32 %v1984, 0.044715
    %v1993 = vadd.f32 %v1918, %v1985
    %v1994 = vadd.f32 %v1920, %v1986
    %v1995 = vadd.f32 %v1961, %v1987
    %v1996 = vadd.f32 %v1963, %v1988
    %v1997 = vadd.f32 %v1922, %v1989
    %v1998 = vadd.f32 %v1924, %v1990
    %v1999 = vadd.f32 %v1965, %v1991
    %v2000 = vadd.f32 %v1967, %v1992
    %v2001 = vmul.f32 %v1993, 0.7978846
    %v2002 = vmul.f32 %v1994, 0.7978846
    %v2003 = vmul.f32 %v1995, 0.7978846
    %v2004 = vmul.f32 %v1996, 0.7978846
    %v2005 = vmul.f32 %v1997, 0.7978846
    %v2006 = vmul.f32 %v1998, 0.7978846
    %v2007 = vmul.f32 %v1999, 0.7978846
    %v2008 = vmul.f32 %v2000, 0.7978846
    %v2009 = vtanh.pop %v2001
    %v2010 = vtanh.pop %v2002
    %v2011 = vtanh.pop %v2003
    %v2012 = vtanh.pop %v2004
    %v2013 = vtanh.pop %v2005
    %v2014 = vtanh.pop %v2006
    %v2015 = vtanh.pop %v2007
    %v2016 = vtanh.pop %v2008
    %v2017 = vadd.f32 %v2009, 1.0
    %v2018 = vadd.f32 %v2010, 1.0
    %v2019 = vadd.f32 %v2011, 1.0
    %v2020 = vadd.f32 %v2012, 1.0
    %v2021 = vadd.f32 %v2013, 1.0
    %v2022 = vadd.f32 %v2014, 1.0
    %v2023 = vadd.f32 %v2015, 1.0
    %v2024 = vadd.f32 %v2016, 1.0
    %v2025 = vmul.f32 %v2017, 0.5
    %v2026 = vmul.f32 %v2018, 0.5
    %v2027 = vmul.f32 %v2019, 0.5
    %v2028 = vmul.f32 %v2020, 0.5
    %v2029 = vmul.f32 %v2021, 0.5
    %v2030 = vmul.f32 %v2022, 0.5
    %v2031 = vmul.f32 %v2023, 0.5
    %v2032 = vmul.f32 %v2024, 0.5
    %v2033 = vmul.f32 %v1918, %v2025
    %v2034 = vmul.f32 %v1920, %v2026
    %v2035 = vmul.f32 %v1961, %v2027
    %v2036 = vmul.f32 %v1963, %v2028
    %v2037 = vmul.f32 %v1922, %v2029
    %v2038 = vmul.f32 %v1924, %v2030
    %v2039 = vmul.f32 %v1965, %v2031
    %v2040 = vmul.f32 %v1967, %v2032
    %v2041 = vpack.c.bf16 %v2037, %v2033
    %v2042 = vpack.c.bf16 %v2038, %v2034
    %v2043 = vpack.c.bf16 %v2039, %v2035
    %v2044 = vpack.c.bf16 %v2040, %v2036
    %v2045 = vld [vmem:[#allocation4] sm:$0xf]
    %v2046 = vld [vmem:[#allocation4 + $0x4] sm:$0xf]
    %v2047 = vld [vmem:[#allocation4 + $0x8] sm:$0xf]
    %v2048 = vld [vmem:[#allocation4 + $0xc] sm:$0xf]
    %v2049 = vld [vmem:[#allocation4 + $0x10] sm:$0xf]
    %v2050 = vld [vmem:[#allocation4 + $0x14] sm:$0xf]
    %v2051 = vld [vmem:[#allocation4 + $0x18] sm:$0xf]
    %v2052 = vld [vmem:[#allocation4 + $0x1c] sm:$0xf]
    %v2053 = vld [vmem:[#allocation4 + $0x20] sm:$0xf]
    %v2054 = vld [vmem:[#allocation4 + $0x24] sm:$0xf]
    %v2055 = vld [vmem:[#allocation4 + $0x28] sm:$0xf]
    %v2056 = vld [vmem:[#allocation4 + $0x2c] sm:$0xf]
    %v2057 = vld [vmem:[#allocation4 + $0x30] sm:$0xf]
    %v2058 = vld [vmem:[#allocation4 + $0x34] sm:$0xf]
    %v2059 = vld [vmem:[#allocation4 + $0x38] sm:$0xf]
    %v2060 = vld [vmem:[#allocation4 + $0x3c] sm:$0xf]
    %v2061 = vld [vmem:[#allocation4 + $0x40] sm:$0xf]
    %v2062 = vld [vmem:[#allocation4 + $0x44] sm:$0xf]
    %v2063 = vld [vmem:[#allocation4 + $0x48] sm:$0xf]
    %v2064 = vld [vmem:[#allocation4 + $0x4c] sm:$0xf]
    %v2065 = vld [vmem:[#allocation4 + $0x50] sm:$0xf]
    %v2066 = vld [vmem:[#allocation4 + $0x54] sm:$0xf]
    %v2067 = vld [vmem:[#allocation4 + $0x58] sm:$0xf]
    %v2068 = vld [vmem:[#allocation4 + $0x5c] sm:$0xf]
    %v2069 = vld [vmem:[#allocation4 + $0x60] sm:$0xf]
    %v2070 = vld [vmem:[#allocation4 + $0x64] sm:$0xf]
    %v2071 = vld [vmem:[#allocation4 + $0x68] sm:$0xf]
    %v2072 = vld [vmem:[#allocation4 + $0x6c] sm:$0xf]
    %v2073 = vld [vmem:[#allocation4 + $0x70] sm:$0xf]
    %v2074 = vld [vmem:[#allocation4 + $0x74] sm:$0xf]
    %v2075 = vld [vmem:[#allocation4 + $0x78] sm:$0xf]
    %v2076 = vld [vmem:[#allocation4 + $0x7c] sm:$0xf]
    %v2077 = vld [vmem:[#allocation4 + $0x80] sm:$0xf]
    %v2078 = vld [vmem:[#allocation4 + $0x84] sm:$0xf]
    %v2079 = vld [vmem:[#allocation4 + $0x88] sm:$0xf]
    %v2080 = vld [vmem:[#allocation4 + $0x8c] sm:$0xf]
    %v2081 = vld [vmem:[#allocation4 + $0x90] sm:$0xf]
    %v2082 = vld [vmem:[#allocation4 + $0x94] sm:$0xf]
    %v2083 = vld [vmem:[#allocation4 + $0x98] sm:$0xf]
    %v2084 = vld [vmem:[#allocation4 + $0x9c] sm:$0xf]
    %v2085 = vld [vmem:[#allocation4 + $0xa0] sm:$0xf]
    %v2086 = vld [vmem:[#allocation4 + $0xa4] sm:$0xf]
    %v2087 = vld [vmem:[#allocation4 + $0xa8] sm:$0xf]
    %v2088 = vld [vmem:[#allocation4 + $0xac] sm:$0xf]
    %v2089 = vld [vmem:[#allocation4 + $0xb0] sm:$0xf]
    %v2090 = vld [vmem:[#allocation4 + $0xb4] sm:$0xf]
    %v2091 = vld [vmem:[#allocation4 + $0xb8] sm:$0xf]
    %v2092 = vld [vmem:[#allocation4 + $0xbc] sm:$0xf]
    %v2093 = vld [vmem:[#allocation4 + $0xc0] sm:$0xf]
    %v2094 = vld [vmem:[#allocation4 + $0xc4] sm:$0xf]
    %v2095 = vld [vmem:[#allocation4 + $0xc8] sm:$0xf]
    %v2096 = vld [vmem:[#allocation4 + $0xcc] sm:$0xf]
    %v2097 = vld [vmem:[#allocation4 + $0xd0] sm:$0xf]
    %v2098 = vld [vmem:[#allocation4 + $0xd4] sm:$0xf]
    %v2099 = vld [vmem:[#allocation4 + $0xd8] sm:$0xf]
    %v2100 = vld [vmem:[#allocation4 + $0xdc] sm:$0xf]
    %v2101 = vld [vmem:[#allocation4 + $0xe0] sm:$0xf]
    %v2102 = vld [vmem:[#allocation4 + $0xe4] sm:$0xf]
    %v2103 = vld [vmem:[#allocation4 + $0xe8] sm:$0xf]
    %v2104 = vld [vmem:[#allocation4 + $0xec] sm:$0xf]
    %v2105 = vld [vmem:[#allocation4 + $0xf0] sm:$0xf]
    %v2106 = vld [vmem:[#allocation4 + $0xf4] sm:$0xf]
    %v2107 = vld [vmem:[#allocation4 + $0xf8] sm:$0xf]
    %v2108 = vld [vmem:[#allocation4 + $0xfc] sm:$0xf]
    %v2109 = vld [vmem:[%s14] sm:$0x1]
    %v2111 = vlaneseq
    %v2112 = vshrl.u32 %v2111, 7
    %v2113 = vsub.s32 0, %v2112
    %v2114 = vrot.slane %v2109, %v2113
    %v2180 = vunpack.c.l.b16 %v2045
    %v2181 = vunpack.c.l.b16 %v2046
    %v2182 = vunpack.c.l.b16 %v2047
    %v2183 = vunpack.c.l.b16 %v2048
    %v2184 = vunpack.c.l.b16 %v2049
    %v2185 = vunpack.c.l.b16 %v2050
    %v2186 = vunpack.c.l.b16 %v2051
    %v2187 = vunpack.c.l.b16 %v2052
    %v2188 = vunpack.c.l.b16 %v2053
    %v2189 = vunpack.c.l.b16 %v2054
    %v2190 = vunpack.c.l.b16 %v2055
    %v2191 = vunpack.c.l.b16 %v2056
    %v2192 = vunpack.c.l.b16 %v2057
    %v2193 = vunpack.c.l.b16 %v2058
    %v2194 = vunpack.c.l.b16 %v2059
    %v2195 = vunpack.c.l.b16 %v2060
    %v2196 = vunpack.c.l.b16 %v2061
    %v2197 = vunpack.c.l.b16 %v2062
    %v2198 = vunpack.c.l.b16 %v2063
    %v2199 = vunpack.c.l.b16 %v2064
    %v2200 = vunpack.c.l.b16 %v2065
    %v2201 = vunpack.c.l.b16 %v2066
    %v2202 = vunpack.c.l.b16 %v2067
    %v2203 = vunpack.c.l.b16 %v2068
    %v2204 = vunpack.c.l.b16 %v2069
    %v2205 = vunpack.c.l.b16 %v2070
    %v2206 = vunpack.c.l.b16 %v2071
    %v2207 = vunpack.c.l.b16 %v2072
    %v2208 = vunpack.c.l.b16 %v2073
    %v2209 = vunpack.c.l.b16 %v2074
    %v2210 = vunpack.c.l.b16 %v2075
    %v2211 = vunpack.c.l.b16 %v2076
    %v2212 = vunpack.c.l.b16 %v2077
    %v2213 = vunpack.c.l.b16 %v2078
    %v2214 = vunpack.c.l.b16 %v2079
    %v2215 = vunpack.c.l.b16 %v2080
    %v2216 = vunpack.c.l.b16 %v2081
    %v2217 = vunpack.c.l.b16 %v2082
    %v2218 = vunpack.c.l.b16 %v2083
    %v2219 = vunpack.c.l.b16 %v2084
    %v2220 = vunpack.c.l.b16 %v2085
    %v2221 = vunpack.c.l.b16 %v2086
    %v2222 = vunpack.c.l.b16 %v2087
    %v2223 = vunpack.c.l.b16 %v2088
    %v2224 = vunpack.c.l.b16 %v2089
    %v2225 = vunpack.c.l.b16 %v2090
    %v2226 = vunpack.c.l.b16 %v2091
    %v2227 = vunpack.c.l.b16 %v2092
    %v2228 = vunpack.c.l.b16 %v2093
    %v2229 = vunpack.c.l.b16 %v2094
    %v2230 = vunpack.c.l.b16 %v2095
    %v2231 = vunpack.c.l.b16 %v2096
    %v2232 = vunpack.c.l.b16 %v2097
    %v2233 = vunpack.c.l.b16 %v2098
    %v2234 = vunpack.c.l.b16 %v2099
    %v2235 = vunpack.c.l.b16 %v2100
    %v2236 = vunpack.c.l.b16 %v2101
    %v2237 = vunpack.c.l.b16 %v2102
    %v2238 = vunpack.c.l.b16 %v2103
    %v2239 = vunpack.c.l.b16 %v2104
    %v2240 = vunpack.c.l.b16 %v2105
    %v2241 = vunpack.c.l.b16 %v2106
    %v2242 = vunpack.c.l.b16 %v2107
    %v2243 = vunpack.c.l.b16 %v2108
    %v2244 = vpack.c.b16 %v2181, %v2180
    %v2245 = vpack.c.b16 %v2183, %v2182
    %v2246 = vpack.c.b16 %v2185, %v2184
    %v2247 = vpack.c.b16 %v2187, %v2186
    %v2248 = vpack.c.b16 %v2189, %v2188
    %v2249 = vpack.c.b16 %v2191, %v2190
    %v2250 = vpack.c.b16 %v2193, %v2192
    %v2251 = vpack.c.b16 %v2195, %v2194
    %v2252 = vpack.c.b16 %v2197, %v2196
    %v2253 = vpack.c.b16 %v2199, %v2198
    %v2254 = vpack.c.b16 %v2201, %v2200
    %v2255 = vpack.c.b16 %v2203, %v2202
    %v2256 = vpack.c.b16 %v2205, %v2204
    %v2257 = vpack.c.b16 %v2207, %v2206
    %v2258 = vpack.c.b16 %v2209, %v2208
    %v2259 = vpack.c.b16 %v2211, %v2210
    %v2260 = vpack.c.b16 %v2213, %v2212
    %v2261 = vpack.c.b16 %v2215, %v2214
    %v2262 = vpack.c.b16 %v2217, %v2216
    %v2263 = vpack.c.b16 %v2219, %v2218
    %v2264 = vpack.c.b16 %v2221, %v2220
    %v2265 = vpack.c.b16 %v2223, %v2222
    %v2266 = vpack.c.b16 %v2225, %v2224
    %v2267 = vpack.c.b16 %v2227, %v2226
    %v2268 = vpack.c.b16 %v2229, %v2228
    %v2269 = vpack.c.b16 %v2231, %v2230
    %v2270 = vpack.c.b16 %v2233, %v2232
    %v2271 = vpack.c.b16 %v2235, %v2234
    %v2272 = vpack.c.b16 %v2237, %v2236
    %v2273 = vpack.c.b16 %v2239, %v2238
    %v2274 = vpack.c.b16 %v2241, %v2240
    %v2275 = vpack.c.b16 %v2243, %v2242
    %2308 = vmatprep.subr.bf16.mxu0 0
    %2309 = vmatpush1.bf16.msra.mxu0 %v2251
    %2310 = vmatprep.subr.bf16.mxu0 0
    %2311 = vmatpush1.bf16.msra.mxu0 %v2250
    %2312 = vmatprep.subr.bf16.mxu0 0
    %2313 = vmatpush1.bf16.msra.mxu0 %v2249
    %2314 = vmatprep.subr.bf16.mxu0 0
    %2315 = vmatpush1.bf16.msra.mxu0 %v2248
    %2316 = vmatprep.subr.bf16.mxu0 0
    %2317 = vmatpush1.bf16.msra.mxu0 %v2247
    %2318 = vmatprep.subr.bf16.mxu0 0
    %2319 = vmatpush1.bf16.msra.mxu0 %v2246
    %2320 = vmatprep.subr.bf16.mxu0 0
    %2321 = vmatpush1.bf16.msra.mxu0 %v2245
    %2322 = vmatprep.subr.bf16.mxu0 0
    %2323 = vmatpush1.bf16.msra.mxu0 %v2244
    %2324 = vmatprep.subr.bf16.mxu0 0
    %2325 = vmatpush2.bf16.msra.mxu0 %v2259
    %2326 = vmatprep.subr.bf16.mxu0 0
    %2327 = vmatpush2.bf16.msra.mxu0 %v2258
    %2328 = vmatprep.subr.bf16.mxu0 0
    %2329 = vmatpush2.bf16.msra.mxu0 %v2257
    %2330 = vmatprep.subr.bf16.mxu0 0
    %2331 = vmatpush2.bf16.msra.mxu0 %v2256
    %2332 = vmatprep.subr.bf16.mxu0 0
    %2333 = vmatpush2.bf16.msra.mxu0 %v2255
    %2334 = vmatprep.subr.bf16.mxu0 0
    %2335 = vmatpush2.bf16.msra.mxu0 %v2254
    %2336 = vmatprep.subr.bf16.mxu0 0
    %2337 = vmatpush2.bf16.msra.mxu0 %v2253
    %2338 = vmatprep.subr.bf16.mxu0 0
    %2339 = vmatpush2.bf16.msra.mxu0 %v2252
    %2340 = vmatprep.mubr.bf16.mxu0 %v2042
    %2341 = vmatmul.mubr.bf16.gmra.mxu0 %v2041
    %v2342 = vpop.f32.mrf.mxu0
    %v2343 = vadd.f32 %v2114, %v2342
    %v2344 = vpop.f32.mrf.mxu0
    %v2345 = vpop.f32.mrf.mxu0
    %v2346 = vadd.f32 %v2114, %v2345
    %v2347 = vpop.f32.mrf.mxu0
    %2348 = vdwg.mxu0
    %2349 = vmatprep.subr.bf16.mxu0 0
    %2350 = vmatpush1.bf16.msra.mxu0 %v2267
    %2351 = vmatprep.subr.bf16.mxu0 0
    %2352 = vmatpush1.bf16.msra.mxu0 %v2266
    %2353 = vmatprep.subr.bf16.mxu0 0
    %2354 = vmatpush1.bf16.msra.mxu0 %v2265
    %2355 = vmatprep.subr.bf16.mxu0 0
    %2356 = vmatpush1.bf16.msra.mxu0 %v2264
    %2357 = vmatprep.subr.bf16.mxu0 0
    %2358 = vmatpush1.bf16.msra.mxu0 %v2263
    %2359 = vmatprep.subr.bf16.mxu0 0
    %2360 = vmatpush1.bf16.msra.mxu0 %v2262
    %2361 = vmatprep.subr.bf16.mxu0 0
    %2362 = vmatpush1.bf16.msra.mxu0 %v2261
    %2363 = vmatprep.subr.bf16.mxu0 0
    %2364 = vmatpush1.bf16.msra.mxu0 %v2260
    %2365 = vmatprep.subr.bf16.mxu0 0
    %2366 = vmatpush2.bf16.msra.mxu0 %v2275
    %2367 = vmatprep.subr.bf16.mxu0 0
    %2368 = vmatpush2.bf16.msra.mxu0 %v2274
    %2369 = vmatprep.subr.bf16.mxu0 0
    %2370 = vmatpush2.bf16.msra.mxu0 %v2273
    %2371 = vmatprep.subr.bf16.mxu0 0
    %2372 = vmatpush2.bf16.msra.mxu0 %v2272
    %2373 = vmatprep.subr.bf16.mxu0 0
    %2374 = vmatpush2.bf16.msra.mxu0 %v2271
    %2375 = vmatprep.subr.bf16.mxu0 0
    %2376 = vmatpush2.bf16.msra.mxu0 %v2270
    %2377 = vmatprep.subr.bf16.mxu0 0
    %2378 = vmatpush2.bf16.msra.mxu0 %v2269
    %2379 = vmatprep.subr.bf16.mxu0 0
    %2380 = vmatpush2.bf16.msra.mxu0 %v2268
    %2381 = vmatprep.mubr.bf16.mxu0 %v2044
    %2382 = vmatmul.mubr.bf16.gmra.mxu0 %v2043
    %v2383 = vpop.f32.mrf.mxu0
    %v2384 = vadd.f32 %v2343, %v2383
    %v2385 = vpop.f32.mrf.mxu0
    %v2386 = vpop.f32.mrf.mxu0
    %v2387 = vadd.f32 %v2346, %v2386
    %v2388 = vpop.f32.mrf.mxu0
    %2389 = vdwg.mxu0
    %v2390 = vadd.f32 %v1626, %v2384
    %v2391 = vadd.f32 %v1627, %v2387
    %s2392 = scalar_lea.vmem %s3, 1
    %v2393 = vld [vmem:[%s2392] sm:$0x1]
    %s2394 = scalar_lea.vmem %s4, 1
    %v2395 = vld [vmem:[%s2394] sm:$0x1]
    %2396 = vadd.xlane.f32.xlu0 %v2390
    %v2397 = vpop.xlane.xlu0 %2396
    %2398 = vadd.xlane.f32.xlu0 %v2391
    %v2399 = vpop.xlane.xlu0 %2398
    %v2400 = vmul.f32 %v2397, %v279
    %v2401 = vmul.f32 %v2399, %v279
    %v2402 = vsub.f32 %v2390, %v2400
    %v2403 = vsub.f32 %v2391, %v2401
    %v2404 = vmul.f32 %v2402, %v2402
    %v2405 = vmul.f32 %v2403, %v2403
    %2406 = vadd.xlane.f32.xlu0 %v2404
    %v2407 = vpop.xlane.xlu0 %2406
    %2408 = vadd.xlane.f32.xlu0 %v2405
    %v2409 = vpop.xlane.xlu0 %2408
    %v2410 = vmul.f32 %v2407, %v279
    %v2411 = vmul.f32 %v2409, %v279
    %v2412 = vadd.f32 %v2410, 1e-06
    %v2413 = vadd.f32 %v2411, 1e-06
    %v2414 = vrsqrt.pop %v2412
    %v2415 = vrsqrt.pop %v2413
    %v2416 = vmul.f32 %v2402, %v2414
    %v2417 = vmul.f32 %v2403, %v2415
    %v2419 = vlaneseq
    %v2420 = vshrl.u32 %v2419, 7
    %v2421 = vsub.s32 0, %v2420
    %v2422 = vrot.slane %v2393, %v2421
    %v2424 = vmul.f32 %v2416, %v2422
    %v2425 = vmul.f32 %v2417, %v2422
    %v2427 = vlaneseq
    %v2428 = vshrl.u32 %v2427, 7
    %v2429 = vsub.s32 0, %v2428
    %v2430 = vrot.slane %v2395, %v2429
    %v2432 = vadd.f32 %v2424, %v2430
    %v2433 = vadd.f32 %v2425, %v2430
    %v2434 = vpack.c.bf16 %v2433, %v2432
    %s2435 = scalar_lea.vmem [#allocation2], 192
    %v2436 = vld [vmem:[%s2435] sm:$0xff]
    %v2437 = vld [vmem:[%s2435 + $0x8] sm:$0xf]
    %v2438 = vld [vmem:[%s2435 + $0xc] sm:$0xff]
    %v2439 = vld [vmem:[%s2435 + $0x14] sm:$0xf]
    %v2440 = vld [vmem:[%s2435 + $0x18] sm:$0xff]
    %v2441 = vld [vmem:[%s2435 + $0x20] sm:$0xf]
    %v2442 = vld [vmem:[%s2435 + $0x24] sm:$0xff]
    %v2443 = vld [vmem:[%s2435 + $0x2c] sm:$0xf]
    %v2444 = vld [vmem:[%s2435 + $0x30] sm:$0xff]
    %v2445 = vld [vmem:[%s2435 + $0x38] sm:$0xf]
    %v2446 = vld [vmem:[%s2435 + $0x3c] sm:$0xff]
    %v2447 = vld [vmem:[%s2435 + $0x44] sm:$0xf]
    %v2448 = vld [vmem:[%s2435 + $0x48] sm:$0xff]
    %v2449 = vld [vmem:[%s2435 + $0x50] sm:$0xf]
    %v2450 = vld [vmem:[%s2435 + $0x54] sm:$0xff]
    %v2451 = vld [vmem:[%s2435 + $0x5c] sm:$0xf]
    %v2452 = vld [vmem:[%s2435 + $0x60] sm:$0xff]
    %v2453 = vld [vmem:[%s2435 + $0x68] sm:$0xf]
    %v2454 = vld [vmem:[%s2435 + $0x6c] sm:$0xff]
    %v2455 = vld [vmem:[%s2435 + $0x74] sm:$0xf]
    %v2456 = vld [vmem:[%s2435 + $0x78] sm:$0xff]
    %v2457 = vld [vmem:[%s2435 + $0x80] sm:$0xf]
    %v2458 = vld [vmem:[%s2435 + $0x84] sm:$0xff]
    %v2459 = vld [vmem:[%s2435 + $0x8c] sm:$0xf]
    %v2460 = vld [vmem:[%s2435 + $0x90] sm:$0xff]
    %v2461 = vld [vmem:[%s2435 + $0x98] sm:$0xf]
    %v2462 = vld [vmem:[%s2435 + $0x9c] sm:$0xff]
    %v2463 = vld [vmem:[%s2435 + $0xa4] sm:$0xf]
    %v2464 = vld [vmem:[%s2435 + $0xa8] sm:$0xff]
    %v2465 = vld [vmem:[%s2435 + $0xb0] sm:$0xf]
    %v2466 = vld [vmem:[%s2435 + $0xb4] sm:$0xff]
    %v2467 = vld [vmem:[%s2435 + $0xbc] sm:$0xf]
    %s2468 = scalar_lea.vmem %s6, 3
    %v2469 = vld [vmem:[%s2468] sm:$0x7]
    %v2471 = vlaneseq
    %v2472 = vshrl.u32 %v2471, 7
    %v2473 = vsub.s32 0, %v2472
    %v2474 = vrot.slane %v2469, %v2473
    %v2475 = vlaneseq
    %v2476 = vshrl.u32 %v2475, 7
    %v2477 = vsub.s32 1, %v2476
    %v2478 = vrot.slane %v2469, %v2477
    %v2479 = vlaneseq
    %v2480 = vshrl.u32 %v2479, 7
    %v2481 = vsub.s32 2, %v2480
    %v2482 = vrot.slane %v2469, %v2481
    %v2518 = vunpack.c.l.b16 %v2436
    %v2519 = vunpack.c.h.b16 %v2436
    %v2520 = vunpack.c.l.b16 %v2437
    %v2521 = vunpack.c.l.b16 %v2438
    %v2522 = vunpack.c.h.b16 %v2438
    %v2523 = vunpack.c.l.b16 %v2439
    %v2524 = vunpack.c.l.b16 %v2440
    %v2525 = vunpack.c.h.b16 %v2440
    %v2526 = vunpack.c.l.b16 %v2441
    %v2527 = vunpack.c.l.b16 %v2442
    %v2528 = vunpack.c.h.b16 %v2442
    %v2529 = vunpack.c.l.b16 %v2443
    %v2530 = vunpack.c.l.b16 %v2444
    %v2531 = vunpack.c.h.b16 %v2444
    %v2532 = vunpack.c.l.b16 %v2445
    %v2533 = vunpack.c.l.b16 %v2446
    %v2534 = vunpack.c.h.b16 %v2446
    %v2535 = vunpack.c.l.b16 %v2447
    %v2536 = vunpack.c.l.b16 %v2448
    %v2537 = vunpack.c.h.b16 %v2448
    %v2538 = vunpack.c.l.b16 %v2449
    %v2539 = vunpack.c.l.b16 %v2450
    %v2540 = vunpack.c.h.b16 %v2450
    %v2541 = vunpack.c.l.b16 %v2451
    %v2542 = vunpack.c.l.b16 %v2452
    %v2543 = vunpack.c.h.b16 %v2452
    %v2544 = vunpack.c.l.b16 %v2453
    %v2545 = vunpack.c.l.b16 %v2454
    %v2546 = vunpack.c.h.b16 %v2454
    %v2547 = vunpack.c.l.b16 %v2455
    %v2548 = vunpack.c.l.b16 %v2456
    %v2549 = vunpack.c.h.b16 %v2456
    %v2550 = vunpack.c.l.b16 %v2457
    %v2551 = vunpack.c.l.b16 %v2458
    %v2552 = vunpack.c.h.b16 %v2458
    %v2553 = vunpack.c.l.b16 %v2459
    %v2554 = vunpack.c.l.b16 %v2460
    %v2555 = vunpack.c.h.b16 %v2460
    %v2556 = vunpack.c.l.b16 %v2461
    %v2557 = vunpack.c.l.b16 %v2462
    %v2558 = vunpack.c.h.b16 %v2462
    %v2559 = vunpack.c.l.b16 %v2463
    %v2560 = vunpack.c.l.b16 %v2464
    %v2561 = vunpack.c.h.b16 %v2464
    %v2562 = vunpack.c.l.b16 %v2465
    %v2563 = vunpack.c.l.b16 %v2466
    %v2564 = vunpack.c.h.b16 %v2466
    %v2565 = vunpack.c.l.b16 %v2467
    %v2566 = vpack.c.b16 %v2521, %v2518
    %v2567 = vpack.c.b16 %v2522, %v2519
    %v2568 = vpack.c.b16 %v2523, %v2520
    %v2569 = vpack.c.b16 %v2527, %v2524
    %v2570 = vpack.c.b16 %v2528, %v2525
    %v2571 = vpack.c.b16 %v2529, %v2526
    %v2572 = vpack.c.b16 %v2533, %v2530
    %v2573 = vpack.c.b16 %v2534, %v2531
    %v2574 = vpack.c.b16 %v2535, %v2532
    %v2575 = vpack.c.b16 %v2539, %v2536
    %v2576 = vpack.c.b16 %v2540, %v2537
    %v2577 = vpack.c.b16 %v2541, %v2538
    %v2578 = vpack.c.b16 %v2545, %v2542
    %v2579 = vpack.c.b16 %v2546, %v2543
    %v2580 = vpack.c.b16 %v2547, %v2544
    %v2581 = vpack.c.b16 %v2551, %v2548
    %v2582 = vpack.c.b16 %v2552, %v2549
    %v2583 = vpack.c.b16 %v2553, %v2550
    %v2584 = vpack.c.b16 %v2557, %v2554
    %v2585 = vpack.c.b16 %v2558, %v2555
    %v2586 = vpack.c.b16 %v2559, %v2556
    %v2587 = vpack.c.b16 %v2563, %v2560
    %v2588 = vpack.c.b16 %v2564, %v2561
    %v2589 = vpack.c.b16 %v2565, %v2562
    %2614 = vmatprep.subr.bf16.mxu0 %v2588
    %2615 = vmatpush1.bf16.msra.mxu0 %v2587
    %2616 = vmatprep.subr.bf16.mxu0 %v2585
    %2617 = vmatpush1.bf16.msra.mxu0 %v2584
    %2618 = vmatprep.subr.bf16.mxu0 %v2582
    %2619 = vmatpush1.bf16.msra.mxu0 %v2581
    %2620 = vmatprep.subr.bf16.mxu0 %v2579
    %2621 = vmatpush1.bf16.msra.mxu0 %v2578
    %2622 = vmatprep.subr.bf16.mxu0 %v2576
    %2623 = vmatpush1.bf16.msra.mxu0 %v2575
    %2624 = vmatprep.subr.bf16.mxu0 %v2573
    %2625 = vmatpush1.bf16.msra.mxu0 %v2572
    %2626 = vmatprep.subr.bf16.mxu0 %v2570
    %2627 = vmatpush1.bf16.msra.mxu0 %v2569
    %2628 = vmatprep.subr.bf16.mxu0 %v2567
    %2629 = vmatpush1.bf16.msra.mxu0 %v2566
    %2630 = vmatprep.subr.bf16.mxu0 0
    %2631 = vmatpush2.bf16.msra.mxu0 0
    %2632 = vmatprep.subr.bf16.mxu0 0
    %2633 = vmatpush2.bf16.msra.mxu0 0
    %2634 = vmatprep.subr.bf16.mxu0 0
    %2635 = vmatpush2.bf16.msra.mxu0 0
    %2636 = vmatprep.subr.bf16.mxu0 0
    %2637 = vmatpush2.bf16.msra.mxu0 0
    %2638 = vmatprep.subr.bf16.mxu0 0
    %2639 = vmatpush2.bf16.msra.mxu0 0
    %2640 = vmatprep.subr.bf16.mxu0 0
    %2641 = vmatpush2.bf16.msra.mxu0 0
    %2642 = vmatprep.subr.bf16.mxu0 0
    %2643 = vmatpush2.bf16.msra.mxu0 0
    %2644 = vmatprep.subr.bf16.mxu0 0
    %2645 = vmatpush2.bf16.msra.mxu0 0
    %2646 = vmatprep.mubr.bf16.mxu0 0
    %2647 = vmatmul.mubr.bf16.gmra.mxu0 %v2434
    %v2648 = vpop.f32.mrf.mxu0
    %v2649 = vadd.f32 %v2474, %v2648
    %v2650 = vpop.f32.mrf.mxu0
    %v2651 = vadd.f32 %v2478, %v2650
    %v2652 = vpop.f32.mrf.mxu0
    %v2653 = vadd.f32 %v2474, %v2652
    %v2654 = vpop.f32.mrf.mxu0
    %v2655 = vadd.f32 %v2478, %v2654
    %2656 = vdwg.mxu0
    %2657 = vmatprep.subr.bf16.mxu0 0
    %2658 = vmatpush1.bf16.msra.mxu0 %v2589
    %2659 = vmatprep.subr.bf16.mxu0 0
    %2660 = vmatpush1.bf16.msra.mxu0 %v2586
    %2661 = vmatprep.subr.bf16.mxu0 0
    %2662 = vmatpush1.bf16.msra.mxu0 %v2583
    %2663 = vmatprep.subr.bf16.mxu0 0
    %2664 = vmatpush1.bf16.msra.mxu0 %v2580
    %2665 = vmatprep.subr.bf16.mxu0 0
    %2666 = vmatpush1.bf16.msra.mxu0 %v2577
    %2667 = vmatprep.subr.bf16.mxu0 0
    %2668 = vmatpush1.bf16.msra.mxu0 %v2574
    %2669 = vmatprep.subr.bf16.mxu0 0
    %2670 = vmatpush1.bf16.msra.mxu0 %v2571
    %2671 = vmatprep.subr.bf16.mxu0 0
    %2672 = vmatpush1.bf16.msra.mxu0 %v2568
    %2673 = vmatprep.subr.bf16.mxu0 0
    %2674 = vmatpush2.bf16.msra.mxu0 0
    %2675 = vmatprep.subr.bf16.mxu0 0
    %2676 = vmatpush2.bf16.msra.mxu0 0
    %2677 = vmatprep.subr.bf16.mxu0 0
    %2678 = vmatpush2.bf16.msra.mxu0 0
    %2679 = vmatprep.subr.bf16.mxu0 0
    %2680 = vmatpush2.bf16.msra.mxu0 0
    %2681 = vmatprep.subr.bf16.mxu0 0
    %2682 = vmatpush2.bf16.msra.mxu0 0
    %2683 = vmatprep.subr.bf16.mxu0 0
    %2684 = vmatpush2.bf16.msra.mxu0 0
    %2685 = vmatprep.subr.bf16.mxu0 0
    %2686 = vmatpush2.bf16.msra.mxu0 0
    %2687 = vmatprep.subr.bf16.mxu0 0
    %2688 = vmatpush2.bf16.msra.mxu0 0
    %2689 = vmatprep.mubr.bf16.mxu0 0
    %2690 = vmatmul.mubr.bf16.gmra.mxu0 %v2434
    %v2691 = vpop.f32.mrf.mxu0
    %v2692 = vadd.f32 %v2482, %v2691
    %v2693 = vpop.f32.mrf.mxu0
    %v2694 = vpop.f32.mrf.mxu0
    %v2695 = vadd.f32 %v2482, %v2694
    %v2696 = vpop.f32.mrf.mxu0
    %2697 = vdwg.mxu0
    %v2698 = vpack.c.bf16 %v2653, %v2649
    %v2699 = vpack.c.bf16 %v2655, %v2651
    %v2700 = vpack.c.bf16 %v2695, %v2692
    %v2702 = vunpack.c.l.b16 %v2698
    %v2703 = vunpack.c.h.b16 %v2698
    %v2704 = vpack.c.b16 %v2702, %v2702
    %v2705 = vpack.c.b16 %v2703, %v2703
    %2706 = vrot.lane.b32.xlu0 %v2704, 96
    %v2707 = vpop.permute.xlu0 %2706
    %2708 = vrot.lane.b32.xlu0 %v2705, 96
    %v2709 = vpop.permute.xlu0 %2708
    %2710 = vrot.lane.b32.xlu0 %v2704, 64
    %v2711 = vpop.permute.xlu0 %2710
    %2712 = vrot.lane.b32.xlu0 %v2705, 64
    %v2713 = vpop.permute.xlu0 %2712
    %2714 = vrot.lane.b32.xlu0 %v2704, 32
    %v2715 = vpop.permute.xlu0 %2714
    %2716 = vrot.lane.b32.xlu0 %v2705, 32
    %v2717 = vpop.permute.xlu0 %2716
    %v2719 = vunpack.c.l.b16 %v2699
    %v2720 = vunpack.c.h.b16 %v2699
    %v2721 = vpack.c.b16 %v2719, %v2719
    %v2722 = vpack.c.b16 %v2720, %v2720
    %2723 = vrot.lane.b32.xlu0 %v2721, 96
    %v2724 = vpop.permute.xlu0 %2723
    %2725 = vrot.lane.b32.xlu0 %v2722, 96
    %v2726 = vpop.permute.xlu0 %2725
    %2727 = vrot.lane.b32.xlu0 %v2721, 64
    %v2728 = vpop.permute.xlu0 %2727
    %2729 = vrot.lane.b32.xlu0 %v2722, 64
    %v2730 = vpop.permute.xlu0 %2729
    %2731 = vrot.lane.b32.xlu0 %v2721, 32
    %v2732 = vpop.permute.xlu0 %2731
    %2733 = vrot.lane.b32.xlu0 %v2722, 32
    %v2734 = vpop.permute.xlu0 %2733
    %v2736 = vunpack.c.l.b16 %v2700
    %v2737 = vunpack.c.h.b16 %v2700
    %v2738 = vpack.c.b16 %v2736, %v2736
    %v2739 = vpack.c.b16 %v2737, %v2737
    %2740 = vrot.lane.b32.xlu0 %v2738, 96
    %v2741 = vpop.permute.xlu0 %2740
    %2742 = vrot.lane.b32.xlu0 %v2739, 96
    %v2743 = vpop.permute.xlu0 %2742
    %2744 = vrot.lane.b32.xlu0 %v2738, 64
    %v2745 = vpop.permute.xlu0 %2744
    %2746 = vrot.lane.b32.xlu0 %v2739, 64
    %v2747 = vpop.permute.xlu0 %2746
    %2748 = vrot.lane.b32.xlu0 %v2738, 32
    %v2749 = vpop.permute.xlu0 %2748
    %2750 = vrot.lane.b32.xlu0 %v2739, 32
    %v2751 = vpop.permute.xlu0 %2750
    %v2753 = vsel %vm630, %v2704, 0
    %v2756 = vsel %vm630, %v2721, 0
    %2758 = vmatprep.subr.bf16.mxu0 0
    %2759 = vmatpush1.bf16.xpose.msra.mxu0 0
    %2760 = vmatprep.subr.bf16.mxu0 0
    %2761 = vmatpush1.bf16.xpose.msra.mxu0 0
    %2762 = vmatprep.subr.bf16.mxu0 0
    %2763 = vmatpush1.bf16.xpose.msra.mxu0 0
    %2764 = vmatprep.subr.bf16.mxu0 0
    %2765 = vmatpush1.bf16.xpose.msra.mxu0 0
    %2766 = vmatprep.subr.bf16.mxu0 0
    %2767 = vmatpush1.bf16.xpose.msra.mxu0 0
    %2768 = vmatprep.subr.bf16.mxu0 0
    %2769 = vmatpush1.bf16.xpose.msra.mxu0 0
    %2770 = vmatprep.subr.bf16.mxu0 0
    %2771 = vmatpush1.bf16.xpose.msra.mxu0 0
    %2772 = vmatprep.subr.bf16.mxu0 0
    %2773 = vmatpush1.bf16.xpose.msra.mxu0 %v2756
    %2774 = vmatprep.subr.bf16.mxu0 0
    %2775 = vmatpush2.bf16.xpose.msra.mxu0 0
    %2776 = vmatprep.subr.bf16.mxu0 0
    %2777 = vmatpush2.bf16.xpose.msra.mxu0 0
    %2778 = vmatprep.subr.bf16.mxu0 0
    %2779 = vmatpush2.bf16.xpose.msra.mxu0 0
    %2780 = vmatprep.subr.bf16.mxu0 0
    %2781 = vmatpush2.bf16.xpose.msra.mxu0 0
    %2782 = vmatprep.subr.bf16.mxu0 0
    %2783 = vmatpush2.bf16.xpose.msra.mxu0 0
    %2784 = vmatprep.subr.bf16.mxu0 0
    %2785 = vmatpush2.bf16.xpose.msra.mxu0 0
    %2786 = vmatprep.subr.bf16.mxu0 0
    %2787 = vmatpush2.bf16.xpose.msra.mxu0 0
    %2788 = vmatprep.subr.bf16.mxu0 0
    %2789 = vmatpush2.bf16.xpose.msra.mxu0 0
    %2790 = vmatprep.mubr.bf16.mxu0 0
    %2791 = vmatmul.mubr.bf16.gmra.mxu0 %v2753
    %v2792 = vpop.f32.mrf.mxu0
    %v2793 = vadd.f32 0.0, %v2792
    %v2794 = vpop.f32.mrf.mxu0
    %v2795 = vpop.f32.mrf.mxu0
    %v2796 = vpop.f32.mrf.mxu0
    %2797 = vdwg.mxu0
    %v2799 = vsel %vm630, %v2705, 0
    %v2802 = vsel %vm630, %v2722, 0
    %2804 = vmatprep.subr.bf16.mxu0 0
    %2805 = vmatpush1.bf16.xpose.msra.mxu0 0
    %2806 = vmatprep.subr.bf16.mxu0 0
    %2807 = vmatpush1.bf16.xpose.msra.mxu0 0
    %2808 = vmatprep.subr.bf16.mxu0 0
    %2809 = vmatpush1.bf16.xpose.msra.mxu0 0
    %2810 = vmatprep.subr.bf16.mxu0 0
    %2811 = vmatpush1.bf16.xpose.msra.mxu0 0
    %2812 = vmatprep.subr.bf16.mxu0 0
    %2813 = vmatpush1.bf16.xpose.msra.mxu0 0
    %2814 = vmatprep.subr.bf16.mxu0 0
    %2815 = vmatpush1.bf16.xpose.msra.mxu0 0
    %2816 = vmatprep.subr.bf16.mxu0 0
    %2817 = vmatpush1.bf16.xpose.msra.mxu0 0
    %2818 = vmatprep.subr.bf16.mxu0 0
    %2819 = vmatpush1.bf16.xpose.msra.mxu0 %v2802
    %2820 = vmatprep.subr.bf16.mxu0 0
    %2821 = vmatpush2.bf16.xpose.msra.mxu0 0
    %2822 = vmatprep.subr.bf16.mxu0 0
    %2823 = vmatpush2.bf16.xpose.msra.mxu0 0
    %2824 = vmatprep.subr.bf16.mxu0 0
    %2825 = vmatpush2.bf16.xpose.msra.mxu0 0
    %2826 = vmatprep.subr.bf16.mxu0 0
    %2827 = vmatpush2.bf16.xpose.msra.mxu0 0
    %2828 = vmatprep.subr.bf16.mxu0 0
    %2829 = vmatpush2.bf16.xpose.msra.mxu0 0
    %2830 = vmatprep.subr.bf16.mxu0 0
    %2831 = vmatpush2.bf16.xpose.msra.mxu0 0
    %2832 = vmatprep.subr.bf16.mxu0 0
    %2833 = vmatpush2.bf16.xpose.msra.mxu0 0
    %2834 = vmatprep.subr.bf16.mxu0 0
    %2835 = vmatpush2.bf16.xpose.msra.mxu0 0
    %2836 = vmatprep.mubr.bf16.mxu0 0
    %2837 = vmatmul.mubr.bf16.gmra.mxu0 %v2799
    %v2838 = vpop.f32.mrf.mxu0
    %v2839 = vadd.f32 0.0, %v2838
    %v2840 = vpop.f32.mrf.mxu0
    %v2841 = vpop.f32.mrf.mxu0
    %v2842 = vpop.f32.mrf.mxu0
    %2843 = vdwg.mxu0
    %v2845 = vsel %vm630, %v2707, 0
    %v2848 = vsel %vm630, %v2724, 0
    %2850 = vmatprep.subr.bf16.mxu0 0
    %2851 = vmatpush1.bf16.xpose.msra.mxu0 0
    %2852 = vmatprep.subr.bf16.mxu0 0
    %2853 = vmatpush1.bf16.xpose.msra.mxu0 0
    %2854 = vmatprep.subr.bf16.mxu0 0
    %2855 = vmatpush1.bf16.xpose.msra.mxu0 0
    %2856 = vmatprep.subr.bf16.mxu0 0
    %2857 = vmatpush1.bf16.xpose.msra.mxu0 0
    %2858 = vmatprep.subr.bf16.mxu0 0
    %2859 = vmatpush1.bf16.xpose.msra.mxu0 0
    %2860 = vmatprep.subr.bf16.mxu0 0
    %2861 = vmatpush1.bf16.xpose.msra.mxu0 0
    %2862 = vmatprep.subr.bf16.mxu0 0
    %2863 = vmatpush1.bf16.xpose.msra.mxu0 0
    %2864 = vmatprep.subr.bf16.mxu0 0
    %2865 = vmatpush1.bf16.xpose.msra.mxu0 %v2848
    %2866 = vmatprep.subr.bf16.mxu0 0
    %2867 = vmatpush2.bf16.xpose.msra.mxu0 0
    %2868 = vmatprep.subr.bf16.mxu0 0
    %2869 = vmatpush2.bf16.xpose.msra.mxu0 0
    %2870 = vmatprep.subr.bf16.mxu0 0
    %2871 = vmatpush2.bf16.xpose.msra.mxu0 0
    %2872 = vmatprep.subr.bf16.mxu0 0
    %2873 = vmatpush2.bf16.xpose.msra.mxu0 0
    %2874 = vmatprep.subr.bf16.mxu0 0
    %2875 = vmatpush2.bf16.xpose.msra.mxu0 0
    %2876 = vmatprep.subr.bf16.mxu0 0
    %2877 = vmatpush2.bf16.xpose.msra.mxu0 0
    %2878 = vmatprep.subr.bf16.mxu0 0
    %2879 = vmatpush2.bf16.xpose.msra.mxu0 0
    %2880 = vmatprep.subr.bf16.mxu0 0
    %2881 = vmatpush2.bf16.xpose.msra.mxu0 0
    %2882 = vmatprep.mubr.bf16.mxu0 0
    %2883 = vmatmul.mubr.bf16.gmra.mxu0 %v2845
    %v2884 = vpop.f32.mrf.mxu0
    %v2885 = vadd.f32 0.0, %v2884
    %v2886 = vpop.f32.mrf.mxu0
    %v2887 = vpop.f32.mrf.mxu0
    %v2888 = vpop.f32.mrf.mxu0
    %2889 = vdwg.mxu0
    %v2891 = vsel %vm630, %v2709, 0
    %v2894 = vsel %vm630, %v2726, 0
    %2896 = vmatprep.subr.bf16.mxu0 0
    %2897 = vmatpush1.bf16.xpose.msra.mxu0 0
    %2898 = vmatprep.subr.bf16.mxu0 0
    %2899 = vmatpush1.bf16.xpose.msra.mxu0 0
    %2900 = vmatprep.subr.bf16.mxu0 0
    %2901 = vmatpush1.bf16.xpose.msra.mxu0 0
    %2902 = vmatprep.subr.bf16.mxu0 0
    %2903 = vmatpush1.bf16.xpose.msra.mxu0 0
    %2904 = vmatprep.subr.bf16.mxu0 0
    %2905 = vmatpush1.bf16.xpose.msra.mxu0 0
    %2906 = vmatprep.subr.bf16.mxu0 0
    %2907 = vmatpush1.bf16.xpose.msra.mxu0 0
    %2908 = vmatprep.subr.bf16.mxu0 0
    %2909 = vmatpush1.bf16.xpose.msra.mxu0 0
    %2910 = vmatprep.subr.bf16.mxu0 0
    %2911 = vmatpush1.bf16.xpose.msra.mxu0 %v2894
    %2912 = vmatprep.subr.bf16.mxu0 0
    %2913 = vmatpush2.bf16.xpose.msra.mxu0 0
    %2914 = vmatprep.subr.bf16.mxu0 0
    %2915 = vmatpush2.bf16.xpose.msra.mxu0 0
    %2916 = vmatprep.subr.bf16.mxu0 0
    %2917 = vmatpush2.bf16.xpose.msra.mxu0 0
    %2918 = vmatprep.subr.bf16.mxu0 0
    %2919 = vmatpush2.bf16.xpose.msra.mxu0 0
    %2920 = vmatprep.subr.bf16.mxu0 0
    %2921 = vmatpush2.bf16.xpose.msra.mxu0 0
    %2922 = vmatprep.subr.bf16.mxu0 0
    %2923 = vmatpush2.bf16.xpose.msra.mxu0 0
    %2924 = vmatprep.subr.bf16.mxu0 0
    %2925 = vmatpush2.bf16.xpose.msra.mxu0 0
    %2926 = vmatprep.subr.bf16.mxu0 0
    %2927 = vmatpush2.bf16.xpose.msra.mxu0 0
    %2928 = vmatprep.mubr.bf16.mxu0 0
    %2929 = vmatmul.mubr.bf16.gmra.mxu0 %v2891
    %v2930 = vpop.f32.mrf.mxu0
    %v2931 = vadd.f32 0.0, %v2930
    %v2932 = vpop.f32.mrf.mxu0
    %v2933 = vpop.f32.mrf.mxu0
    %v2934 = vpop.f32.mrf.mxu0
    %2935 = vdwg.mxu0
    %v2937 = vsel %vm630, %v2711, 0
    %v2940 = vsel %vm630, %v2728, 0
    %2942 = vmatprep.subr.bf16.mxu0 0
    %2943 = vmatpush1.bf16.xpose.msra.mxu0 0
    %2944 = vmatprep.subr.bf16.mxu0 0
    %2945 = vmatpush1.bf16.xpose.msra.mxu0 0
    %2946 = vmatprep.subr.bf16.mxu0 0
    %2947 = vmatpush1.bf16.xpose.msra.mxu0 0
    %2948 = vmatprep.subr.bf16.mxu0 0
    %2949 = vmatpush1.bf16.xpose.msra.mxu0 0
    %2950 = vmatprep.subr.bf16.mxu0 0
    %2951 = vmatpush1.bf16.xpose.msra.mxu0 0
    %2952 = vmatprep.subr.bf16.mxu0 0
    %2953 = vmatpush1.bf16.xpose.msra.mxu0 0
    %2954 = vmatprep.subr.bf16.mxu0 0
    %2955 = vmatpush1.bf16.xpose.msra.mxu0 0
    %2956 = vmatprep.subr.bf16.mxu0 0
    %2957 = vmatpush1.bf16.xpose.msra.mxu0 %v2940
    %2958 = vmatprep.subr.bf16.mxu0 0
    %2959 = vmatpush2.bf16.xpose.msra.mxu0 0
    %2960 = vmatprep.subr.bf16.mxu0 0
    %2961 = vmatpush2.bf16.xpose.msra.mxu0 0
    %2962 = vmatprep.subr.bf16.mxu0 0
    %2963 = vmatpush2.bf16.xpose.msra.mxu0 0
    %2964 = vmatprep.subr.bf16.mxu0 0
    %2965 = vmatpush2.bf16.xpose.msra.mxu0 0
    %2966 = vmatprep.subr.bf16.mxu0 0
    %2967 = vmatpush2.bf16.xpose.msra.mxu0 0
    %2968 = vmatprep.subr.bf16.mxu0 0
    %2969 = vmatpush2.bf16.xpose.msra.mxu0 0
    %2970 = vmatprep.subr.bf16.mxu0 0
    %2971 = vmatpush2.bf16.xpose.msra.mxu0 0
    %2972 = vmatprep.subr.bf16.mxu0 0
    %2973 = vmatpush2.bf16.xpose.msra.mxu0 0
    %2974 = vmatprep.mubr.bf16.mxu0 0
    %2975 = vmatmul.mubr.bf16.gmra.mxu0 %v2937
    %v2976 = vpop.f32.mrf.mxu0
    %v2977 = vadd.f32 0.0, %v2976
    %v2978 = vpop.f32.mrf.mxu0
    %v2979 = vpop.f32.mrf.mxu0
    %v2980 = vpop.f32.mrf.mxu0
    %2981 = vdwg.mxu0
    %v2983 = vsel %vm630, %v2713, 0
    %v2986 = vsel %vm630, %v2730, 0
    %2988 = vmatprep.subr.bf16.mxu0 0
    %2989 = vmatpush1.bf16.xpose.msra.mxu0 0
    %2990 = vmatprep.subr.bf16.mxu0 0
    %2991 = vmatpush1.bf16.xpose.msra.mxu0 0
    %2992 = vmatprep.subr.bf16.mxu0 0
    %2993 = vmatpush1.bf16.xpose.msra.mxu0 0
    %2994 = vmatprep.subr.bf16.mxu0 0
    %2995 = vmatpush1.bf16.xpose.msra.mxu0 0
    %2996 = vmatprep.subr.bf16.mxu0 0
    %2997 = vmatpush1.bf16.xpose.msra.mxu0 0
    %2998 = vmatprep.subr.bf16.mxu0 0
    %2999 = vmatpush1.bf16.xpose.msra.mxu0 0
    %3000 = vmatprep.subr.bf16.mxu0 0
    %3001 = vmatpush1.bf16.xpose.msra.mxu0 0
    %3002 = vmatprep.subr.bf16.mxu0 0
    %3003 = vmatpush1.bf16.xpose.msra.mxu0 %v2986
    %3004 = vmatprep.subr.bf16.mxu0 0
    %3005 = vmatpush2.bf16.xpose.msra.mxu0 0
    %3006 = vmatprep.subr.bf16.mxu0 0
    %3007 = vmatpush2.bf16.xpose.msra.mxu0 0
    %3008 = vmatprep.subr.bf16.mxu0 0
    %3009 = vmatpush2.bf16.xpose.msra.mxu0 0
    %3010 = vmatprep.subr.bf16.mxu0 0
    %3011 = vmatpush2.bf16.xpose.msra.mxu0 0
    %3012 = vmatprep.subr.bf16.mxu0 0
    %3013 = vmatpush2.bf16.xpose.msra.mxu0 0
    %3014 = vmatprep.subr.bf16.mxu0 0
    %3015 = vmatpush2.bf16.xpose.msra.mxu0 0
    %3016 = vmatprep.subr.bf16.mxu0 0
    %3017 = vmatpush2.bf16.xpose.msra.mxu0 0
    %3018 = vmatprep.subr.bf16.mxu0 0
    %3019 = vmatpush2.bf16.xpose.msra.mxu0 0
    %3020 = vmatprep.mubr.bf16.mxu0 0
    %3021 = vmatmul.mubr.bf16.gmra.mxu0 %v2983
    %v3022 = vpop.f32.mrf.mxu0
    %v3023 = vadd.f32 0.0, %v3022
    %v3024 = vpop.f32.mrf.mxu0
    %v3025 = vpop.f32.mrf.mxu0
    %v3026 = vpop.f32.mrf.mxu0
    %3027 = vdwg.mxu0
    %v3029 = vsel %vm630, %v2715, 0
    %v3032 = vsel %vm630, %v2732, 0
    %3034 = vmatprep.subr.bf16.mxu0 0
    %3035 = vmatpush1.bf16.xpose.msra.mxu0 0
    %3036 = vmatprep.subr.bf16.mxu0 0
    %3037 = vmatpush1.bf16.xpose.msra.mxu0 0
    %3038 = vmatprep.subr.bf16.mxu0 0
    %3039 = vmatpush1.bf16.xpose.msra.mxu0 0
    %3040 = vmatprep.subr.bf16.mxu0 0
    %3041 = vmatpush1.bf16.xpose.msra.mxu0 0
    %3042 = vmatprep.subr.bf16.mxu0 0
    %3043 = vmatpush1.bf16.xpose.msra.mxu0 0
    %3044 = vmatprep.subr.bf16.mxu0 0
    %3045 = vmatpush1.bf16.xpose.msra.mxu0 0
    %3046 = vmatprep.subr.bf16.mxu0 0
    %3047 = vmatpush1.bf16.xpose.msra.mxu0 0
    %3048 = vmatprep.subr.bf16.mxu0 0
    %3049 = vmatpush1.bf16.xpose.msra.mxu0 %v3032
    %3050 = vmatprep.subr.bf16.mxu0 0
    %3051 = vmatpush2.bf16.xpose.msra.mxu0 0
    %3052 = vmatprep.subr.bf16.mxu0 0
    %3053 = vmatpush2.bf16.xpose.msra.mxu0 0
    %3054 = vmatprep.subr.bf16.mxu0 0
    %3055 = vmatpush2.bf16.xpose.msra.mxu0 0
    %3056 = vmatprep.subr.bf16.mxu0 0
    %3057 = vmatpush2.bf16.xpose.msra.mxu0 0
    %3058 = vmatprep.subr.bf16.mxu0 0
    %3059 = vmatpush2.bf16.xpose.msra.mxu0 0
    %3060 = vmatprep.subr.bf16.mxu0 0
    %3061 = vmatpush2.bf16.xpose.msra.mxu0 0
    %3062 = vmatprep.subr.bf16.mxu0 0
    %3063 = vmatpush2.bf16.xpose.msra.mxu0 0
    %3064 = vmatprep.subr.bf16.mxu0 0
    %3065 = vmatpush2.bf16.xpose.msra.mxu0 0
    %3066 = vmatprep.mubr.bf16.mxu0 0
    %3067 = vmatmul.mubr.bf16.gmra.mxu0 %v3029
    %v3068 = vpop.f32.mrf.mxu0
    %v3069 = vadd.f32 0.0, %v3068
    %v3070 = vpop.f32.mrf.mxu0
    %v3071 = vpop.f32.mrf.mxu0
    %v3072 = vpop.f32.mrf.mxu0
    %3073 = vdwg.mxu0
    %v3075 = vsel %vm630, %v2717, 0
    %v3078 = vsel %vm630, %v2734, 0
    %3080 = vmatprep.subr.bf16.mxu0 0
    %3081 = vmatpush1.bf16.xpose.msra.mxu0 0
    %3082 = vmatprep.subr.bf16.mxu0 0
    %3083 = vmatpush1.bf16.xpose.msra.mxu0 0
    %3084 = vmatprep.subr.bf16.mxu0 0
    %3085 = vmatpush1.bf16.xpose.msra.mxu0 0
    %3086 = vmatprep.subr.bf16.mxu0 0
    %3087 = vmatpush1.bf16.xpose.msra.mxu0 0
    %3088 = vmatprep.subr.bf16.mxu0 0
    %3089 = vmatpush1.bf16.xpose.msra.mxu0 0
    %3090 = vmatprep.subr.bf16.mxu0 0
    %3091 = vmatpush1.bf16.xpose.msra.mxu0 0
    %3092 = vmatprep.subr.bf16.mxu0 0
    %3093 = vmatpush1.bf16.xpose.msra.mxu0 0
    %3094 = vmatprep.subr.bf16.mxu0 0
    %3095 = vmatpush1.bf16.xpose.msra.mxu0 %v3078
    %3096 = vmatprep.subr.bf16.mxu0 0
    %3097 = vmatpush2.bf16.xpose.msra.mxu0 0
    %3098 = vmatprep.subr.bf16.mxu0 0
    %3099 = vmatpush2.bf16.xpose.msra.mxu0 0
    %3100 = vmatprep.subr.bf16.mxu0 0
    %3101 = vmatpush2.bf16.xpose.msra.mxu0 0
    %3102 = vmatprep.subr.bf16.mxu0 0
    %3103 = vmatpush2.bf16.xpose.msra.mxu0 0
    %3104 = vmatprep.subr.bf16.mxu0 0
    %3105 = vmatpush2.bf16.xpose.msra.mxu0 0
    %3106 = vmatprep.subr.bf16.mxu0 0
    %3107 = vmatpush2.bf16.xpose.msra.mxu0 0
    %3108 = vmatprep.subr.bf16.mxu0 0
    %3109 = vmatpush2.bf16.xpose.msra.mxu0 0
    %3110 = vmatprep.subr.bf16.mxu0 0
    %3111 = vmatpush2.bf16.xpose.msra.mxu0 0
    %3112 = vmatprep.mubr.bf16.mxu0 0
    %3113 = vmatmul.mubr.bf16.gmra.mxu0 %v3075
    %v3114 = vpop.f32.mrf.mxu0
    %v3115 = vadd.f32 0.0, %v3114
    %v3116 = vpop.f32.mrf.mxu0
    %v3117 = vpop.f32.mrf.mxu0
    %v3118 = vpop.f32.mrf.mxu0
    %3119 = vdwg.mxu0
    %v3120 = vmul.f32 %v2793, 0.17677669
    %v3121 = vmul.f32 %v2839, 0.17677669
    %v3122 = vmul.f32 %v2885, 0.17677669
    %v3123 = vmul.f32 %v2931, 0.17677669
    %v3124 = vmul.f32 %v2977, 0.17677669
    %v3125 = vmul.f32 %v3023, 0.17677669
    %v3126 = vmul.f32 %v3069, 0.17677669
    %v3127 = vmul.f32 %v3115, 0.17677669
    %v3128 = vadd.f32 %v3120, %v272
    %v3129 = vadd.f32 %v3121, %v272
    %v3130 = vadd.f32 %v3122, %v272
    %v3131 = vadd.f32 %v3123, %v272
    %v3132 = vadd.f32 %v3124, %v272
    %v3133 = vadd.f32 %v3125, %v272
    %v3134 = vadd.f32 %v3126, %v272
    %v3135 = vadd.f32 %v3127, %v272
    %v3136 = vsel %vm1015, %v3128, -inf
    %3137 = vmax.xlane.f32.xlu0 %v3136
    %v3138 = vpop.xlane.xlu0 %3137
    %v3139 = vsel %vm1015, %v3129, -inf
    %3140 = vmax.xlane.f32.xlu0 %v3139
    %v3141 = vpop.xlane.xlu0 %3140
    %v3142 = vsel %vm1015, %v3130, -inf
    %3143 = vmax.xlane.f32.xlu0 %v3142
    %v3144 = vpop.xlane.xlu0 %3143
    %v3145 = vsel %vm1015, %v3131, -inf
    %3146 = vmax.xlane.f32.xlu0 %v3145
    %v3147 = vpop.xlane.xlu0 %3146
    %v3148 = vsel %vm1015, %v3132, -inf
    %3149 = vmax.xlane.f32.xlu0 %v3148
    %v3150 = vpop.xlane.xlu0 %3149
    %v3151 = vsel %vm1015, %v3133, -inf
    %3152 = vmax.xlane.f32.xlu0 %v3151
    %v3153 = vpop.xlane.xlu0 %3152
    %v3154 = vsel %vm1015, %v3134, -inf
    %3155 = vmax.xlane.f32.xlu0 %v3154
    %v3156 = vpop.xlane.xlu0 %3155
    %v3157 = vsel %vm1015, %v3135, -inf
    %3158 = vmax.xlane.f32.xlu0 %v3157
    %v3159 = vpop.xlane.xlu0 %3158
    %v3160 = vsub.f32 %v3128, %v3138
    %v3161 = vsub.f32 %v3129, %v3141
    %v3162 = vsub.f32 %v3130, %v3144
    %v3163 = vsub.f32 %v3131, %v3147
    %v3164 = vsub.f32 %v3132, %v3150
    %v3165 = vsub.f32 %v3133, %v3153
    %v3166 = vsub.f32 %v3134, %v3156
    %v3167 = vsub.f32 %v3135, %v3159
    %v3168 = vmul.f32 %v3160, 1.442695
    %v3169 = vpow.pop %v3168
    %v3170 = vmul.f32 %v3161, 1.442695
    %v3171 = vpow.pop %v3170
    %v3172 = vmul.f32 %v3162, 1.442695
    %v3173 = vpow.pop %v3172
    %v3174 = vmul.f32 %v3163, 1.442695
    %v3175 = vpow.pop %v3174
    %v3176 = vmul.f32 %v3164, 1.442695
    %v3177 = vpow.pop %v3176
    %v3178 = vmul.f32 %v3165, 1.442695
    %v3179 = vpow.pop %v3178
    %v3180 = vmul.f32 %v3166, 1.442695
    %v3181 = vpow.pop %v3180
    %v3182 = vmul.f32 %v3167, 1.442695
    %v3183 = vpow.pop %v3182
    %v3184 = vsel %vm1015, %v3169, 0.0
    %3185 = vadd.xlane.f32.xlu0 %v3184
    %v3186 = vpop.xlane.xlu0 %3185
    %v3187 = vsel %vm1015, %v3171, 0.0
    %3188 = vadd.xlane.f32.xlu0 %v3187
    %v3189 = vpop.xlane.xlu0 %3188
    %v3190 = vsel %vm1015, %v3173, 0.0
    %3191 = vadd.xlane.f32.xlu0 %v3190
    %v3192 = vpop.xlane.xlu0 %3191
    %v3193 = vsel %vm1015, %v3175, 0.0
    %3194 = vadd.xlane.f32.xlu0 %v3193
    %v3195 = vpop.xlane.xlu0 %3194
    %v3196 = vsel %vm1015, %v3177, 0.0
    %3197 = vadd.xlane.f32.xlu0 %v3196
    %v3198 = vpop.xlane.xlu0 %3197
    %v3199 = vsel %vm1015, %v3179, 0.0
    %3200 = vadd.xlane.f32.xlu0 %v3199
    %v3201 = vpop.xlane.xlu0 %3200
    %v3202 = vsel %vm1015, %v3181, 0.0
    %3203 = vadd.xlane.f32.xlu0 %v3202
    %v3204 = vpop.xlane.xlu0 %3203
    %v3205 = vsel %vm1015, %v3183, 0.0
    %3206 = vadd.xlane.f32.xlu0 %v3205
    %v3207 = vpop.xlane.xlu0 %3206
    %v3208 = vrcp.pop %v3186
    %v3209 = vrcp.pop %v3189
    %v3210 = vrcp.pop %v3192
    %v3211 = vrcp.pop %v3195
    %v3212 = vrcp.pop %v3198
    %v3213 = vrcp.pop %v3201
    %v3214 = vrcp.pop %v3204
    %v3215 = vrcp.pop %v3207
    %v3216 = vmul.f32 %v3169, %v3208
    %v3217 = vmul.f32 %v3171, %v3209
    %v3218 = vmul.f32 %v3173, %v3210
    %v3219 = vmul.f32 %v3175, %v3211
    %v3220 = vmul.f32 %v3177, %v3212
    %v3221 = vmul.f32 %v3179, %v3213
    %v3222 = vmul.f32 %v3181, %v3214
    %v3223 = vmul.f32 %v3183, %v3215
    %v3224 = vpack.c.bf16 %v3216, %v3216
    %v3225 = vpack.c.bf16 %v3217, %v3217
    %v3226 = vpack.c.bf16 %v3218, %v3218
    %v3227 = vpack.c.bf16 %v3219, %v3219
    %v3228 = vpack.c.bf16 %v3220, %v3220
    %v3229 = vpack.c.bf16 %v3221, %v3221
    %v3230 = vpack.c.bf16 %v3222, %v3222
    %v3231 = vpack.c.bf16 %v3223, %v3223
    %v3233 = vsel %vm1015, %v3224, 0
    %v3236 = vsel %vm1115, %v2738, 0
    %3238 = vmatprep.subr.bf16.mxu0 0
    %3239 = vmatpush1.bf16.msra.mxu0 0
    %3240 = vmatprep.subr.bf16.mxu0 0
    %3241 = vmatpush1.bf16.msra.mxu0 0
    %3242 = vmatprep.subr.bf16.mxu0 0
    %3243 = vmatpush1.bf16.msra.mxu0 0
    %3244 = vmatprep.subr.bf16.mxu0 0
    %3245 = vmatpush1.bf16.msra.mxu0 0
    %3246 = vmatprep.subr.bf16.mxu0 0
    %3247 = vmatpush1.bf16.msra.mxu0 0
    %3248 = vmatprep.subr.bf16.mxu0 0
    %3249 = vmatpush1.bf16.msra.mxu0 0
    %3250 = vmatprep.subr.bf16.mxu0 0
    %3251 = vmatpush1.bf16.msra.mxu0 0
    %3252 = vmatprep.subr.bf16.mxu0 0
    %3253 = vmatpush1.bf16.msra.mxu0 %v3236
    %3254 = vmatprep.subr.bf16.mxu0 0
    %3255 = vmatpush2.bf16.msra.mxu0 0
    %3256 = vmatprep.subr.bf16.mxu0 0
    %3257 = vmatpush2.bf16.msra.mxu0 0
    %3258 = vmatprep.subr.bf16.mxu0 0
    %3259 = vmatpush2.bf16.msra.mxu0 0
    %3260 = vmatprep.subr.bf16.mxu0 0
    %3261 = vmatpush2.bf16.msra.mxu0 0
    %3262 = vmatprep.subr.bf16.mxu0 0
    %3263 = vmatpush2.bf16.msra.mxu0 0
    %3264 = vmatprep.subr.bf16.mxu0 0
    %3265 = vmatpush2.bf16.msra.mxu0 0
    %3266 = vmatprep.subr.bf16.mxu0 0
    %3267 = vmatpush2.bf16.msra.mxu0 0
    %3268 = vmatprep.subr.bf16.mxu0 0
    %3269 = vmatpush2.bf16.msra.mxu0 0
    %3270 = vmatprep.mubr.bf16.mxu0 0
    %3271 = vmatmul.mubr.bf16.gmra.mxu0 %v3233
    %v3272 = vpop.f32.mrf.mxu0
    %v3273 = vadd.f32 0.0, %v3272
    %v3274 = vpop.f32.mrf.mxu0
    %v3275 = vpop.f32.mrf.mxu0
    %v3276 = vpop.f32.mrf.mxu0
    %3277 = vdwg.mxu0
    %v3279 = vsel %vm1015, %v3225, 0
    %v3282 = vsel %vm1115, %v2739, 0
    %3284 = vmatprep.subr.bf16.mxu0 0
    %3285 = vmatpush1.bf16.msra.mxu0 0
    %3286 = vmatprep.subr.bf16.mxu0 0
    %3287 = vmatpush1.bf16.msra.mxu0 0
    %3288 = vmatprep.subr.bf16.mxu0 0
    %3289 = vmatpush1.bf16.msra.mxu0 0
    %3290 = vmatprep.subr.bf16.mxu0 0
    %3291 = vmatpush1.bf16.msra.mxu0 0
    %3292 = vmatprep.subr.bf16.mxu0 0
    %3293 = vmatpush1.bf16.msra.mxu0 0
    %3294 = vmatprep.subr.bf16.mxu0 0
    %3295 = vmatpush1.bf16.msra.mxu0 0
    %3296 = vmatprep.subr.bf16.mxu0 0
    %3297 = vmatpush1.bf16.msra.mxu0 0
    %3298 = vmatprep.subr.bf16.mxu0 0
    %3299 = vmatpush1.bf16.msra.mxu0 %v3282
    %3300 = vmatprep.subr.bf16.mxu0 0
    %3301 = vmatpush2.bf16.msra.mxu0 0
    %3302 = vmatprep.subr.bf16.mxu0 0
    %3303 = vmatpush2.bf16.msra.mxu0 0
    %3304 = vmatprep.subr.bf16.mxu0 0
    %3305 = vmatpush2.bf16.msra.mxu0 0
    %3306 = vmatprep.subr.bf16.mxu0 0
    %3307 = vmatpush2.bf16.msra.mxu0 0
    %3308 = vmatprep.subr.bf16.mxu0 0
    %3309 = vmatpush2.bf16.msra.mxu0 0
    %3310 = vmatprep.subr.bf16.mxu0 0
    %3311 = vmatpush2.bf16.msra.mxu0 0
    %3312 = vmatprep.subr.bf16.mxu0 0
    %3313 = vmatpush2.bf16.msra.mxu0 0
    %3314 = vmatprep.subr.bf16.mxu0 0
    %3315 = vmatpush2.bf16.msra.mxu0 0
    %3316 = vmatprep.mubr.bf16.mxu0 0
    %3317 = vmatmul.mubr.bf16.gmra.mxu0 %v3279
    %v3318 = vpop.f32.mrf.mxu0
    %v3319 = vadd.f32 0.0, %v3318
    %v3320 = vpop.f32.mrf.mxu0
    %v3321 = vpop.f32.mrf.mxu0
    %v3322 = vpop.f32.mrf.mxu0
    %3323 = vdwg.mxu0
    %v3325 = vsel %vm1015, %v3226, 0
    %v3328 = vsel %vm1115, %v2741, 0
    %3330 = vmatprep.subr.bf16.mxu0 0
    %3331 = vmatpush1.bf16.msra.mxu0 0
    %3332 = vmatprep.subr.bf16.mxu0 0
    %3333 = vmatpush1.bf16.msra.mxu0 0
    %3334 = vmatprep.subr.bf16.mxu0 0
    %3335 = vmatpush1.bf16.msra.mxu0 0
    %3336 = vmatprep.subr.bf16.mxu0 0
    %3337 = vmatpush1.bf16.msra.mxu0 0
    %3338 = vmatprep.subr.bf16.mxu0 0
    %3339 = vmatpush1.bf16.msra.mxu0 0
    %3340 = vmatprep.subr.bf16.mxu0 0
    %3341 = vmatpush1.bf16.msra.mxu0 0
    %3342 = vmatprep.subr.bf16.mxu0 0
    %3343 = vmatpush1.bf16.msra.mxu0 0
    %3344 = vmatprep.subr.bf16.mxu0 0
    %3345 = vmatpush1.bf16.msra.mxu0 %v3328
    %3346 = vmatprep.subr.bf16.mxu0 0
    %3347 = vmatpush2.bf16.msra.mxu0 0
    %3348 = vmatprep.subr.bf16.mxu0 0
    %3349 = vmatpush2.bf16.msra.mxu0 0
    %3350 = vmatprep.subr.bf16.mxu0 0
    %3351 = vmatpush2.bf16.msra.mxu0 0
    %3352 = vmatprep.subr.bf16.mxu0 0
    %3353 = vmatpush2.bf16.msra.mxu0 0
    %3354 = vmatprep.subr.bf16.mxu0 0
    %3355 = vmatpush2.bf16.msra.mxu0 0
    %3356 = vmatprep.subr.bf16.mxu0 0
    %3357 = vmatpush2.bf16.msra.mxu0 0
    %3358 = vmatprep.subr.bf16.mxu0 0
    %3359 = vmatpush2.bf16.msra.mxu0 0
    %3360 = vmatprep.subr.bf16.mxu0 0
    %3361 = vmatpush2.bf16.msra.mxu0 0
    %3362 = vmatprep.mubr.bf16.mxu0 0
    %3363 = vmatmul.mubr.bf16.gmra.mxu0 %v3325
    %v3364 = vpop.f32.mrf.mxu0
    %v3365 = vadd.f32 0.0, %v3364
    %v3366 = vpop.f32.mrf.mxu0
    %v3367 = vpop.f32.mrf.mxu0
    %v3368 = vpop.f32.mrf.mxu0
    %3369 = vdwg.mxu0
    %v3371 = vsel %vm1015, %v3227, 0
    %v3374 = vsel %vm1115, %v2743, 0
    %3376 = vmatprep.subr.bf16.mxu0 0
    %3377 = vmatpush1.bf16.msra.mxu0 0
    %3378 = vmatprep.subr.bf16.mxu0 0
    %3379 = vmatpush1.bf16.msra.mxu0 0
    %3380 = vmatprep.subr.bf16.mxu0 0
    %3381 = vmatpush1.bf16.msra.mxu0 0
    %3382 = vmatprep.subr.bf16.mxu0 0
    %3383 = vmatpush1.bf16.msra.mxu0 0
    %3384 = vmatprep.subr.bf16.mxu0 0
    %3385 = vmatpush1.bf16.msra.mxu0 0
    %3386 = vmatprep.subr.bf16.mxu0 0
    %3387 = vmatpush1.bf16.msra.mxu0 0
    %3388 = vmatprep.subr.bf16.mxu0 0
    %3389 = vmatpush1.bf16.msra.mxu0 0
    %3390 = vmatprep.subr.bf16.mxu0 0
    %3391 = vmatpush1.bf16.msra.mxu0 %v3374
    %3392 = vmatprep.subr.bf16.mxu0 0
    %3393 = vmatpush2.bf16.msra.mxu0 0
    %3394 = vmatprep.subr.bf16.mxu0 0
    %3395 = vmatpush2.bf16.msra.mxu0 0
    %3396 = vmatprep.subr.bf16.mxu0 0
    %3397 = vmatpush2.bf16.msra.mxu0 0
    %3398 = vmatprep.subr.bf16.mxu0 0
    %3399 = vmatpush2.bf16.msra.mxu0 0
    %3400 = vmatprep.subr.bf16.mxu0 0
    %3401 = vmatpush2.bf16.msra.mxu0 0
    %3402 = vmatprep.subr.bf16.mxu0 0
    %3403 = vmatpush2.bf16.msra.mxu0 0
    %3404 = vmatprep.subr.bf16.mxu0 0
    %3405 = vmatpush2.bf16.msra.mxu0 0
    %3406 = vmatprep.subr.bf16.mxu0 0
    %3407 = vmatpush2.bf16.msra.mxu0 0
    %3408 = vmatprep.mubr.bf16.mxu0 0
    %3409 = vmatmul.mubr.bf16.gmra.mxu0 %v3371
    %v3410 = vpop.f32.mrf.mxu0
    %v3411 = vadd.f32 0.0, %v3410
    %v3412 = vpop.f32.mrf.mxu0
    %v3413 = vpop.f32.mrf.mxu0
    %v3414 = vpop.f32.mrf.mxu0
    %3415 = vdwg.mxu0
    %v3417 = vsel %vm1015, %v3228, 0
    %v3420 = vsel %vm1115, %v2745, 0
    %3422 = vmatprep.subr.bf16.mxu0 0
    %3423 = vmatpush1.bf16.msra.mxu0 0
    %3424 = vmatprep.subr.bf16.mxu0 0
    %3425 = vmatpush1.bf16.msra.mxu0 0
    %3426 = vmatprep.subr.bf16.mxu0 0
    %3427 = vmatpush1.bf16.msra.mxu0 0
    %3428 = vmatprep.subr.bf16.mxu0 0
    %3429 = vmatpush1.bf16.msra.mxu0 0
    %3430 = vmatprep.subr.bf16.mxu0 0
    %3431 = vmatpush1.bf16.msra.mxu0 0
    %3432 = vmatprep.subr.bf16.mxu0 0
    %3433 = vmatpush1.bf16.msra.mxu0 0
    %3434 = vmatprep.subr.bf16.mxu0 0
    %3435 = vmatpush1.bf16.msra.mxu0 0
    %3436 = vmatprep.subr.bf16.mxu0 0
    %3437 = vmatpush1.bf16.msra.mxu0 %v3420
    %3438 = vmatprep.subr.bf16.mxu0 0
    %3439 = vmatpush2.bf16.msra.mxu0 0
    %3440 = vmatprep.subr.bf16.mxu0 0
    %3441 = vmatpush2.bf16.msra.mxu0 0
    %3442 = vmatprep.subr.bf16.mxu0 0
    %3443 = vmatpush2.bf16.msra.mxu0 0
    %3444 = vmatprep.subr.bf16.mxu0 0
    %3445 = vmatpush2.bf16.msra.mxu0 0
    %3446 = vmatprep.subr.bf16.mxu0 0
    %3447 = vmatpush2.bf16.msra.mxu0 0
    %3448 = vmatprep.subr.bf16.mxu0 0
    %3449 = vmatpush2.bf16.msra.mxu0 0
    %3450 = vmatprep.subr.bf16.mxu0 0
    %3451 = vmatpush2.bf16.msra.mxu0 0
    %3452 = vmatprep.subr.bf16.mxu0 0
    %3453 = vmatpush2.bf16.msra.mxu0 0
    %3454 = vmatprep.mubr.bf16.mxu0 0
    %3455 = vmatmul.mubr.bf16.gmra.mxu0 %v3417
    %v3456 = vpop.f32.mrf.mxu0
    %v3457 = vadd.f32 0.0, %v3456
    %v3458 = vpop.f32.mrf.mxu0
    %v3459 = vpop.f32.mrf.mxu0
    %v3460 = vpop.f32.mrf.mxu0
    %3461 = vdwg.mxu0
    %v3463 = vsel %vm1015, %v3229, 0
    %v3466 = vsel %vm1115, %v2747, 0
    %3468 = vmatprep.subr.bf16.mxu0 0
    %3469 = vmatpush1.bf16.msra.mxu0 0
    %3470 = vmatprep.subr.bf16.mxu0 0
    %3471 = vmatpush1.bf16.msra.mxu0 0
    %3472 = vmatprep.subr.bf16.mxu0 0
    %3473 = vmatpush1.bf16.msra.mxu0 0
    %3474 = vmatprep.subr.bf16.mxu0 0
    %3475 = vmatpush1.bf16.msra.mxu0 0
    %3476 = vmatprep.subr.bf16.mxu0 0
    %3477 = vmatpush1.bf16.msra.mxu0 0
    %3478 = vmatprep.subr.bf16.mxu0 0
    %3479 = vmatpush1.bf16.msra.mxu0 0
    %3480 = vmatprep.subr.bf16.mxu0 0
    %3481 = vmatpush1.bf16.msra.mxu0 0
    %3482 = vmatprep.subr.bf16.mxu0 0
    %3483 = vmatpush1.bf16.msra.mxu0 %v3466
    %3484 = vmatprep.subr.bf16.mxu0 0
    %3485 = vmatpush2.bf16.msra.mxu0 0
    %3486 = vmatprep.subr.bf16.mxu0 0
    %3487 = vmatpush2.bf16.msra.mxu0 0
    %3488 = vmatprep.subr.bf16.mxu0 0
    %3489 = vmatpush2.bf16.msra.mxu0 0
    %3490 = vmatprep.subr.bf16.mxu0 0
    %3491 = vmatpush2.bf16.msra.mxu0 0
    %3492 = vmatprep.subr.bf16.mxu0 0
    %3493 = vmatpush2.bf16.msra.mxu0 0
    %3494 = vmatprep.subr.bf16.mxu0 0
    %3495 = vmatpush2.bf16.msra.mxu0 0
    %3496 = vmatprep.subr.bf16.mxu0 0
    %3497 = vmatpush2.bf16.msra.mxu0 0
    %3498 = vmatprep.subr.bf16.mxu0 0
    %3499 = vmatpush2.bf16.msra.mxu0 0
    %3500 = vmatprep.mubr.bf16.mxu0 0
    %3501 = vmatmul.mubr.bf16.gmra.mxu0 %v3463
    %v3502 = vpop.f32.mrf.mxu0
    %v3503 = vadd.f32 0.0, %v3502
    %v3504 = vpop.f32.mrf.mxu0
    %v3505 = vpop.f32.mrf.mxu0
    %v3506 = vpop.f32.mrf.mxu0
    %3507 = vdwg.mxu0
    %v3509 = vsel %vm1015, %v3230, 0
    %v3512 = vsel %vm1115, %v2749, 0
    %3514 = vmatprep.subr.bf16.mxu0 0
    %3515 = vmatpush1.bf16.msra.mxu0 0
    %3516 = vmatprep.subr.bf16.mxu0 0
    %3517 = vmatpush1.bf16.msra.mxu0 0
    %3518 = vmatprep.subr.bf16.mxu0 0
    %3519 = vmatpush1.bf16.msra.mxu0 0
    %3520 = vmatprep.subr.bf16.mxu0 0
    %3521 = vmatpush1.bf16.msra.mxu0 0
    %3522 = vmatprep.subr.bf16.mxu0 0
    %3523 = vmatpush1.bf16.msra.mxu0 0
    %3524 = vmatprep.subr.bf16.mxu0 0
    %3525 = vmatpush1.bf16.msra.mxu0 0
    %3526 = vmatprep.subr.bf16.mxu0 0
    %3527 = vmatpush1.bf16.msra.mxu0 0
    %3528 = vmatprep.subr.bf16.mxu0 0
    %3529 = vmatpush1.bf16.msra.mxu0 %v3512
    %3530 = vmatprep.subr.bf16.mxu0 0
    %3531 = vmatpush2.bf16.msra.mxu0 0
    %3532 = vmatprep.subr.bf16.mxu0 0
    %3533 = vmatpush2.bf16.msra.mxu0 0
    %3534 = vmatprep.subr.bf16.mxu0 0
    %3535 = vmatpush2.bf16.msra.mxu0 0
    %3536 = vmatprep.subr.bf16.mxu0 0
    %3537 = vmatpush2.bf16.msra.mxu0 0
    %3538 = vmatprep.subr.bf16.mxu0 0
    %3539 = vmatpush2.bf16.msra.mxu0 0
    %3540 = vmatprep.subr.bf16.mxu0 0
    %3541 = vmatpush2.bf16.msra.mxu0 0
    %3542 = vmatprep.subr.bf16.mxu0 0
    %3543 = vmatpush2.bf16.msra.mxu0 0
    %3544 = vmatprep.subr.bf16.mxu0 0
    %3545 = vmatpush2.bf16.msra.mxu0 0
    %3546 = vmatprep.mubr.bf16.mxu0 0
    %3547 = vmatmul.mubr.bf16.gmra.mxu0 %v3509
    %v3548 = vpop.f32.mrf.mxu0
    %v3549 = vadd.f32 0.0, %v3548
    %v3550 = vpop.f32.mrf.mxu0
    %v3551 = vpop.f32.mrf.mxu0
    %v3552 = vpop.f32.mrf.mxu0
    %3553 = vdwg.mxu0
    %v3555 = vsel %vm1015, %v3231, 0
    %v3558 = vsel %vm1115, %v2751, 0
    %3560 = vmatprep.subr.bf16.mxu0 0
    %3561 = vmatpush1.bf16.msra.mxu0 0
    %3562 = vmatprep.subr.bf16.mxu0 0
    %3563 = vmatpush1.bf16.msra.mxu0 0
    %3564 = vmatprep.subr.bf16.mxu0 0
    %3565 = vmatpush1.bf16.msra.mxu0 0
    %3566 = vmatprep.subr.bf16.mxu0 0
    %3567 = vmatpush1.bf16.msra.mxu0 0
    %3568 = vmatprep.subr.bf16.mxu0 0
    %3569 = vmatpush1.bf16.msra.mxu0 0
    %3570 = vmatprep.subr.bf16.mxu0 0
    %3571 = vmatpush1.bf16.msra.mxu0 0
    %3572 = vmatprep.subr.bf16.mxu0 0
    %3573 = vmatpush1.bf16.msra.mxu0 0
    %3574 = vmatprep.subr.bf16.mxu0 0
    %3575 = vmatpush1.bf16.msra.mxu0 %v3558
    %3576 = vmatprep.subr.bf16.mxu0 0
    %3577 = vmatpush2.bf16.msra.mxu0 0
    %3578 = vmatprep.subr.bf16.mxu0 0
    %3579 = vmatpush2.bf16.msra.mxu0 0
    %3580 = vmatprep.subr.bf16.mxu0 0
    %3581 = vmatpush2.bf16.msra.mxu0 0
    %3582 = vmatprep.subr.bf16.mxu0 0
    %3583 = vmatpush2.bf16.msra.mxu0 0
    %3584 = vmatprep.subr.bf16.mxu0 0
    %3585 = vmatpush2.bf16.msra.mxu0 0
    %3586 = vmatprep.subr.bf16.mxu0 0
    %3587 = vmatpush2.bf16.msra.mxu0 0
    %3588 = vmatprep.subr.bf16.mxu0 0
    %3589 = vmatpush2.bf16.msra.mxu0 0
    %3590 = vmatprep.subr.bf16.mxu0 0
    %3591 = vmatpush2.bf16.msra.mxu0 0
    %3592 = vmatprep.mubr.bf16.mxu0 0
    %3593 = vmatmul.mubr.bf16.gmra.mxu0 %v3555
    %v3594 = vpop.f32.mrf.mxu0
    %v3595 = vadd.f32 0.0, %v3594
    %v3596 = vpop.f32.mrf.mxu0
    %v3597 = vpop.f32.mrf.mxu0
    %v3598 = vpop.f32.mrf.mxu0
    %3599 = vdwg.mxu0
    %3602 = vrot.lane.b32.xlu0 %v3365, 32
    %v3603 = vpop.permute.xlu0 %3602
    %3604 = vrot.lane.b32.xlu0 %v3411, 32
    %v3605 = vpop.permute.xlu0 %3604
    %3610 = vrot.lane.b32.xlu0 %v3457, 64
    %v3611 = vpop.permute.xlu0 %3610
    %3612 = vrot.lane.b32.xlu0 %v3503, 64
    %v3613 = vpop.permute.xlu0 %3612
    %3618 = vrot.lane.b32.xlu0 %v3549, 96
    %v3619 = vpop.permute.xlu0 %3618
    %3620 = vrot.lane.b32.xlu0 %v3595, 96
    %v3621 = vpop.permute.xlu0 %3620
    %v3624 = vsel %vm630, %v3273, %v3603
    %v3625 = vsel %vm630, %v3319, %v3605
    %v3626 = vsel %vm1507, %v3624, %v3611
    %v3627 = vsel %vm1507, %v3625, %v3613
    %v3628 = vsel %vm1510, %v3626, %v3619
    %v3629 = vsel %vm1510, %v3627, %v3621
    %v3630 = vpack.c.bf16 %v3629, %v3628
    %s3631 = scalar_lea.vmem %s7, 64
    %v3632 = vld [vmem:[%s3631] sm:$0xf]
    %v3633 = vld [vmem:[%s3631 + $0x4] sm:$0xf]
    %v3634 = vld [vmem:[%s3631 + $0x8] sm:$0xf]
    %v3635 = vld [vmem:[%s3631 + $0xc] sm:$0xf]
    %v3636 = vld [vmem:[%s3631 + $0x10] sm:$0xf]
    %v3637 = vld [vmem:[%s3631 + $0x14] sm:$0xf]
    %v3638 = vld [vmem:[%s3631 + $0x18] sm:$0xf]
    %v3639 = vld [vmem:[%s3631 + $0x1c] sm:$0xf]
    %v3640 = vld [vmem:[%s3631 + $0x20] sm:$0xf]
    %v3641 = vld [vmem:[%s3631 + $0x24] sm:$0xf]
    %v3642 = vld [vmem:[%s3631 + $0x28] sm:$0xf]
    %v3643 = vld [vmem:[%s3631 + $0x2c] sm:$0xf]
    %v3644 = vld [vmem:[%s3631 + $0x30] sm:$0xf]
    %v3645 = vld [vmem:[%s3631 + $0x34] sm:$0xf]
    %v3646 = vld [vmem:[%s3631 + $0x38] sm:$0xf]
    %v3647 = vld [vmem:[%s3631 + $0x3c] sm:$0xf]
    %s3648 = scalar_lea.vmem %s8, 1
    %v3649 = vld [vmem:[%s3648] sm:$0x1]
    %v3651 = vlaneseq
    %v3652 = vshrl.u32 %v3651, 7
    %v3653 = vsub.s32 0, %v3652
    %v3654 = vrot.slane %v3649, %v3653
    %v3672 = vunpack.c.l.b16 %v3632
    %v3673 = vunpack.c.l.b16 %v3633
    %v3674 = vunpack.c.l.b16 %v3634
    %v3675 = vunpack.c.l.b16 %v3635
    %v3676 = vunpack.c.l.b16 %v3636
    %v3677 = vunpack.c.l.b16 %v3637
    %v3678 = vunpack.c.l.b16 %v3638
    %v3679 = vunpack.c.l.b16 %v3639
    %v3680 = vunpack.c.l.b16 %v3640
    %v3681 = vunpack.c.l.b16 %v3641
    %v3682 = vunpack.c.l.b16 %v3642
    %v3683 = vunpack.c.l.b16 %v3643
    %v3684 = vunpack.c.l.b16 %v3644
    %v3685 = vunpack.c.l.b16 %v3645
    %v3686 = vunpack.c.l.b16 %v3646
    %v3687 = vunpack.c.l.b16 %v3647
    %v3688 = vpack.c.b16 %v3673, %v3672
    %v3689 = vpack.c.b16 %v3675, %v3674
    %v3690 = vpack.c.b16 %v3677, %v3676
    %v3691 = vpack.c.b16 %v3679, %v3678
    %v3692 = vpack.c.b16 %v3681, %v3680
    %v3693 = vpack.c.b16 %v3683, %v3682
    %v3694 = vpack.c.b16 %v3685, %v3684
    %v3695 = vpack.c.b16 %v3687, %v3686
    %3704 = vmatprep.subr.bf16.mxu0 0
    %3705 = vmatpush1.bf16.msra.mxu0 %v3695
    %3706 = vmatprep.subr.bf16.mxu0 0
    %3707 = vmatpush1.bf16.msra.mxu0 %v3694
    %3708 = vmatprep.subr.bf16.mxu0 0
    %3709 = vmatpush1.bf16.msra.mxu0 %v3693
    %3710 = vmatprep.subr.bf16.mxu0 0
    %3711 = vmatpush1.bf16.msra.mxu0 %v3692
    %3712 = vmatprep.subr.bf16.mxu0 0
    %3713 = vmatpush1.bf16.msra.mxu0 %v3691
    %3714 = vmatprep.subr.bf16.mxu0 0
    %3715 = vmatpush1.bf16.msra.mxu0 %v3690
    %3716 = vmatprep.subr.bf16.mxu0 0
    %3717 = vmatpush1.bf16.msra.mxu0 %v3689
    %3718 = vmatprep.subr.bf16.mxu0 0
    %3719 = vmatpush1.bf16.msra.mxu0 %v3688
    %3720 = vmatprep.subr.bf16.mxu0 0
    %3721 = vmatpush2.bf16.msra.mxu0 0
    %3722 = vmatprep.subr.bf16.mxu0 0
    %3723 = vmatpush2.bf16.msra.mxu0 0
    %3724 = vmatprep.subr.bf16.mxu0 0
    %3725 = vmatpush2.bf16.msra.mxu0 0
    %3726 = vmatprep.subr.bf16.mxu0 0
    %3727 = vmatpush2.bf16.msra.mxu0 0
    %3728 = vmatprep.subr.bf16.mxu0 0
    %3729 = vmatpush2.bf16.msra.mxu0 0
    %3730 = vmatprep.subr.bf16.mxu0 0
    %3731 = vmatpush2.bf16.msra.mxu0 0
    %3732 = vmatprep.subr.bf16.mxu0 0
    %3733 = vmatpush2.bf16.msra.mxu0 0
    %3734 = vmatprep.subr.bf16.mxu0 0
    %3735 = vmatpush2.bf16.msra.mxu0 0
    %3736 = vmatprep.mubr.bf16.mxu0 0
    %3737 = vmatmul.mubr.bf16.gmra.mxu0 %v3630
    %v3738 = vpop.f32.mrf.mxu0
    %v3739 = vadd.f32 %v3654, %v3738
    %v3740 = vpop.f32.mrf.mxu0
    %v3741 = vpop.f32.mrf.mxu0
    %v3742 = vadd.f32 %v3654, %v3741
    %v3743 = vpop.f32.mrf.mxu0
    %3744 = vdwg.mxu0
    %v3745 = vadd.f32 %v2390, %v3739
    %v3746 = vadd.f32 %v2391, %v3742
    %s3747 = scalar_lea.vmem %s9, 1
    %v3748 = vld [vmem:[%s3747] sm:$0x1]
    %s3749 = scalar_lea.vmem %s10, 1
    %v3750 = vld [vmem:[%s3749] sm:$0x1]
    %3751 = vadd.xlane.f32.xlu0 %v3745
    %v3752 = vpop.xlane.xlu0 %3751
    %3753 = vadd.xlane.f32.xlu0 %v3746
    %v3754 = vpop.xlane.xlu0 %3753
    %v3755 = vmul.f32 %v3752, %v279
    %v3756 = vmul.f32 %v3754, %v279
    %v3757 = vsub.f32 %v3745, %v3755
    %v3758 = vsub.f32 %v3746, %v3756
    %v3759 = vmul.f32 %v3757, %v3757
    %v3760 = vmul.f32 %v3758, %v3758
    %3761 = vadd.xlane.f32.xlu0 %v3759
    %v3762 = vpop.xlane.xlu0 %3761
    %3763 = vadd.xlane.f32.xlu0 %v3760
    %v3764 = vpop.xlane.xlu0 %3763
    %v3765 = vmul.f32 %v3762, %v279
    %v3766 = vmul.f32 %v3764, %v279
    %v3767 = vadd.f32 %v3765, 1e-06
    %v3768 = vadd.f32 %v3766, 1e-06
    %v3769 = vrsqrt.pop %v3767
    %v3770 = vrsqrt.pop %v3768
    %v3771 = vmul.f32 %v3757, %v3769
    %v3772 = vmul.f32 %v3758, %v3770
    %v3774 = vlaneseq
    %v3775 = vshrl.u32 %v3774, 7
    %v3776 = vsub.s32 0, %v3775
    %v3777 = vrot.slane %v3748, %v3776
    %v3779 = vmul.f32 %v3771, %v3777
    %v3780 = vmul.f32 %v3772, %v3777
    %v3782 = vlaneseq
    %v3783 = vshrl.u32 %v3782, 7
    %v3784 = vsub.s32 0, %v3783
    %v3785 = vrot.slane %v3750, %v3784
    %v3787 = vadd.f32 %v3779, %v3785
    %v3788 = vadd.f32 %v3780, %v3785
    %v3789 = vpack.c.bf16 %v3788, %v3787
    %s3790 = scalar_lea.vmem %s11, 256
    %v3791 = vld [vmem:[%s3790] sm:$0xff]
    %v3792 = vld [vmem:[%s3790 + $0x8] sm:$0xff]
    %v3793 = vld [vmem:[%s3790 + $0x10] sm:$0xff]
    %v3794 = vld [vmem:[%s3790 + $0x18] sm:$0xff]
    %v3795 = vld [vmem:[%s3790 + $0x20] sm:$0xff]
    %v3796 = vld [vmem:[%s3790 + $0x28] sm:$0xff]
    %v3797 = vld [vmem:[%s3790 + $0x30] sm:$0xff]
    %v3798 = vld [vmem:[%s3790 + $0x38] sm:$0xff]
    %v3799 = vld [vmem:[%s3790 + $0x40] sm:$0xff]
    %v3800 = vld [vmem:[%s3790 + $0x48] sm:$0xff]
    %v3801 = vld [vmem:[%s3790 + $0x50] sm:$0xff]
    %v3802 = vld [vmem:[%s3790 + $0x58] sm:$0xff]
    %v3803 = vld [vmem:[%s3790 + $0x60] sm:$0xff]
    %v3804 = vld [vmem:[%s3790 + $0x68] sm:$0xff]
    %v3805 = vld [vmem:[%s3790 + $0x70] sm:$0xff]
    %v3806 = vld [vmem:[%s3790 + $0x78] sm:$0xff]
    %v3807 = vld [vmem:[%s3790 + $0x80] sm:$0xff]
    %v3808 = vld [vmem:[%s3790 + $0x88] sm:$0xff]
    %v3809 = vld [vmem:[%s3790 + $0x90] sm:$0xff]
    %v3810 = vld [vmem:[%s3790 + $0x98] sm:$0xff]
    %v3811 = vld [vmem:[%s3790 + $0xa0] sm:$0xff]
    %v3812 = vld [vmem:[%s3790 + $0xa8] sm:$0xff]
    %v3813 = vld [vmem:[%s3790 + $0xb0] sm:$0xff]
    %v3814 = vld [vmem:[%s3790 + $0xb8] sm:$0xff]
    %v3815 = vld [vmem:[%s3790 + $0xc0] sm:$0xff]
    %v3816 = vld [vmem:[%s3790 + $0xc8] sm:$0xff]
    %v3817 = vld [vmem:[%s3790 + $0xd0] sm:$0xff]
    %v3818 = vld [vmem:[%s3790 + $0xd8] sm:$0xff]
    %v3819 = vld [vmem:[%s3790 + $0xe0] sm:$0xff]
    %v3820 = vld [vmem:[%s3790 + $0xe8] sm:$0xff]
    %v3821 = vld [vmem:[%s3790 + $0xf0] sm:$0xff]
    %v3822 = vld [vmem:[%s3790 + $0xf8] sm:$0xff]
    %s3823 = scalar_lea.vmem %s12, 4
    %v3824 = vld [vmem:[%s3823] sm:$0xf]
    %v3826 = vlaneseq
    %v3827 = vshrl.u32 %v3826, 7
    %v3828 = vsub.s32 0, %v3827
    %v3829 = vrot.slane %v3824, %v3828
    %v3830 = vlaneseq
    %v3831 = vshrl.u32 %v3830, 7
    %v3832 = vsub.s32 1, %v3831
    %v3833 = vrot.slane %v3824, %v3832
    %v3834 = vlaneseq
    %v3835 = vshrl.u32 %v3834, 7
    %v3836 = vsub.s32 2, %v3835
    %v3837 = vrot.slane %v3824, %v3836
    %v3838 = vlaneseq
    %v3839 = vshrl.u32 %v3838, 7
    %v3840 = vsub.s32 3, %v3839
    %v3841 = vrot.slane %v3824, %v3840
    %v3878 = vunpack.c.l.b16 %v3791
    %v3879 = vunpack.c.h.b16 %v3791
    %v3880 = vunpack.c.l.b16 %v3792
    %v3881 = vunpack.c.h.b16 %v3792
    %v3882 = vunpack.c.l.b16 %v3793
    %v3883 = vunpack.c.h.b16 %v3793
    %v3884 = vunpack.c.l.b16 %v3794
    %v3885 = vunpack.c.h.b16 %v3794
    %v3886 = vunpack.c.l.b16 %v3795
    %v3887 = vunpack.c.h.b16 %v3795
    %v3888 = vunpack.c.l.b16 %v3796
    %v3889 = vunpack.c.h.b16 %v3796
    %v3890 = vunpack.c.l.b16 %v3797
    %v3891 = vunpack.c.h.b16 %v3797
    %v3892 = vunpack.c.l.b16 %v3798
    %v3893 = vunpack.c.h.b16 %v3798
    %v3894 = vunpack.c.l.b16 %v3799
    %v3895 = vunpack.c.h.b16 %v3799
    %v3896 = vunpack.c.l.b16 %v3800
    %v3897 = vunpack.c.h.b16 %v3800
    %v3898 = vunpack.c.l.b16 %v3801
    %v3899 = vunpack.c.h.b16 %v3801
    %v3900 = vunpack.c.l.b16 %v3802
    %v3901 = vunpack.c.h.b16 %v3802
    %v3902 = vunpack.c.l.b16 %v3803
    %v3903 = vunpack.c.h.b16 %v3803
    %v3904 = vunpack.c.l.b16 %v3804
    %v3905 = vunpack.c.h.b16 %v3804
    %v3906 = vunpack.c.l.b16 %v3805
    %v3907 = vunpack.c.h.b16 %v3805
    %v3908 = vunpack.c.l.b16 %v3806
    %v3909 = vunpack.c.h.b16 %v3806
    %v3910 = vunpack.c.l.b16 %v3807
    %v3911 = vunpack.c.h.b16 %v3807
    %v3912 = vunpack.c.l.b16 %v3808
    %v3913 = vunpack.c.h.b16 %v3808
    %v3914 = vunpack.c.l.b16 %v3809
    %v3915 = vunpack.c.h.b16 %v3809
    %v3916 = vunpack.c.l.b16 %v3810
    %v3917 = vunpack.c.h.b16 %v3810
    %v3918 = vunpack.c.l.b16 %v3811
    %v3919 = vunpack.c.h.b16 %v3811
    %v3920 = vunpack.c.l.b16 %v3812
    %v3921 = vunpack.c.h.b16 %v3812
    %v3922 = vunpack.c.l.b16 %v3813
    %v3923 = vunpack.c.h.b16 %v3813
    %v3924 = vunpack.c.l.b16 %v3814
    %v3925 = vunpack.c.h.b16 %v3814
    %v3926 = vunpack.c.l.b16 %v3815
    %v3927 = vunpack.c.h.b16 %v3815
    %v3928 = vunpack.c.l.b16 %v3816
    %v3929 = vunpack.c.h.b16 %v3816
    %v3930 = vunpack.c.l.b16 %v3817
    %v3931 = vunpack.c.h.b16 %v3817
    %v3932 = vunpack.c.l.b16 %v3818
    %v3933 = vunpack.c.h.b16 %v3818
    %v3934 = vunpack.c.l.b16 %v3819
    %v3935 = vunpack.c.h.b16 %v3819
    %v3936 = vunpack.c.l.b16 %v3820
    %v3937 = vunpack.c.h.b16 %v3820
    %v3938 = vunpack.c.l.b16 %v3821
    %v3939 = vunpack.c.h.b16 %v3821
    %v3940 = vunpack.c.l.b16 %v3822
    %v3941 = vunpack.c.h.b16 %v3822
    %v3942 = vpack.c.b16 %v3882, %v3878
    %v3943 = vpack.c.b16 %v3883, %v3879
    %v3944 = vpack.c.b16 %v3884, %v3880
    %v3945 = vpack.c.b16 %v3885, %v3881
    %v3946 = vpack.c.b16 %v3890, %v3886
    %v3947 = vpack.c.b16 %v3891, %v3887
    %v3948 = vpack.c.b16 %v3892, %v3888
    %v3949 = vpack.c.b16 %v3893, %v3889
    %v3950 = vpack.c.b16 %v3898, %v3894
    %v3951 = vpack.c.b16 %v3899, %v3895
    %v3952 = vpack.c.b16 %v3900, %v3896
    %v3953 = vpack.c.b16 %v3901, %v3897
    %v3954 = vpack.c.b16 %v3906, %v3902
    %v3955 = vpack.c.b16 %v3907, %v3903
    %v3956 = vpack.c.b16 %v3908, %v3904
    %v3957 = vpack.c.b16 %v3909, %v3905
    %v3958 = vpack.c.b16 %v3914, %v3910
    %v3959 = vpack.c.b16 %v3915, %v3911
    %v3960 = vpack.c.b16 %v3916, %v3912
    %v3961 = vpack.c.b16 %v3917, %v3913
    %v3962 = vpack.c.b16 %v3922, %v3918
    %v3963 = vpack.c.b16 %v3923, %v3919
    %v3964 = vpack.c.b16 %v3924, %v3920
    %v3965 = vpack.c.b16 %v3925, %v3921
    %v3966 = vpack.c.b16 %v3930, %v3926
    %v3967 = vpack.c.b16 %v3931, %v3927
    %v3968 = vpack.c.b16 %v3932, %v3928
    %v3969 = vpack.c.b16 %v3933, %v3929
    %v3970 = vpack.c.b16 %v3938, %v3934
    %v3971 = vpack.c.b16 %v3939, %v3935
    %v3972 = vpack.c.b16 %v3940, %v3936
    %v3973 = vpack.c.b16 %v3941, %v3937
    %4006 = vmatprep.subr.bf16.mxu0 %v3971
    %4007 = vmatpush1.bf16.msra.mxu0 %v3970
    %4008 = vmatprep.subr.bf16.mxu0 %v3967
    %4009 = vmatpush1.bf16.msra.mxu0 %v3966
    %4010 = vmatprep.subr.bf16.mxu0 %v3963
    %4011 = vmatpush1.bf16.msra.mxu0 %v3962
    %4012 = vmatprep.subr.bf16.mxu0 %v3959
    %4013 = vmatpush1.bf16.msra.mxu0 %v3958
    %4014 = vmatprep.subr.bf16.mxu0 %v3955
    %4015 = vmatpush1.bf16.msra.mxu0 %v3954
    %4016 = vmatprep.subr.bf16.mxu0 %v3951
    %4017 = vmatpush1.bf16.msra.mxu0 %v3950
    %4018 = vmatprep.subr.bf16.mxu0 %v3947
    %4019 = vmatpush1.bf16.msra.mxu0 %v3946
    %4020 = vmatprep.subr.bf16.mxu0 %v3943
    %4021 = vmatpush1.bf16.msra.mxu0 %v3942
    %4022 = vmatprep.subr.bf16.mxu0 0
    %4023 = vmatpush2.bf16.msra.mxu0 0
    %4024 = vmatprep.subr.bf16.mxu0 0
    %4025 = vmatpush2.bf16.msra.mxu0 0
    %4026 = vmatprep.subr.bf16.mxu0 0
    %4027 = vmatpush2.bf16.msra.mxu0 0
    %4028 = vmatprep.subr.bf16.mxu0 0
    %4029 = vmatpush2.bf16.msra.mxu0 0
    %4030 = vmatprep.subr.bf16.mxu0 0
    %4031 = vmatpush2.bf16.msra.mxu0 0
    %4032 = vmatprep.subr.bf16.mxu0 0
    %4033 = vmatpush2.bf16.msra.mxu0 0
    %4034 = vmatprep.subr.bf16.mxu0 0
    %4035 = vmatpush2.bf16.msra.mxu0 0
    %4036 = vmatprep.subr.bf16.mxu0 0
    %4037 = vmatpush2.bf16.msra.mxu0 0
    %4038 = vmatprep.mubr.bf16.mxu0 0
    %4039 = vmatmul.mubr.bf16.gmra.mxu0 %v3789
    %v4040 = vpop.f32.mrf.mxu0
    %v4041 = vadd.f32 %v3829, %v4040
    %v4042 = vpop.f32.mrf.mxu0
    %v4043 = vadd.f32 %v3833, %v4042
    %v4044 = vpop.f32.mrf.mxu0
    %v4045 = vadd.f32 %v3829, %v4044
    %v4046 = vpop.f32.mrf.mxu0
    %v4047 = vadd.f32 %v3833, %v4046
    %4048 = vdwg.mxu0
    %4049 = vmatprep.subr.bf16.mxu0 %v3973
    %4050 = vmatpush1.bf16.msra.mxu0 %v3972
    %4051 = vmatprep.subr.bf16.mxu0 %v3969
    %4052 = vmatpush1.bf16.msra.mxu0 %v3968
    %4053 = vmatprep.subr.bf16.mxu0 %v3965
    %4054 = vmatpush1.bf16.msra.mxu0 %v3964
    %4055 = vmatprep.subr.bf16.mxu0 %v3961
    %4056 = vmatpush1.bf16.msra.mxu0 %v3960
    %4057 = vmatprep.subr.bf16.mxu0 %v3957
    %4058 = vmatpush1.bf16.msra.mxu0 %v3956
    %4059 = vmatprep.subr.bf16.mxu0 %v3953
    %4060 = vmatpush1.bf16.msra.mxu0 %v3952
    %4061 = vmatprep.subr.bf16.mxu0 %v3949
    %4062 = vmatpush1.bf16.msra.mxu0 %v3948
    %4063 = vmatprep.subr.bf16.mxu0 %v3945
    %4064 = vmatpush1.bf16.msra.mxu0 %v3944
    %4065 = vmatprep.subr.bf16.mxu0 0
    %4066 = vmatpush2.bf16.msra.mxu0 0
    %4067 = vmatprep.subr.bf16.mxu0 0
    %4068 = vmatpush2.bf16.msra.mxu0 0
    %4069 = vmatprep.subr.bf16.mxu0 0
    %4070 = vmatpush2.bf16.msra.mxu0 0
    %4071 = vmatprep.subr.bf16.mxu0 0
    %4072 = vmatpush2.bf16.msra.mxu0 0
    %4073 = vmatprep.subr.bf16.mxu0 0
    %4074 = vmatpush2.bf16.msra.mxu0 0
    %4075 = vmatprep.subr.bf16.mxu0 0
    %4076 = vmatpush2.bf16.msra.mxu0 0
    %4077 = vmatprep.subr.bf16.mxu0 0
    %4078 = vmatpush2.bf16.msra.mxu0 0
    %4079 = vmatprep.subr.bf16.mxu0 0
    %4080 = vmatpush2.bf16.msra.mxu0 0
    %4081 = vmatprep.mubr.bf16.mxu0 0
    %4082 = vmatmul.mubr.bf16.gmra.mxu0 %v3789
    %v4083 = vpop.f32.mrf.mxu0
    %v4084 = vadd.f32 %v3837, %v4083
    %v4085 = vpop.f32.mrf.mxu0
    %v4086 = vadd.f32 %v3841, %v4085
    %v4087 = vpop.f32.mrf.mxu0
    %v4088 = vadd.f32 %v3837, %v4087
    %v4089 = vpop.f32.mrf.mxu0
    %v4090 = vadd.f32 %v3841, %v4089
    %4091 = vdwg.mxu0
    %v4092 = vmul.f32 %v4041, %v4041
    %v4093 = vmul.f32 %v4043, %v4043
    %v4094 = vmul.f32 %v4084, %v4084
    %v4095 = vmul.f32 %v4086, %v4086
    %v4096 = vmul.f32 %v4045, %v4045
    %v4097 = vmul.f32 %v4047, %v4047
    %v4098 = vmul.f32 %v4088, %v4088
    %v4099 = vmul.f32 %v4090, %v4090
    %v4100 = vmul.f32 %v4041, %v4092
    %v4101 = vmul.f32 %v4043, %v4093
    %v4102 = vmul.f32 %v4084, %v4094
    %v4103 = vmul.f32 %v4086, %v4095
    %v4104 = vmul.f32 %v4045, %v4096
    %v4105 = vmul.f32 %v4047, %v4097
    %v4106 = vmul.f32 %v4088, %v4098
    %v4107 = vmul.f32 %v4090, %v4099
    %v4108 = vmul.f32 %v4100, 0.044715
    %v4109 = vmul.f32 %v4101, 0.044715
    %v4110 = vmul.f32 %v4102, 0.044715
    %v4111 = vmul.f32 %v4103, 0.044715
    %v4112 = vmul.f32 %v4104, 0.044715
    %v4113 = vmul.f32 %v4105, 0.044715
    %v4114 = vmul.f32 %v4106, 0.044715
    %v4115 = vmul.f32 %v4107, 0.044715
    %v4116 = vadd.f32 %v4041, %v4108
    %v4117 = vadd.f32 %v4043, %v4109
    %v4118 = vadd.f32 %v4084, %v4110
    %v4119 = vadd.f32 %v4086, %v4111
    %v4120 = vadd.f32 %v4045, %v4112
    %v4121 = vadd.f32 %v4047, %v4113
    %v4122 = vadd.f32 %v4088, %v4114
    %v4123 = vadd.f32 %v4090, %v4115
    %v4124 = vmul.f32 %v4116, 0.7978846
    %v4125 = vmul.f32 %v4117, 0.7978846
    %v4126 = vmul.f32 %v4118, 0.7978846
    %v4127 = vmul.f32 %v4119, 0.7978846
    %v4128 = vmul.f32 %v4120, 0.7978846
    %v4129 = vmul.f32 %v4121, 0.7978846
    %v4130 = vmul.f32 %v4122, 0.7978846
    %v4131 = vmul.f32 %v4123, 0.7978846
    %v4132 = vtanh.pop %v4124
    %v4133 = vtanh.pop %v4125
    %v4134 = vtanh.pop %v4126
    %v4135 = vtanh.pop %v4127
    %v4136 = vtanh.pop %v4128
    %v4137 = vtanh.pop %v4129
    %v4138 = vtanh.pop %v4130
    %v4139 = vtanh.pop %v4131
    %v4140 = vadd.f32 %v4132, 1.0
    %v4141 = vadd.f32 %v4133, 1.0
    %v4142 = vadd.f32 %v4134, 1.0
    %v4143 = vadd.f32 %v4135, 1.0
    %v4144 = vadd.f32 %v4136, 1.0
    %v4145 = vadd.f32 %v4137, 1.0
    %v4146 = vadd.f32 %v4138, 1.0
    %v4147 = vadd.f32 %v4139, 1.0
    %v4148 = vmul.f32 %v4140, 0.5
    %v4149 = vmul.f32 %v4141, 0.5
    %v4150 = vmul.f32 %v4142, 0.5
    %v4151 = vmul.f32 %v4143, 0.5
    %v4152 = vmul.f32 %v4144, 0.5
    %v4153 = vmul.f32 %v4145, 0.5
    %v4154 = vmul.f32 %v4146, 0.5
    %v4155 = vmul.f32 %v4147, 0.5
    %v4156 = vmul.f32 %v4041, %v4148
    %v4157 = vmul.f32 %v4043, %v4149
    %v4158 = vmul.f32 %v4084, %v4150
    %v4159 = vmul.f32 %v4086, %v4151
    %v4160 = vmul.f32 %v4045, %v4152
    %v4161 = vmul.f32 %v4047, %v4153
    %v4162 = vmul.f32 %v4088, %v4154
    %v4163 = vmul.f32 %v4090, %v4155
    %v4164 = vpack.c.bf16 %v4160, %v4156
    %v4165 = vpack.c.bf16 %v4161, %v4157
    %v4166 = vpack.c.bf16 %v4162, %v4158
    %v4167 = vpack.c.bf16 %v4163, %v4159
    %s4168 = scalar_lea.vmem [#allocation4], 256
    %v4169 = vld [vmem:[%s4168] sm:$0xf]
    %v4170 = vld [vmem:[%s4168 + $0x4] sm:$0xf]
    %v4171 = vld [vmem:[%s4168 + $0x8] sm:$0xf]
    %v4172 = vld [vmem:[%s4168 + $0xc] sm:$0xf]
    %v4173 = vld [vmem:[%s4168 + $0x10] sm:$0xf]
    %v4174 = vld [vmem:[%s4168 + $0x14] sm:$0xf]
    %v4175 = vld [vmem:[%s4168 + $0x18] sm:$0xf]
    %v4176 = vld [vmem:[%s4168 + $0x1c] sm:$0xf]
    %v4177 = vld [vmem:[%s4168 + $0x20] sm:$0xf]
    %v4178 = vld [vmem:[%s4168 + $0x24] sm:$0xf]
    %v4179 = vld [vmem:[%s4168 + $0x28] sm:$0xf]
    %v4180 = vld [vmem:[%s4168 + $0x2c] sm:$0xf]
    %v4181 = vld [vmem:[%s4168 + $0x30] sm:$0xf]
    %v4182 = vld [vmem:[%s4168 + $0x34] sm:$0xf]
    %v4183 = vld [vmem:[%s4168 + $0x38] sm:$0xf]
    %v4184 = vld [vmem:[%s4168 + $0x3c] sm:$0xf]
    %v4185 = vld [vmem:[%s4168 + $0x40] sm:$0xf]
    %v4186 = vld [vmem:[%s4168 + $0x44] sm:$0xf]
    %v4187 = vld [vmem:[%s4168 + $0x48] sm:$0xf]
    %v4188 = vld [vmem:[%s4168 + $0x4c] sm:$0xf]
    %v4189 = vld [vmem:[%s4168 + $0x50] sm:$0xf]
    %v4190 = vld [vmem:[%s4168 + $0x54] sm:$0xf]
    %v4191 = vld [vmem:[%s4168 + $0x58] sm:$0xf]
    %v4192 = vld [vmem:[%s4168 + $0x5c] sm:$0xf]
    %v4193 = vld [vmem:[%s4168 + $0x60] sm:$0xf]
    %v4194 = vld [vmem:[%s4168 + $0x64] sm:$0xf]
    %v4195 = vld [vmem:[%s4168 + $0x68] sm:$0xf]
    %v4196 = vld [vmem:[%s4168 + $0x6c] sm:$0xf]
    %v4197 = vld [vmem:[%s4168 + $0x70] sm:$0xf]
    %v4198 = vld [vmem:[%s4168 + $0x74] sm:$0xf]
    %v4199 = vld [vmem:[%s4168 + $0x78] sm:$0xf]
    %v4200 = vld [vmem:[%s4168 + $0x7c] sm:$0xf]
    %v4201 = vld [vmem:[%s4168 + $0x80] sm:$0xf]
    %v4202 = vld [vmem:[%s4168 + $0x84] sm:$0xf]
    %v4203 = vld [vmem:[%s4168 + $0x88] sm:$0xf]
    %v4204 = vld [vmem:[%s4168 + $0x8c] sm:$0xf]
    %v4205 = vld [vmem:[%s4168 + $0x90] sm:$0xf]
    %v4206 = vld [vmem:[%s4168 + $0x94] sm:$0xf]
    %v4207 = vld [vmem:[%s4168 + $0x98] sm:$0xf]
    %v4208 = vld [vmem:[%s4168 + $0x9c] sm:$0xf]
    %v4209 = vld [vmem:[%s4168 + $0xa0] sm:$0xf]
    %v4210 = vld [vmem:[%s4168 + $0xa4] sm:$0xf]
    %v4211 = vld [vmem:[%s4168 + $0xa8] sm:$0xf]
    %v4212 = vld [vmem:[%s4168 + $0xac] sm:$0xf]
    %v4213 = vld [vmem:[%s4168 + $0xb0] sm:$0xf]
    %v4214 = vld [vmem:[%s4168 + $0xb4] sm:$0xf]
    %v4215 = vld [vmem:[%s4168 + $0xb8] sm:$0xf]
    %v4216 = vld [vmem:[%s4168 + $0xbc] sm:$0xf]
    %v4217 = vld [vmem:[%s4168 + $0xc0] sm:$0xf]
    %v4218 = vld [vmem:[%s4168 + $0xc4] sm:$0xf]
    %v4219 = vld [vmem:[%s4168 + $0xc8] sm:$0xf]
    %v4220 = vld [vmem:[%s4168 + $0xcc] sm:$0xf]
    %v4221 = vld [vmem:[%s4168 + $0xd0] sm:$0xf]
    %v4222 = vld [vmem:[%s4168 + $0xd4] sm:$0xf]
    %v4223 = vld [vmem:[%s4168 + $0xd8] sm:$0xf]
    %v4224 = vld [vmem:[%s4168 + $0xdc] sm:$0xf]
    %v4225 = vld [vmem:[%s4168 + $0xe0] sm:$0xf]
    %v4226 = vld [vmem:[%s4168 + $0xe4] sm:$0xf]
    %v4227 = vld [vmem:[%s4168 + $0xe8] sm:$0xf]
    %v4228 = vld [vmem:[%s4168 + $0xec] sm:$0xf]
    %v4229 = vld [vmem:[%s4168 + $0xf0] sm:$0xf]
    %v4230 = vld [vmem:[%s4168 + $0xf4] sm:$0xf]
    %v4231 = vld [vmem:[%s4168 + $0xf8] sm:$0xf]
    %v4232 = vld [vmem:[%s4168 + $0xfc] sm:$0xf]
    %s4233 = scalar_lea.vmem %s14, 1
    %v4234 = vld [vmem:[%s4233] sm:$0x1]
    %v4236 = vlaneseq
    %v4237 = vshrl.u32 %v4236, 7
    %v4238 = vsub.s32 0, %v4237
    %v4239 = vrot.slane %v4234, %v4238
    %v4305 = vunpack.c.l.b16 %v4169
    %v4306 = vunpack.c.l.b16 %v4170
    %v4307 = vunpack.c.l.b16 %v4171
    %v4308 = vunpack.c.l.b16 %v4172
    %v4309 = vunpack.c.l.b16 %v4173
    %v4310 = vunpack.c.l.b16 %v4174
    %v4311 = vunpack.c.l.b16 %v4175
    %v4312 = vunpack.c.l.b16 %v4176
    %v4313 = vunpack.c.l.b16 %v4177
    %v4314 = vunpack.c.l.b16 %v4178
    %v4315 = vunpack.c.l.b16 %v4179
    %v4316 = vunpack.c.l.b16 %v4180
    %v4317 = vunpack.c.l.b16 %v4181
    %v4318 = vunpack.c.l.b16 %v4182
    %v4319 = vunpack.c.l.b16 %v4183
    %v4320 = vunpack.c.l.b16 %v4184
    %v4321 = vunpack.c.l.b16 %v4185
    %v4322 = vunpack.c.l.b16 %v4186
    %v4323 = vunpack.c.l.b16 %v4187
    %v4324 = vunpack.c.l.b16 %v4188
    %v4325 = vunpack.c.l.b16 %v4189
    %v4326 = vunpack.c.l.b16 %v4190
    %v4327 = vunpack.c.l.b16 %v4191
    %v4328 = vunpack.c.l.b16 %v4192
    %v4329 = vunpack.c.l.b16 %v4193
    %v4330 = vunpack.c.l.b16 %v4194
    %v4331 = vunpack.c.l.b16 %v4195
    %v4332 = vunpack.c.l.b16 %v4196
    %v4333 = vunpack.c.l.b16 %v4197
    %v4334 = vunpack.c.l.b16 %v4198
    %v4335 = vunpack.c.l.b16 %v4199
    %v4336 = vunpack.c.l.b16 %v4200
    %v4337 = vunpack.c.l.b16 %v4201
    %v4338 = vunpack.c.l.b16 %v4202
    %v4339 = vunpack.c.l.b16 %v4203
    %v4340 = vunpack.c.l.b16 %v4204
    %v4341 = vunpack.c.l.b16 %v4205
    %v4342 = vunpack.c.l.b16 %v4206
    %v4343 = vunpack.c.l.b16 %v4207
    %v4344 = vunpack.c.l.b16 %v4208
    %v4345 = vunpack.c.l.b16 %v4209
    %v4346 = vunpack.c.l.b16 %v4210
    %v4347 = vunpack.c.l.b16 %v4211
    %v4348 = vunpack.c.l.b16 %v4212
    %v4349 = vunpack.c.l.b16 %v4213
    %v4350 = vunpack.c.l.b16 %v4214
    %v4351 = vunpack.c.l.b16 %v4215
    %v4352 = vunpack.c.l.b16 %v4216
    %v4353 = vunpack.c.l.b16 %v4217
    %v4354 = vunpack.c.l.b16 %v4218
    %v4355 = vunpack.c.l.b16 %v4219
    %v4356 = vunpack.c.l.b16 %v4220
    %v4357 = vunpack.c.l.b16 %v4221
    %v4358 = vunpack.c.l.b16 %v4222
    %v4359 = vunpack.c.l.b16 %v4223
    %v4360 = vunpack.c.l.b16 %v4224
    %v4361 = vunpack.c.l.b16 %v4225
    %v4362 = vunpack.c.l.b16 %v4226
    %v4363 = vunpack.c.l.b16 %v4227
    %v4364 = vunpack.c.l.b16 %v4228
    %v4365 = vunpack.c.l.b16 %v4229
    %v4366 = vunpack.c.l.b16 %v4230
    %v4367 = vunpack.c.l.b16 %v4231
    %v4368 = vunpack.c.l.b16 %v4232
    %v4369 = vpack.c.b16 %v4306, %v4305
    %v4370 = vpack.c.b16 %v4308, %v4307
    %v4371 = vpack.c.b16 %v4310, %v4309
    %v4372 = vpack.c.b16 %v4312, %v4311
    %v4373 = vpack.c.b16 %v4314, %v4313
    %v4374 = vpack.c.b16 %v4316, %v4315
    %v4375 = vpack.c.b16 %v4318, %v4317
    %v4376 = vpack.c.b16 %v4320, %v4319
    %v4377 = vpack.c.b16 %v4322, %v4321
    %v4378 = vpack.c.b16 %v4324, %v4323
    %v4379 = vpack.c.b16 %v4326, %v4325
    %v4380 = vpack.c.b16 %v4328, %v4327
    %v4381 = vpack.c.b16 %v4330, %v4329
    %v4382 = vpack.c.b16 %v4332, %v4331
    %v4383 = vpack.c.b16 %v4334, %v4333
    %v4384 = vpack.c.b16 %v4336, %v4335
    %v4385 = vpack.c.b16 %v4338, %v4337
    %v4386 = vpack.c.b16 %v4340, %v4339
    %v4387 = vpack.c.b16 %v4342, %v4341
    %v4388 = vpack.c.b16 %v4344, %v4343
    %v4389 = vpack.c.b16 %v4346, %v4345
    %v4390 = vpack.c.b16 %v4348, %v4347
    %v4391 = vpack.c.b16 %v4350, %v4349
    %v4392 = vpack.c.b16 %v4352, %v4351
    %v4393 = vpack.c.b16 %v4354, %v4353
    %v4394 = vpack.c.b16 %v4356, %v4355
    %v4395 = vpack.c.b16 %v4358, %v4357
    %v4396 = vpack.c.b16 %v4360, %v4359
    %v4397 = vpack.c.b16 %v4362, %v4361
    %v4398 = vpack.c.b16 %v4364, %v4363
    %v4399 = vpack.c.b16 %v4366, %v4365
    %v4400 = vpack.c.b16 %v4368, %v4367
    %4433 = vmatprep.subr.bf16.mxu0 0
    %4434 = vmatpush1.bf16.msra.mxu0 %v4376
    %4435 = vmatprep.subr.bf16.mxu0 0
    %4436 = vmatpush1.bf16.msra.mxu0 %v4375
    %4437 = vmatprep.subr.bf16.mxu0 0
    %4438 = vmatpush1.bf16.msra.mxu0 %v4374
    %4439 = vmatprep.subr.bf16.mxu0 0
    %4440 = vmatpush1.bf16.msra.mxu0 %v4373
    %4441 = vmatprep.subr.bf16.mxu0 0
    %4442 = vmatpush1.bf16.msra.mxu0 %v4372
    %4443 = vmatprep.subr.bf16.mxu0 0
    %4444 = vmatpush1.bf16.msra.mxu0 %v4371
    %4445 = vmatprep.subr.bf16.mxu0 0
    %4446 = vmatpush1.bf16.msra.mxu0 %v4370
    %4447 = vmatprep.subr.bf16.mxu0 0
    %4448 = vmatpush1.bf16.msra.mxu0 %v4369
    %4449 = vmatprep.subr.bf16.mxu0 0
    %4450 = vmatpush2.bf16.msra.mxu0 %v4384
    %4451 = vmatprep.subr.bf16.mxu0 0
    %4452 = vmatpush2.bf16.msra.mxu0 %v4383
    %4453 = vmatprep.subr.bf16.mxu0 0
    %4454 = vmatpush2.bf16.msra.mxu0 %v4382
    %4455 = vmatprep.subr.bf16.mxu0 0
    %4456 = vmatpush2.bf16.msra.mxu0 %v4381
    %4457 = vmatprep.subr.bf16.mxu0 0
    %4458 = vmatpush2.bf16.msra.mxu0 %v4380
    %4459 = vmatprep.subr.bf16.mxu0 0
    %4460 = vmatpush2.bf16.msra.mxu0 %v4379
    %4461 = vmatprep.subr.bf16.mxu0 0
    %4462 = vmatpush2.bf16.msra.mxu0 %v4378
    %4463 = vmatprep.subr.bf16.mxu0 0
    %4464 = vmatpush2.bf16.msra.mxu0 %v4377
    %4465 = vmatprep.mubr.bf16.mxu0 %v4165
    %4466 = vmatmul.mubr.bf16.gmra.mxu0 %v4164
    %v4467 = vpop.f32.mrf.mxu0
    %v4468 = vadd.f32 %v4239, %v4467
    %v4469 = vpop.f32.mrf.mxu0
    %v4470 = vpop.f32.mrf.mxu0
    %v4471 = vadd.f32 %v4239, %v4470
    %v4472 = vpop.f32.mrf.mxu0
    %4473 = vdwg.mxu0
    %4474 = vmatprep.subr.bf16.mxu0 0
    %4475 = vmatpush1.bf16.msra.mxu0 %v4392
    %4476 = vmatprep.subr.bf16.mxu0 0
    %4477 = vmatpush1.bf16.msra.mxu0 %v4391
    %4478 = vmatprep.subr.bf16.mxu0 0
    %4479 = vmatpush1.bf16.msra.mxu0 %v4390
    %4480 = vmatprep.subr.bf16.mxu0 0
    %4481 = vmatpush1.bf16.msra.mxu0 %v4389
    %4482 = vmatprep.subr.bf16.mxu0 0
    %4483 = vmatpush1.bf16.msra.mxu0 %v4388
    %4484 = vmatprep.subr.bf16.mxu0 0
    %4485 = vmatpush1.bf16.msra.mxu0 %v4387
    %4486 = vmatprep.subr.bf16.mxu0 0
    %4487 = vmatpush1.bf16.msra.mxu0 %v4386
    %4488 = vmatprep.subr.bf16.mxu0 0
    %4489 = vmatpush1.bf16.msra.mxu0 %v4385
    %4490 = vmatprep.subr.bf16.mxu0 0
    %4491 = vmatpush2.bf16.msra.mxu0 %v4400
    %4492 = vmatprep.subr.bf16.mxu0 0
    %4493 = vmatpush2.bf16.msra.mxu0 %v4399
    %4494 = vmatprep.subr.bf16.mxu0 0
    %4495 = vmatpush2.bf16.msra.mxu0 %v4398
    %4496 = vmatprep.subr.bf16.mxu0 0
    %4497 = vmatpush2.bf16.msra.mxu0 %v4397
    %4498 = vmatprep.subr.bf16.mxu0 0
    %4499 = vmatpush2.bf16.msra.mxu0 %v4396
    %4500 = vmatprep.subr.bf16.mxu0 0
    %4501 = vmatpush2.bf16.msra.mxu0 %v4395
    %4502 = vmatprep.subr.bf16.mxu0 0
    %4503 = vmatpush2.bf16.msra.mxu0 %v4394
    %4504 = vmatprep.subr.bf16.mxu0 0
    %4505 = vmatpush2.bf16.msra.mxu0 %v4393
    %4506 = vmatprep.mubr.bf16.mxu0 %v4167
    %4507 = vmatmul.mubr.bf16.gmra.mxu0 %v4166
    %v4508 = vpop.f32.mrf.mxu0
    %v4509 = vadd.f32 %v4468, %v4508
    %v4510 = vpop.f32.mrf.mxu0
    %v4511 = vpop.f32.mrf.mxu0
    %v4512 = vadd.f32 %v4471, %v4511
    %v4513 = vpop.f32.mrf.mxu0
    %4514 = vdwg.mxu0
    %v4515 = vadd.f32 %v3745, %v4509
    %v4516 = vadd.f32 %v3746, %v4512
    %v4517 = vld [vmem:[%s15] sm:$0x1]
    %v4518 = vld [vmem:[%s16] sm:$0x1]
    %4519 = vadd.xlane.f32.xlu0 %v4515
    %v4520 = vpop.xlane.xlu0 %4519
    %4521 = vadd.xlane.f32.xlu0 %v4516
    %v4522 = vpop.xlane.xlu0 %4521
    %v4523 = vmul.f32 %v4520, %v279
    %v4524 = vmul.f32 %v4522, %v279
    %v4525 = vsub.f32 %v4515, %v4523
    %v4526 = vsub.f32 %v4516, %v4524
    %v4527 = vmul.f32 %v4525, %v4525
    %v4528 = vmul.f32 %v4526, %v4526
    %4529 = vadd.xlane.f32.xlu0 %v4527
    %v4530 = vpop.xlane.xlu0 %4529
    %4531 = vadd.xlane.f32.xlu0 %v4528
    %v4532 = vpop.xlane.xlu0 %4531
    %v4533 = vmul.f32 %v4530, %v279
    %v4534 = vmul.f32 %v4532, %v279
    %v4535 = vadd.f32 %v4533, 1e-06
    %v4536 = vadd.f32 %v4534, 1e-06
    %v4537 = vrsqrt.pop %v4535
    %v4538 = vrsqrt.pop %v4536
    %v4539 = vmul.f32 %v4525, %v4537
    %v4540 = vmul.f32 %v4526, %v4538
    %v4542 = vlaneseq
    %v4543 = vshrl.u32 %v4542, 7
    %v4544 = vsub.s32 0, %v4543
    %v4545 = vrot.slane %v4517, %v4544
    %v4547 = vmul.f32 %v4539, %v4545
    %v4548 = vmul.f32 %v4540, %v4545
    %v4550 = vlaneseq
    %v4551 = vshrl.u32 %v4550, 7
    %v4552 = vsub.s32 0, %v4551
    %v4553 = vrot.slane %v4518, %v4552
    %v4555 = vadd.f32 %v4547, %v4553
    %v4556 = vadd.f32 %v4548, %v4553
    %4557 = vst [vmem:[%s17] sm:$0xff] %v4555
    %4558 = vst [vmem:[%s17 + $0x8] sm:$0xff] %v4556
    // Predicated region
    $region78: #{vit_encoder_forward.1} parent=1 // pred_check
      _
    $region79: #{vit_encoder_forward.1} parent=1 // pred_check_branch
      %4560 = sbr.rel (0) target = $region81
    $region80: #{vit_encoder_forward.1} parent=1 // pred_region
      _
    $region81: #{vit_encoder_forward.1} parent=1 // pred_fallthru
      _
    // Predicated region
    $region82: #{vit_encoder_forward.1} parent=1 // pred_check
      _
    $region83: #{vit_encoder_forward.1} parent=1 // pred_check_branch
      %4562 = sbr.rel (0) target = $region85
    $region84: #{vit_encoder_forward.1} parent=1 // pred_region
      _
    $region85: #{vit_encoder_forward.1} parent=1 // pred_fallthru
      _
    %4563 = vsyncpa [#allocation3], 1
    %4564 = vsyncpa [#allocation5], 1

</llo_original>
